<compile_context>
chip_gen: v5e
topology: v5e:2x2
jax: 0.10.0
libtpu: 0.0.40
codegen_flags: <defaults>
</compile_context>

<pallas_src>
import functools

import jax
import jax.numpy as jnp
from jax.experimental import pallas as pl
from jax.experimental.pallas import tpu as pltpu


# ---------------------------------------------------------------------------
# Generation-aware hardware queries.
# ---------------------------------------------------------------------------
def _tpu_vmem_capacity_bytes():
    try:
        return int(pltpu.get_tpu_info().vmem_capacity_bytes)
    except Exception:
        return 64 * 1024 * 1024  # conservative: v7x per-TC VMEM


def _is_small_mxu_chip():
    """v2..v5 family chips have 128-deep MXUs -> keep the two K=128 matmuls separate."""
    try:
        kind = jax.devices()[0].device_kind.lower()
        return any(tag in kind for tag in ("v2", "v3", "v4", "v5"))
    except Exception:
        return False


def _vmem_estimate(t_blk, bp, hp, stream_bytes, fuse_hh):
    """Rough per-pallas_call VMEM footprint for the fused bi-LSTM layer kernel."""
    g = 4 * hp
    gx_bytes = 2 * 2 * t_blk * bp * g * stream_bytes      # 2 dirs x double-buffer
    out_bytes = 2 * 2 * t_blk * bp * hp * stream_bytes    # 2 dirs x double-buffer
    w_bytes = (2 * hp) * (2 * g) * 4 if fuse_hh else 2 * hp * g * 4  # single-buffer
    scratch_bytes = 4 * bp * hp * 4
    return gx_bytes + out_bytes + w_bytes + scratch_bytes


# ---------------------------------------------------------------------------
# Fused bidirectional LSTM recurrence kernel (one layer).
# ---------------------------------------------------------------------------
def _fused_bilstm_kernel(gxf_ref, gxb_ref, whh_ref, outf_ref, outb_ref,
                         hf_ref, cf_ref, hb_ref, cb_ref, *, fuse_hh):
    """Process one chunk of T_blk timesteps for BOTH directions.

    gxf_ref / gxb_ref : (T_blk, Bp, 4*Hp) precomputed x-projection (+bias) for the
                        forward chunk i and the mirrored backward chunk nT-1-i.
    whh_ref           : recurrent weights, resident (single-buffered):
                          fuse_hh=False -> (2, Hp, 4*Hp) stacked [fwd, bwd]
                          fuse_hh=True  -> (2*Hp, 8*Hp) block-diag(Wf, Wb)
    outf_ref/outb_ref : (T_blk, Bp, Hp) per-direction hidden outputs.
    h*/c*_ref         : (Bp, Hp) f32 VMEM carries across grid steps.
    Gate order follows PyTorch: i, f, g, o.
    """
    Tb = gxf_ref.shape[0]
    G = gxf_ref.shape[-1]          # 4*Hp
    Hp = hf_ref.shape[-1]

    @pl.when(pl.program_id(0) == 0)
    def _():
        hf_ref[...] = jnp.zeros_like(hf_ref)
        cf_ref[...] = jnp.zeros_like(cf_ref)
        hb_ref[...] = jnp.zeros_like(hb_ref)
        cb_ref[...] = jnp.zeros_like(cb_ref)

    if fuse_hh:
        w_blk = whh_ref[...]       # (2Hp, 2G)
    else:
        whh_f = whh_ref[0]         # (Hp, G)
        whh_b = whh_ref[1]

    def sig(x):
        # sigmoid via one tanh (single EUP op) instead of exp + full divide.
        return 0.5 * jnp.tanh(0.5 * x) + 0.5

    def cell(gates, c):
        i_g = sig(gates[:, 0 * Hp:1 * Hp])
        f_g = sig(gates[:, 1 * Hp:2 * Hp])
        g_g = jnp.tanh(gates[:, 2 * Hp:3 * Hp])
        o_g = sig(gates[:, 3 * Hp:4 * Hp])
        c_new = f_g * c + i_g * g_g
        h_new = o_g * jnp.tanh(c_new)
        return h_new, c_new

    def body(t, carry):
        h_f, c_f, h_b, c_b = carry
        tb = Tb - 1 - t
        gxf = gxf_ref[t].astype(jnp.float32)
        gxb = gxb_ref[tb].astype(jnp.float32)
        if fuse_hh:
            # One K=2*Hp matmul computes both directions' recurrent gates.
            hcat = jnp.concatenate([h_f, h_b], axis=-1)            # (Bp, 2Hp)
            g_all = jnp.dot(hcat, w_blk, preferred_element_type=jnp.float32)
            gf = gxf + g_all[:, :G]
            gb = gxb + g_all[:, G:]
        else:
            gf = gxf + jnp.dot(h_f, whh_f, preferred_element_type=jnp.float32)
            gb = gxb + jnp.dot(h_b, whh_b, preferred_element_type=jnp.float32)
        h_f, c_f = cell(gf, c_f)
        h_b, c_b = cell(gb, c_b)
        outf_ref[t] = h_f.astype(outf_ref.dtype)
        outb_ref[tb] = h_b.astype(outb_ref.dtype)
        return h_f, c_f, h_b, c_b

    carry0 = (hf_ref[...], cf_ref[...], hb_ref[...], cb_ref[...])
    h_f, c_f, h_b, c_b = jax.lax.fori_loop(0, Tb, body, carry0, unroll=True)
    hf_ref[...] = h_f
    cf_ref[...] = c_f
    hb_ref[...] = h_b
    cb_ref[...] = c_b


def _bilstm_layer_pallas(gx_f, gx_b, whh, *, H_pad, T_blk, fuse_hh,
                         vmem_limit_bytes, single_buffer_weights=True):
    """One fused bidirectional LSTM layer: (T_pad, Bp, 4Hp) x2 -> (T_pad, Bp, Hp) x2."""
    T_pad, Bp, G = gx_f.shape
    nT = T_pad // T_blk
    dtype = gx_f.dtype

    kernel = functools.partial(_fused_bilstm_kernel, fuse_hh=fuse_hh)

    def build(weight_spec_kwargs):
        if fuse_hh:
            w_spec = pl.BlockSpec(whh.shape, lambda i: (0, 0), **weight_spec_kwargs)
        else:
            w_spec = pl.BlockSpec(whh.shape, lambda i: (0, 0, 0), **weight_spec_kwargs)
        return pl.pallas_call(
            kernel,
            out_shape=(jax.ShapeDtypeStruct((T_pad, Bp, H_pad), dtype),
                       jax.ShapeDtypeStruct((T_pad, Bp, H_pad), dtype)),
            grid_spec=pltpu.PrefetchScalarGridSpec(
                num_scalar_prefetch=0,
                grid=(nT,),
                in_specs=[
                    pl.BlockSpec((T_blk, Bp, G), lambda i: (i, 0, 0)),           # fwd gx
                    pl.BlockSpec((T_blk, Bp, G), lambda i: (nT - 1 - i, 0, 0)),  # bwd gx
                    w_spec,                                                       # W_hh
                ],
                out_specs=[
                    pl.BlockSpec((T_blk, Bp, H_pad), lambda i: (i, 0, 0)),
                    pl.BlockSpec((T_blk, Bp, H_pad), lambda i: (nT - 1 - i, 0, 0)),
                ],
                scratch_shapes=[pltpu.VMEM((Bp, H_pad), jnp.float32)
                                for _ in range(4)],
            ),
            compiler_params=pltpu.CompilerParams(
                dimension_semantics=("arbitrary",),   # sequential recurrence over time
                vmem_limit_bytes=int(vmem_limit_bytes),
            ),
        )(gx_f, gx_b, whh)

    if single_buffer_weights:
        try:
            # Resident weights (constant index_map) don't need double-buffering.
            return build({"pipeline_mode": pl.Buffered(1)})
        except Exception:
            pass  # API/lowering mismatch -> fall back to default buffering.
    return build({})


# ---------------------------------------------------------------------------
# Parameter handling (PyTorch nn.LSTM layout -> padded kernel operands).
# ---------------------------------------------------------------------------
def init_stacked_brnn_params(key, input_size, hidden_size, num_layers):
    """PyTorch nn.LSTM-style uniform(-1/sqrt(H), 1/sqrt(H)) init, deterministic."""
    k = 1.0 / jnp.sqrt(jnp.float32(hidden_size))
    params = []
    for layer in range(num_layers):
        d_in = input_size if layer == 0 else 2 * hidden_size
        layer_p = {}
        for dirn in ("fwd", "bwd"):
            key, k1, k2, k3, k4 = jax.random.split(key, 5)
            w_ih = jax.random.uniform(k1, (4 * hidden_size, d_in), jnp.float32, -k, k)
            w_hh = jax.random.uniform(k2, (4 * hidden_size, hidden_size), jnp.float32, -k, k)
            b_ih = jax.random.uniform(k3, (4 * hidden_size,), jnp.float32, -k, k)
            b_hh = jax.random.uniform(k4, (4 * hidden_size,), jnp.float32, -k, k)
            layer_p[dirn] = (w_ih, w_hh, b_ih, b_hh)
        params.append(layer_p)
    return params


def _round_up(x, m):
    return (x + m - 1) // m * m


def _pad_gatewise_cols(w, H, H_pad):
    """Pad the trailing 4H (i|f|g|o) axis to 4*H_pad keeping each gate 128-aligned."""
    lead = w.shape[:-1]
    w = w.reshape(lead + (4, H))
    w = jnp.pad(w, [(0, 0)] * len(lead) + [(0, 0), (0, H_pad - H)])
    return w.reshape(lead + (4 * H_pad,))


def _pack_layer_params(layer_raw, H, H_pad, first_layer):
    packed = {}
    for dirn in ("fwd", "bwd"):
        w_ih, w_hh, b_ih, b_hh = layer_raw[dirn]
        wihT = _pad_gatewise_cols(w_ih.T, H, H_pad)            # (D_in, 4*Hp)
        whhT = _pad_gatewise_cols(w_hh.T, H, H_pad)            # (H, 4*Hp)
        whhT = jnp.pad(whhT, ((0, H_pad - H), (0, 0)))         # (Hp, 4*Hp)
        bias = _pad_gatewise_cols(b_ih + b_hh, H, H_pad)       # (4*Hp,)
        d = {"whh": whhT, "bias": bias}
        if first_layer:
            d["wih"] = wihT                                    # (D, 4*Hp)
        else:
            # Layer input arrives as separate fwd/bwd halves, each padded to Hp.
            d["wih_top"] = jnp.pad(wihT[:H], ((0, H_pad - H), (0, 0)))   # (Hp, 4*Hp)
            d["wih_bot"] = jnp.pad(wihT[H:], ((0, H_pad - H), (0, 0)))   # (Hp, 4*Hp)
        packed[dirn] = d
    return packed


def _block_diag(wf, wb):
    """(Hp,G),(Hp,G) -> (2Hp, 2G) block-diagonal [ [Wf,0],[0,Wb] ]."""
    top = jnp.concatenate([wf, jnp.zeros_like(wb)], axis=1)
    bot = jnp.concatenate([jnp.zeros_like(wf), wb], axis=1)
    return jnp.concatenate([top, bot], axis=0)


# ---------------------------------------------------------------------------
# Pure-JAX reference (lax.scan, unpadded) for correctness checking.
# ---------------------------------------------------------------------------
def _lstm_dir_ref(x_tbd, w_ih, w_hh, b_ih, b_hh, *, reverse):
    T, B, D = x_tbd.shape
    H = w_hh.shape[1]
    wihT, whhT, bias = w_ih.T, w_hh.T, b_ih + b_hh
    xs = x_tbd[::-1] if reverse else x_tbd

    def step(carry, x_t):
        h, c = carry
        gates = x_t @ wihT + h @ whhT + bias
        i = jax.nn.sigmoid(gates[:, :H])
        f = jax.nn.sigmoid(gates[:, H:2 * H])
        g = jnp.tanh(gates[:, 2 * H:3 * H])
        o = jax.nn.sigmoid(gates[:, 3 * H:])
        c = f * c + i * g
        h = o * jnp.tanh(c)
        return (h, c), h

    init = (jnp.zeros((B, H), jnp.float32), jnp.zeros((B, H), jnp.float32))
    _, hs = jax.lax.scan(step, init, xs)
    return hs[::-1] if reverse else hs


def _stacked_brnn_ref(x, params, *, concat_layers):
    x_tm = jnp.transpose(x, (1, 0, 2))
    outs = []
    inp = x_tm
    for layer_raw in params:
        h_f = _lstm_dir_ref(inp, *layer_raw["fwd"], reverse=False)
        h_b = _lstm_dir_ref(inp, *layer_raw["bwd"], reverse=True)
        out = jnp.concatenate([h_f, h_b], axis=-1)
        outs.append(out)
        inp = out
    out = jnp.concatenate(outs, axis=-1) if concat_layers else outs[-1]
    return jnp.transpose(out, (1, 0, 2))


# ---------------------------------------------------------------------------
# Module forward (eval-mode _forward_unpadded path).
# ---------------------------------------------------------------------------
def stacked_brnn_forward(x, x_mask, params, hidden_size, *, concat_layers=False,
                         use_pallas=True, stream_dtype=jnp.float32, t_blk_cap=64):
    """x: (B, T, D), x_mask: (B, T) (ignored on the unpadded/eval path).

    stream_dtype: dtype used for the streamed gx / per-direction outputs
    (bf16 halves HBM traffic on v5e/v7x; f32 keeps strict parity with the reference).
    """
    del x_mask  # TODO(synk): mask only matters in the _forward_padded path.
    if not use_pallas:
        return _stacked_brnn_ref(x, params, concat_layers=concat_layers)

    B, T, D = x.shape
    H = hidden_size
    H_pad = _round_up(H, 128)                       # lane-aligned gates / stores
    stream_bytes = jnp.dtype(stream_dtype).itemsize
    sublane = 16 if stream_bytes == 2 else 8        # bf16 packs 2 rows per sublane
    B_pad = _round_up(B, sublane)

    # Fuse the two per-timestep recurrent matmuls into one K=2*Hp matmul when the
    # MXU is 256-deep (v6e/v7x) and Hp == 128.
    fuse_hh = (H_pad == 128) and not _is_small_mxu_chip()

    # Generation-aware T_blk: largest timestep chunk whose double-buffered streams
    # plus resident weights fit a fraction of this chip's VMEM.
    cap_bytes = _tpu_vmem_capacity_bytes()
    budget = int(cap_bytes * 0.6)
    t_blk_budget = 1
    for cand in range(1, max(1, min(int(t_blk_cap), 64)) + 1):
        if _vmem_estimate(cand, B_pad, H_pad, stream_bytes, fuse_hh) <= budget:
            t_blk_budget = cand
    t_max = max(1, min(t_blk_budget, int(t_blk_cap), T))
    nT = pl.cdiv(T, t_max)
    T_blk = pl.cdiv(T, nT)          # balanced chunks -> minimal time padding
    T_pad = nT * T_blk
    est = _vmem_estimate(T_blk, B_pad, H_pad, stream_bytes, fuse_hh)
    vmem_limit = int(min(0.8 * cap_bytes, max(32 * 2 ** 20, 1.5 * est + (4 << 20))))

    x_p = jnp.pad(x, ((0, B_pad - B), (0, 0), (0, 0)))   # pad batch with zeros

    layer_feats = []
    inp = None  # after layer 0: tuple (out_f, out_b), each (T_pad, Bp, Hp)
    for li, layer_raw in enumerate(params):
        packed = _pack_layer_params(layer_raw, H, H_pad, first_layer=(li == 0))
        gx = {}
        for dirn in ("fwd", "bwd"):
            p = packed[dirn]
            if li == 0:
                # Hoisted input projection; folds the (B,T,D)->(T,B,D) transpose in.
                g = jnp.einsum('btd,dg->tbg', x_p, p["wih"],
                               preferred_element_type=jnp.float32)
            else:
                out_f_prev, out_b_prev = inp
                g = (jnp.einsum('tbh,hg->tbg', out_f_prev[:T], p["wih_top"],
                                preferred_element_type=jnp.float32)
                     + jnp.einsum('tbh,hg->tbg', out_b_prev[:T], p["wih_bot"],
                                  preferred_element_type=jnp.float32))
            g = g + p["bias"]
            # Zero the padded-time tail AFTER the bias add: zero gates keep the
            # zero-initialised h/c exactly zero, so the backward direction (which
            # consumes the tail first) enters the real timesteps with exact state.
            g = jnp.pad(g, ((0, T_pad - T), (0, 0), (0, 0)))
            gx[dirn] = g.astype(stream_dtype)

        if fuse_hh:
            whh = _block_diag(packed["fwd"]["whh"], packed["bwd"]["whh"])  # (2Hp,8Hp)
        else:
            whh = jnp.stack([packed["fwd"]["whh"], packed["bwd"]["whh"]])  # (2,Hp,4Hp)

        out_f, out_b = _bilstm_layer_pallas(
            gx["fwd"], gx["bwd"], whh,
            H_pad=H_pad, T_blk=T_blk, fuse_hh=fuse_hh,
            vmem_limit_bytes=vmem_limit)
        layer_feats.append((out_f, out_b))
        inp = (out_f, out_b)

    # Assemble module output: drop time/batch/hidden padding, concat fwd|bwd (and layers).
    def _real(o_f, o_b):
        return jnp.concatenate([o_f[:T, :B, :H].astype(jnp.float32),
                                o_b[:T, :B, :H].astype(jnp.float32)], axis=-1)

    if concat_layers:
        out = jnp.concatenate([_real(f, b) for f, b in layer_feats], axis=-1)
    else:
        out = _real(*layer_feats[-1])
    return jnp.transpose(out, (1, 0, 2))   # (B, T, 2H) or (B, T, 2H*num_layers)


if __name__ == "__main__":
    B, T, D, H, L = 2, 8, 16, 32, 2
    concat_layers = True

    key = jax.random.PRNGKey(0)
    key, kx = jax.random.split(key)
    x = jax.random.normal(kx, (B, T, D), jnp.float32)
    x_mask = jnp.zeros((B, T), jnp.int32)   # no padding -> unpadded path

    params = init_stacked_brnn_params(key, D, H, L)

    ref = stacked_brnn_forward(x, x_mask, params, H,
                               concat_layers=concat_layers, use_pallas=False)
    ref = jax.block_until_ready(ref)

    # f32 path. t_blk_cap=3 forces T=8 to be padded to 9 and split into 3 chunks,
    # exercising both the cross-chunk h/c carry and the zeroed gx time-padding tail.
    out = stacked_brnn_forward(x, x_mask, params, H,
                               concat_layers=concat_layers, use_pallas=True,
                               stream_dtype=jnp.float32, t_blk_cap=3)
    out = jax.block_until_ready(out)
    expected_feat = 2 * H * (L if concat_layers else 1)
    assert out.shape == (B, T, expected_feat), out.shape
    max_err = float(jnp.max(jnp.abs(out - ref)))
    assert jnp.allclose(out, ref, rtol=2e-4, atol=5e-5), max_err

    # bf16-streamed path (single time chunk): halves gx/output HBM traffic; math
    # stays f32 inside the kernel, so only bf16 rounding of the streams is added.
    out_bf = stacked_brnn_forward(x, x_mask, params, H,
                                  concat_layers=concat_layers, use_pallas=True,
                                  stream_dtype=jnp.bfloat16)
    out_bf = jax.block_until_ready(out_bf)
    assert out_bf.shape == (B, T, expected_feat), out_bf.shape
    max_err_bf = float(jnp.max(jnp.abs(out_bf - ref)))
    assert jnp.allclose(out_bf, ref, rtol=1e-1, atol=1e-1), max_err_bf

    print("KERNEL_OK")
</pallas_src>

<mosaic_0001>
module attributes {stable_mosaic.version = 11 : i64} {
  func.func @_fused_bilstm_kernel(%arg0: i32, %arg1: memref<3x8x512xf32, #tpu.memory_space<vmem>>, %arg2: memref<3x8x512xf32, #tpu.memory_space<vmem>>, %arg3: memref<256x1024xf32, #tpu.memory_space<vmem>>, %arg4: memref<3x8x128xf32, #tpu.memory_space<vmem>>, %arg5: memref<3x8x128xf32, #tpu.memory_space<vmem>>, %arg6: memref<8x128xf32, #tpu.memory_space<vmem>>, %arg7: memref<8x128xf32, #tpu.memory_space<vmem>>, %arg8: memref<8x128xf32, #tpu.memory_space<vmem>>, %arg9: memref<8x128xf32, #tpu.memory_space<vmem>>) attributes {dimension_semantics = [#tpu.dimension_semantics<arbitrary>], iteration_bounds = array<i64: 3>, scalar_prefetch = 0 : i64, scratch_operands = 4 : i64, tpu.core_type = #tpu.core_type<tc>, window_params = [{transform_indices = @transform_0, window_bounds = array<i64: 3, 8, 512>}, {transform_indices = @transform_1, window_bounds = array<i64: 3, 8, 512>}, {pipeline_mode = #tpu.pipeline_mode<synchronous>, transform_indices = @transform_2, window_bounds = array<i64: 256, 1024>}, {transform_indices = @transform_3, window_bounds = array<i64: 3, 8, 128>}, {transform_indices = @transform_4, window_bounds = array<i64: 3, 8, 128>}]} {
    %c0_i32 = arith.constant 0 : i32
    %0 = arith.cmpi eq, %arg0, %c0_i32 : i32
    %1 = arith.extui %0 : i1 to i32
    %c0_i32_0 = arith.constant 0 : i32
    %2 = arith.cmpi ne, %1, %c0_i32_0 : i32
    scf.if %2 {
      %cst_102 = arith.constant 0.000000e+00 : f32
      %261 = vector.broadcast %cst_102 : f32 to vector<8x128xf32>
      %c0_103 = arith.constant 0 : index
      %c0_104 = arith.constant 0 : index
      %262 = vector.load %arg6[%c0_103, %c0_104] : memref<8x128xf32, #tpu.memory_space<vmem>>, vector<8x128xf32>
      tpu.vector_store %arg6[%c0_103, %c0_104], %261 {strides = array<i32>} : memref<8x128xf32, #tpu.memory_space<vmem>>, vector<8x128xf32>,
      %cst_105 = arith.constant 0.000000e+00 : f32
      %263 = vector.broadcast %cst_105 : f32 to vector<8x128xf32>
      %c0_106 = arith.constant 0 : index
      %c0_107 = arith.constant 0 : index
      %264 = vector.load %arg7[%c0_106, %c0_107] : memref<8x128xf32, #tpu.memory_space<vmem>>, vector<8x128xf32>
      tpu.vector_store %arg7[%c0_106, %c0_107], %263 {strides = array<i32>} : memref<8x128xf32, #tpu.memory_space<vmem>>, vector<8x128xf32>,
      %cst_108 = arith.constant 0.000000e+00 : f32
      %265 = vector.broadcast %cst_108 : f32 to vector<8x128xf32>
      %c0_109 = arith.constant 0 : index
      %c0_110 = arith.constant 0 : index
      %266 = vector.load %arg8[%c0_109, %c0_110] : memref<8x128xf32, #tpu.memory_space<vmem>>, vector<8x128xf32>
      tpu.vector_store %arg8[%c0_109, %c0_110], %265 {strides = array<i32>} : memref<8x128xf32, #tpu.memory_space<vmem>>, vector<8x128xf32>,
      %cst_111 = arith.constant 0.000000e+00 : f32
      %267 = vector.broadcast %cst_111 : f32 to vector<8x128xf32>
      %c0_112 = arith.constant 0 : index
      %c0_113 = arith.constant 0 : index
      %268 = vector.load %arg9[%c0_112, %c0_113] : memref<8x128xf32, #tpu.memory_space<vmem>>, vector<8x128xf32>
      tpu.vector_store %arg9[%c0_112, %c0_113], %267 {strides = array<i32>} : memref<8x128xf32, #tpu.memory_space<vmem>>, vector<8x128xf32>,
    } else {
    }
    %c0 = arith.constant 0 : index
    %c0_1 = arith.constant 0 : index
    %3 = vector.load %arg3[%c0, %c0_1] : memref<256x1024xf32, #tpu.memory_space<vmem>>, vector<256x1024xf32>
    %c0_2 = arith.constant 0 : index
    %c0_3 = arith.constant 0 : index
    %4 = vector.load %arg6[%c0_2, %c0_3] : memref<8x128xf32, #tpu.memory_space<vmem>>, vector<8x128xf32>
    %c0_4 = arith.constant 0 : index
    %c0_5 = arith.constant 0 : index
    %5 = vector.load %arg7[%c0_4, %c0_5] : memref<8x128xf32, #tpu.memory_space<vmem>>, vector<8x128xf32>
    %c0_6 = arith.constant 0 : index
    %c0_7 = arith.constant 0 : index
    %6 = vector.load %arg8[%c0_6, %c0_7] : memref<8x128xf32, #tpu.memory_space<vmem>>, vector<8x128xf32>
    %c0_8 = arith.constant 0 : index
    %c0_9 = arith.constant 0 : index
    %7 = vector.load %arg9[%c0_8, %c0_9] : memref<8x128xf32, #tpu.memory_space<vmem>>, vector<8x128xf32>
    %c0_i32_10 = arith.constant 0 : i32
    %c2_i32 = arith.constant 2 : i32
    %8 = arith.subi %c2_i32, %c0_i32_10 : i32
    %9 = arith.index_cast %c0_i32_10 : i32 to index
    %c0_11 = arith.constant 0 : index
    %c0_12 = arith.constant 0 : index
    %10 = vector.load %arg1[%9, %c0_11, %c0_12] : memref<3x8x512xf32, #tpu.memory_space<vmem>>, vector<1x8x512xf32>
    %11 = vector.shape_cast %10 : vector<1x8x512xf32> to vector<8x512xf32>
    %12 = arith.index_cast %8 : i32 to index
    %c0_13 = arith.constant 0 : index
    %c0_14 = arith.constant 0 : index
    %13 = vector.load %arg2[%12, %c0_13, %c0_14] : memref<3x8x512xf32, #tpu.memory_space<vmem>>, vector<1x8x512xf32>
    %14 = vector.shape_cast %13 : vector<1x8x512xf32> to vector<8x512xf32>
    %15 = tpu.concatenate %4, %6 in 1 : vector<8x128xf32>, vector<8x128xf32> -> vector<8x256xf32>
    %cst = arith.constant dense<0.000000e+00> : vector<8x1024xf32>
    %16 = tpu.matmul %15, %3, %cst {dimension_numbers = #tpu.dot_dimension_numbers<[1], [0], [0], [1], [0, 0, 1, 1], [], []>} : vector<8x256xf32>, vector<256x1024xf32>, vector<8x1024xf32> -> vector<8x1024xf32>
    %17 = vector.extract_strided_slice %16 {offsets = [0, 0], sizes = [8, 512], strides = [1, 1]} : vector<8x1024xf32> to vector<8x512xf32>
    %18 = arith.addf %11, %17 : vector<8x512xf32>
    %19 = vector.extract_strided_slice %16 {offsets = [0, 512], sizes = [8, 512], strides = [1, 1]} : vector<8x1024xf32> to vector<8x512xf32>
    %20 = arith.addf %14, %19 : vector<8x512xf32>
    %21 = vector.extract_strided_slice %18 {offsets = [0, 0], sizes = [8, 128], strides = [1, 1]} : vector<8x512xf32> to vector<8x128xf32>
    %cst_15 = arith.constant 5.000000e-01 : f32
    %22 = vector.broadcast %cst_15 : f32 to vector<8x128xf32>
    %23 = arith.mulf %22, %21 : vector<8x128xf32>
    %24 = math.tanh %23 : vector<8x128xf32>
    %cst_16 = arith.constant 5.000000e-01 : f32
    %25 = vector.broadcast %cst_16 : f32 to vector<8x128xf32>
    %26 = arith.mulf %25, %24 : vector<8x128xf32>
    %cst_17 = arith.constant 5.000000e-01 : f32
    %27 = vector.broadcast %cst_17 : f32 to vector<8x128xf32>
    %28 = arith.addf %26, %27 : vector<8x128xf32>
    %29 = vector.extract_strided_slice %18 {offsets = [0, 128], sizes = [8, 128], strides = [1, 1]} : vector<8x512xf32> to vector<8x128xf32>
    %cst_18 = arith.constant 5.000000e-01 : f32
    %30 = vector.broadcast %cst_18 : f32 to vector<8x128xf32>
    %31 = arith.mulf %30, %29 : vector<8x128xf32>
    %32 = math.tanh %31 : vector<8x128xf32>
    %cst_19 = arith.constant 5.000000e-01 : f32
    %33 = vector.broadcast %cst_19 : f32 to vector<8x128xf32>
    %34 = arith.mulf %33, %32 : vector<8x128xf32>
    %cst_20 = arith.constant 5.000000e-01 : f32
    %35 = vector.broadcast %cst_20 : f32 to vector<8x128xf32>
    %36 = arith.addf %34, %35 : vector<8x128xf32>
    %37 = vector.extract_strided_slice %18 {offsets = [0, 256], sizes = [8, 128], strides = [1, 1]} : vector<8x512xf32> to vector<8x128xf32>
    %38 = math.tanh %37 : vector<8x128xf32>
    %39 = vector.extract_strided_slice %18 {offsets = [0, 384], sizes = [8, 128], strides = [1, 1]} : vector<8x512xf32> to vector<8x128xf32>
    %cst_21 = arith.constant 5.000000e-01 : f32
    %40 = vector.broadcast %cst_21 : f32 to vector<8x128xf32>
    %41 = arith.mulf %40, %39 : vector<8x128xf32>
    %42 = math.tanh %41 : vector<8x128xf32>
    %cst_22 = arith.constant 5.000000e-01 : f32
    %43 = vector.broadcast %cst_22 : f32 to vector<8x128xf32>
    %44 = arith.mulf %43, %42 : vector<8x128xf32>
    %cst_23 = arith.constant 5.000000e-01 : f32
    %45 = vector.broadcast %cst_23 : f32 to vector<8x128xf32>
    %46 = arith.addf %44, %45 : vector<8x128xf32>
    %47 = arith.mulf %36, %5 : vector<8x128xf32>
    %48 = arith.mulf %28, %38 : vector<8x128xf32>
    %49 = arith.addf %47, %48 : vector<8x128xf32>
    %50 = math.tanh %49 : vector<8x128xf32>
    %51 = arith.mulf %46, %50 : vector<8x128xf32>
    %52 = vector.extract_strided_slice %20 {offsets = [0, 0], sizes = [8, 128], strides = [1, 1]} : vector<8x512xf32> to vector<8x128xf32>
    %cst_24 = arith.constant 5.000000e-01 : f32
    %53 = vector.broadcast %cst_24 : f32 to vector<8x128xf32>
    %54 = arith.mulf %53, %52 : vector<8x128xf32>
    %55 = math.tanh %54 : vector<8x128xf32>
    %cst_25 = arith.constant 5.000000e-01 : f32
    %56 = vector.broadcast %cst_25 : f32 to vector<8x128xf32>
    %57 = arith.mulf %56, %55 : vector<8x128xf32>
    %cst_26 = arith.constant 5.000000e-01 : f32
    %58 = vector.broadcast %cst_26 : f32 to vector<8x128xf32>
    %59 = arith.addf %57, %58 : vector<8x128xf32>
    %60 = vector.extract_strided_slice %20 {offsets = [0, 128], sizes = [8, 128], strides = [1, 1]} : vector<8x512xf32> to vector<8x128xf32>
    %cst_27 = arith.constant 5.000000e-01 : f32
    %61 = vector.broadcast %cst_27 : f32 to vector<8x128xf32>
    %62 = arith.mulf %61, %60 : vector<8x128xf32>
    %63 = math.tanh %62 : vector<8x128xf32>
    %cst_28 = arith.constant 5.000000e-01 : f32
    %64 = vector.broadcast %cst_28 : f32 to vector<8x128xf32>
    %65 = arith.mulf %64, %63 : vector<8x128xf32>
    %cst_29 = arith.constant 5.000000e-01 : f32
    %66 = vector.broadcast %cst_29 : f32 to vector<8x128xf32>
    %67 = arith.addf %65, %66 : vector<8x128xf32>
    %68 = vector.extract_strided_slice %20 {offsets = [0, 256], sizes = [8, 128], strides = [1, 1]} : vector<8x512xf32> to vector<8x128xf32>
    %69 = math.tanh %68 : vector<8x128xf32>
    %70 = vector.extract_strided_slice %20 {offsets = [0, 384], sizes = [8, 128], strides = [1, 1]} : vector<8x512xf32> to vector<8x128xf32>
    %cst_30 = arith.constant 5.000000e-01 : f32
    %71 = vector.broadcast %cst_30 : f32 to vector<8x128xf32>
    %72 = arith.mulf %71, %70 : vector<8x128xf32>
    %73 = math.tanh %72 : vector<8x128xf32>
    %cst_31 = arith.constant 5.000000e-01 : f32
    %74 = vector.broadcast %cst_31 : f32 to vector<8x128xf32>
    %75 = arith.mulf %74, %73 : vector<8x128xf32>
    %cst_32 = arith.constant 5.000000e-01 : f32
    %76 = vector.broadcast %cst_32 : f32 to vector<8x128xf32>
    %77 = arith.addf %75, %76 : vector<8x128xf32>
    %78 = arith.mulf %67, %7 : vector<8x128xf32>
    %79 = arith.mulf %59, %69 : vector<8x128xf32>
    %80 = arith.addf %78, %79 : vector<8x128xf32>
    %81 = math.tanh %80 : vector<8x128xf32>
    %82 = arith.mulf %77, %81 : vector<8x128xf32>
    %83 = arith.index_cast %c0_i32_10 : i32 to index
    %c0_33 = arith.constant 0 : index
    %c0_34 = arith.constant 0 : index
    %84 = vector.load %arg4[%83, %c0_33, %c0_34] : memref<3x8x128xf32, #tpu.memory_space<vmem>>, vector<1x8x128xf32>
    %85 = vector.shape_cast %84 : vector<1x8x128xf32> to vector<8x128xf32>
    %86 = vector.shape_cast %51 : vector<8x128xf32> to vector<1x8x128xf32>
    tpu.vector_store %arg4[%83, %c0_33, %c0_34], %86 {strides = array<i32>} : memref<3x8x128xf32, #tpu.memory_space<vmem>>, vector<1x8x128xf32>,
    %87 = arith.index_cast %8 : i32 to index
    %c0_35 = arith.constant 0 : index
    %c0_36 = arith.constant 0 : index
    %88 = vector.load %arg5[%87, %c0_35, %c0_36] : memref<3x8x128xf32, #tpu.memory_space<vmem>>, vector<1x8x128xf32>
    %89 = vector.shape_cast %88 : vector<1x8x128xf32> to vector<8x128xf32>
    %90 = vector.shape_cast %82 : vector<8x128xf32> to vector<1x8x128xf32>
    tpu.vector_store %arg5[%87, %c0_35, %c0_36], %90 {strides = array<i32>} : memref<3x8x128xf32, #tpu.memory_space<vmem>>, vector<1x8x128xf32>,
    %c1_i32 = arith.constant 1 : i32
    %c2_i32_37 = arith.constant 2 : i32
    %91 = arith.subi %c2_i32_37, %c1_i32 : i32
    %92 = arith.index_cast %c1_i32 : i32 to index
    %c0_38 = arith.constant 0 : index
    %c0_39 = arith.constant 0 : index
    %93 = vector.load %arg1[%92, %c0_38, %c0_39] : memref<3x8x512xf32, #tpu.memory_space<vmem>>, vector<1x8x512xf32>
    %94 = vector.shape_cast %93 : vector<1x8x512xf32> to vector<8x512xf32>
    %95 = arith.index_cast %91 : i32 to index
    %c0_40 = arith.constant 0 : index
    %c0_41 = arith.constant 0 : index
    %96 = vector.load %arg2[%95, %c0_40, %c0_41] : memref<3x8x512xf32, #tpu.memory_space<vmem>>, vector<1x8x512xf32>
    %97 = vector.shape_cast %96 : vector<1x8x512xf32> to vector<8x512xf32>
    %98 = tpu.concatenate %51, %82 in 1 : vector<8x128xf32>, vector<8x128xf32> -> vector<8x256xf32>
    %cst_42 = arith.constant dense<0.000000e+00> : vector<8x1024xf32>
    %99 = tpu.matmul %98, %3, %cst_42 {dimension_numbers = #tpu.dot_dimension_numbers<[1], [0], [0], [1], [0, 0, 1, 1], [], []>} : vector<8x256xf32>, vector<256x1024xf32>, vector<8x1024xf32> -> vector<8x1024xf32>
    %100 = vector.extract_strided_slice %99 {offsets = [0, 0], sizes = [8, 512], strides = [1, 1]} : vector<8x1024xf32> to vector<8x512xf32>
    %101 = arith.addf %94, %100 : vector<8x512xf32>
    %102 = vector.extract_strided_slice %99 {offsets = [0, 512], sizes = [8, 512], strides = [1, 1]} : vector<8x1024xf32> to vector<8x512xf32>
    %103 = arith.addf %97, %102 : vector<8x512xf32>
    %104 = vector.extract_strided_slice %101 {offsets = [0, 0], sizes = [8, 128], strides = [1, 1]} : vector<8x512xf32> to vector<8x128xf32>
    %cst_43 = arith.constant 5.000000e-01 : f32
    %105 = vector.broadcast %cst_43 : f32 to vector<8x128xf32>
    %106 = arith.mulf %105, %104 : vector<8x128xf32>
    %107 = math.tanh %106 : vector<8x128xf32>
    %cst_44 = arith.constant 5.000000e-01 : f32
    %108 = vector.broadcast %cst_44 : f32 to vector<8x128xf32>
    %109 = arith.mulf %108, %107 : vector<8x128xf32>
    %cst_45 = arith.constant 5.000000e-01 : f32
    %110 = vector.broadcast %cst_45 : f32 to vector<8x128xf32>
    %111 = arith.addf %109, %110 : vector<8x128xf32>
    %112 = vector.extract_strided_slice %101 {offsets = [0, 128], sizes = [8, 128], strides = [1, 1]} : vector<8x512xf32> to vector<8x128xf32>
    %cst_46 = arith.constant 5.000000e-01 : f32
    %113 = vector.broadcast %cst_46 : f32 to vector<8x128xf32>
    %114 = arith.mulf %113, %112 : vector<8x128xf32>
    %115 = math.tanh %114 : vector<8x128xf32>
    %cst_47 = arith.constant 5.000000e-01 : f32
    %116 = vector.broadcast %cst_47 : f32 to vector<8x128xf32>
    %117 = arith.mulf %116, %115 : vector<8x128xf32>
    %cst_48 = arith.constant 5.000000e-01 : f32
    %118 = vector.broadcast %cst_48 : f32 to vector<8x128xf32>
    %119 = arith.addf %117, %118 : vector<8x128xf32>
    %120 = vector.extract_strided_slice %101 {offsets = [0, 256], sizes = [8, 128], strides = [1, 1]} : vector<8x512xf32> to vector<8x128xf32>
    %121 = math.tanh %120 : vector<8x128xf32>
    %122 = vector.extract_strided_slice %101 {offsets = [0, 384], sizes = [8, 128], strides = [1, 1]} : vector<8x512xf32> to vector<8x128xf32>
    %cst_49 = arith.constant 5.000000e-01 : f32
    %123 = vector.broadcast %cst_49 : f32 to vector<8x128xf32>
    %124 = arith.mulf %123, %122 : vector<8x128xf32>
    %125 = math.tanh %124 : vector<8x128xf32>
    %cst_50 = arith.constant 5.000000e-01 : f32
    %126 = vector.broadcast %cst_50 : f32 to vector<8x128xf32>
    %127 = arith.mulf %126, %125 : vector<8x128xf32>
    %cst_51 = arith.constant 5.000000e-01 : f32
    %128 = vector.broadcast %cst_51 : f32 to vector<8x128xf32>
    %129 = arith.addf %127, %128 : vector<8x128xf32>
    %130 = arith.mulf %119, %49 : vector<8x128xf32>
    %131 = arith.mulf %111, %121 : vector<8x128xf32>
    %132 = arith.addf %130, %131 : vector<8x128xf32>
    %133 = math.tanh %132 : vector<8x128xf32>
    %134 = arith.mulf %129, %133 : vector<8x128xf32>
    %135 = vector.extract_strided_slice %103 {offsets = [0, 0], sizes = [8, 128], strides = [1, 1]} : vector<8x512xf32> to vector<8x128xf32>
    %cst_52 = arith.constant 5.000000e-01 : f32
    %136 = vector.broadcast %cst_52 : f32 to vector<8x128xf32>
    %137 = arith.mulf %136, %135 : vector<8x128xf32>
    %138 = math.tanh %137 : vector<8x128xf32>
    %cst_53 = arith.constant 5.000000e-01 : f32
    %139 = vector.broadcast %cst_53 : f32 to vector<8x128xf32>
    %140 = arith.mulf %139, %138 : vector<8x128xf32>
    %cst_54 = arith.constant 5.000000e-01 : f32
    %141 = vector.broadcast %cst_54 : f32 to vector<8x128xf32>
    %142 = arith.addf %140, %141 : vector<8x128xf32>
    %143 = vector.extract_strided_slice %103 {offsets = [0, 128], sizes = [8, 128], strides = [1, 1]} : vector<8x512xf32> to vector<8x128xf32>
    %cst_55 = arith.constant 5.000000e-01 : f32
    %144 = vector.broadcast %cst_55 : f32 to vector<8x128xf32>
    %145 = arith.mulf %144, %143 : vector<8x128xf32>
    %146 = math.tanh %145 : vector<8x128xf32>
    %cst_56 = arith.constant 5.000000e-01 : f32
    %147 = vector.broadcast %cst_56 : f32 to vector<8x128xf32>
    %148 = arith.mulf %147, %146 : vector<8x128xf32>
    %cst_57 = arith.constant 5.000000e-01 : f32
    %149 = vector.broadcast %cst_57 : f32 to vector<8x128xf32>
    %150 = arith.addf %148, %149 : vector<8x128xf32>
    %151 = vector.extract_strided_slice %103 {offsets = [0, 256], sizes = [8, 128], strides = [1, 1]} : vector<8x512xf32> to vector<8x128xf32>
    %152 = math.tanh %151 : vector<8x128xf32>
    %153 = vector.extract_strided_slice %103 {offsets = [0, 384], sizes = [8, 128], strides = [1, 1]} : vector<8x512xf32> to vector<8x128xf32>
    %cst_58 = arith.constant 5.000000e-01 : f32
    %154 = vector.broadcast %cst_58 : f32 to vector<8x128xf32>
    %155 = arith.mulf %154, %153 : vector<8x128xf32>
    %156 = math.tanh %155 : vector<8x128xf32>
    %cst_59 = arith.constant 5.000000e-01 : f32
    %157 = vector.broadcast %cst_59 : f32 to vector<8x128xf32>
    %158 = arith.mulf %157, %156 : vector<8x128xf32>
    %cst_60 = arith.constant 5.000000e-01 : f32
    %159 = vector.broadcast %cst_60 : f32 to vector<8x128xf32>
    %160 = arith.addf %158, %159 : vector<8x128xf32>
    %161 = arith.mulf %150, %80 : vector<8x128xf32>
    %162 = arith.mulf %142, %152 : vector<8x128xf32>
    %163 = arith.addf %161, %162 : vector<8x128xf32>
    %164 = math.tanh %163 : vector<8x128xf32>
    %165 = arith.mulf %160, %164 : vector<8x128xf32>
    %166 = arith.index_cast %c1_i32 : i32 to index
    %c0_61 = arith.constant 0 : index
    %c0_62 = arith.constant 0 : index
    %167 = vector.load %arg4[%166, %c0_61, %c0_62] : memref<3x8x128xf32, #tpu.memory_space<vmem>>, vector<1x8x128xf32>
    %168 = vector.shape_cast %167 : vector<1x8x128xf32> to vector<8x128xf32>
    %169 = vector.shape_cast %134 : vector<8x128xf32> to vector<1x8x128xf32>
    tpu.vector_store %arg4[%166, %c0_61, %c0_62], %169 {strides = array<i32>} : memref<3x8x128xf32, #tpu.memory_space<vmem>>, vector<1x8x128xf32>,
    %170 = arith.index_cast %91 : i32 to index
    %c0_63 = arith.constant 0 : index
    %c0_64 = arith.constant 0 : index
    %171 = vector.load %arg5[%170, %c0_63, %c0_64] : memref<3x8x128xf32, #tpu.memory_space<vmem>>, vector<1x8x128xf32>
    %172 = vector.shape_cast %171 : vector<1x8x128xf32> to vector<8x128xf32>
    %173 = vector.shape_cast %165 : vector<8x128xf32> to vector<1x8x128xf32>
    tpu.vector_store %arg5[%170, %c0_63, %c0_64], %173 {strides = array<i32>} : memref<3x8x128xf32, #tpu.memory_space<vmem>>, vector<1x8x128xf32>,
    %c2_i32_65 = arith.constant 2 : i32
    %c2_i32_66 = arith.constant 2 : i32
    %174 = arith.subi %c2_i32_66, %c2_i32_65 : i32
    %175 = arith.index_cast %c2_i32_65 : i32 to index
    %c0_67 = arith.constant 0 : index
    %c0_68 = arith.constant 0 : index
    %176 = vector.load %arg1[%175, %c0_67, %c0_68] : memref<3x8x512xf32, #tpu.memory_space<vmem>>, vector<1x8x512xf32>
    %177 = vector.shape_cast %176 : vector<1x8x512xf32> to vector<8x512xf32>
    %178 = arith.index_cast %174 : i32 to index
    %c0_69 = arith.constant 0 : index
    %c0_70 = arith.constant 0 : index
    %179 = vector.load %arg2[%178, %c0_69, %c0_70] : memref<3x8x512xf32, #tpu.memory_space<vmem>>, vector<1x8x512xf32>
    %180 = vector.shape_cast %179 : vector<1x8x512xf32> to vector<8x512xf32>
    %181 = tpu.concatenate %134, %165 in 1 : vector<8x128xf32>, vector<8x128xf32> -> vector<8x256xf32>
    %cst_71 = arith.constant dense<0.000000e+00> : vector<8x1024xf32>
    %182 = tpu.matmul %181, %3, %cst_71 {dimension_numbers = #tpu.dot_dimension_numbers<[1], [0], [0], [1], [0, 0, 1, 1], [], []>} : vector<8x256xf32>, vector<256x1024xf32>, vector<8x1024xf32> -> vector<8x1024xf32>
    %183 = vector.extract_strided_slice %182 {offsets = [0, 0], sizes = [8, 512], strides = [1, 1]} : vector<8x1024xf32> to vector<8x512xf32>
    %184 = arith.addf %177, %183 : vector<8x512xf32>
    %185 = vector.extract_strided_slice %182 {offsets = [0, 512], sizes = [8, 512], strides = [1, 1]} : vector<8x1024xf32> to vector<8x512xf32>
    %186 = arith.addf %180, %185 : vector<8x512xf32>
    %187 = vector.extract_strided_slice %184 {offsets = [0, 0], sizes = [8, 128], strides = [1, 1]} : vector<8x512xf32> to vector<8x128xf32>
    %cst_72 = arith.constant 5.000000e-01 : f32
    %188 = vector.broadcast %cst_72 : f32 to vector<8x128xf32>
    %189 = arith.mulf %188, %187 : vector<8x128xf32>
    %190 = math.tanh %189 : vector<8x128xf32>
    %cst_73 = arith.constant 5.000000e-01 : f32
    %191 = vector.broadcast %cst_73 : f32 to vector<8x128xf32>
    %192 = arith.mulf %191, %190 : vector<8x128xf32>
    %cst_74 = arith.constant 5.000000e-01 : f32
    %193 = vector.broadcast %cst_74 : f32 to vector<8x128xf32>
    %194 = arith.addf %192, %193 : vector<8x128xf32>
    %195 = vector.extract_strided_slice %184 {offsets = [0, 128], sizes = [8, 128], strides = [1, 1]} : vector<8x512xf32> to vector<8x128xf32>
    %cst_75 = arith.constant 5.000000e-01 : f32
    %196 = vector.broadcast %cst_75 : f32 to vector<8x128xf32>
    %197 = arith.mulf %196, %195 : vector<8x128xf32>
    %198 = math.tanh %197 : vector<8x128xf32>
    %cst_76 = arith.constant 5.000000e-01 : f32
    %199 = vector.broadcast %cst_76 : f32 to vector<8x128xf32>
    %200 = arith.mulf %199, %198 : vector<8x128xf32>
    %cst_77 = arith.constant 5.000000e-01 : f32
    %201 = vector.broadcast %cst_77 : f32 to vector<8x128xf32>
    %202 = arith.addf %200, %201 : vector<8x128xf32>
    %203 = vector.extract_strided_slice %184 {offsets = [0, 256], sizes = [8, 128], strides = [1, 1]} : vector<8x512xf32> to vector<8x128xf32>
    %204 = math.tanh %203 : vector<8x128xf32>
    %205 = vector.extract_strided_slice %184 {offsets = [0, 384], sizes = [8, 128], strides = [1, 1]} : vector<8x512xf32> to vector<8x128xf32>
    %cst_78 = arith.constant 5.000000e-01 : f32
    %206 = vector.broadcast %cst_78 : f32 to vector<8x128xf32>
    %207 = arith.mulf %206, %205 : vector<8x128xf32>
    %208 = math.tanh %207 : vector<8x128xf32>
    %cst_79 = arith.constant 5.000000e-01 : f32
    %209 = vector.broadcast %cst_79 : f32 to vector<8x128xf32>
    %210 = arith.mulf %209, %208 : vector<8x128xf32>
    %cst_80 = arith.constant 5.000000e-01 : f32
    %211 = vector.broadcast %cst_80 : f32 to vector<8x128xf32>
    %212 = arith.addf %210, %211 : vector<8x128xf32>
    %213 = arith.mulf %202, %132 : vector<8x128xf32>
    %214 = arith.mulf %194, %204 : vector<8x128xf32>
    %215 = arith.addf %213, %214 : vector<8x128xf32>
    %216 = math.tanh %215 : vector<8x128xf32>
    %217 = arith.mulf %212, %216 : vector<8x128xf32>
    %218 = vector.extract_strided_slice %186 {offsets = [0, 0], sizes = [8, 128], strides = [1, 1]} : vector<8x512xf32> to vector<8x128xf32>
    %cst_81 = arith.constant 5.000000e-01 : f32
    %219 = vector.broadcast %cst_81 : f32 to vector<8x128xf32>
    %220 = arith.mulf %219, %218 : vector<8x128xf32>
    %221 = math.tanh %220 : vector<8x128xf32>
    %cst_82 = arith.constant 5.000000e-01 : f32
    %222 = vector.broadcast %cst_82 : f32 to vector<8x128xf32>
    %223 = arith.mulf %222, %221 : vector<8x128xf32>
    %cst_83 = arith.constant 5.000000e-01 : f32
    %224 = vector.broadcast %cst_83 : f32 to vector<8x128xf32>
    %225 = arith.addf %223, %224 : vector<8x128xf32>
    %226 = vector.extract_strided_slice %186 {offsets = [0, 128], sizes = [8, 128], strides = [1, 1]} : vector<8x512xf32> to vector<8x128xf32>
    %cst_84 = arith.constant 5.000000e-01 : f32
    %227 = vector.broadcast %cst_84 : f32 to vector<8x128xf32>
    %228 = arith.mulf %227, %226 : vector<8x128xf32>
    %229 = math.tanh %228 : vector<8x128xf32>
    %cst_85 = arith.constant 5.000000e-01 : f32
    %230 = vector.broadcast %cst_85 : f32 to vector<8x128xf32>
    %231 = arith.mulf %230, %229 : vector<8x128xf32>
    %cst_86 = arith.constant 5.000000e-01 : f32
    %232 = vector.broadcast %cst_86 : f32 to vector<8x128xf32>
    %233 = arith.addf %231, %232 : vector<8x128xf32>
    %234 = vector.extract_strided_slice %186 {offsets = [0, 256], sizes = [8, 128], strides = [1, 1]} : vector<8x512xf32> to vector<8x128xf32>
    %235 = math.tanh %234 : vector<8x128xf32>
    %236 = vector.extract_strided_slice %186 {offsets = [0, 384], sizes = [8, 128], strides = [1, 1]} : vector<8x512xf32> to vector<8x128xf32>
    %cst_87 = arith.constant 5.000000e-01 : f32
    %237 = vector.broadcast %cst_87 : f32 to vector<8x128xf32>
    %238 = arith.mulf %237, %236 : vector<8x128xf32>
    %239 = math.tanh %238 : vector<8x128xf32>
    %cst_88 = arith.constant 5.000000e-01 : f32
    %240 = vector.broadcast %cst_88 : f32 to vector<8x128xf32>
    %241 = arith.mulf %240, %239 : vector<8x128xf32>
    %cst_89 = arith.constant 5.000000e-01 : f32
    %242 = vector.broadcast %cst_89 : f32 to vector<8x128xf32>
    %243 = arith.addf %241, %242 : vector<8x128xf32>
    %244 = arith.mulf %233, %163 : vector<8x128xf32>
    %245 = arith.mulf %225, %235 : vector<8x128xf32>
    %246 = arith.addf %244, %245 : vector<8x128xf32>
    %247 = math.tanh %246 : vector<8x128xf32>
    %248 = arith.mulf %243, %247 : vector<8x128xf32>
    %249 = arith.index_cast %c2_i32_65 : i32 to index
    %c0_90 = arith.constant 0 : index
    %c0_91 = arith.constant 0 : index
    %250 = vector.load %arg4[%249, %c0_90, %c0_91] : memref<3x8x128xf32, #tpu.memory_space<vmem>>, vector<1x8x128xf32>
    %251 = vector.shape_cast %250 : vector<1x8x128xf32> to vector<8x128xf32>
    %252 = vector.shape_cast %217 : vector<8x128xf32> to vector<1x8x128xf32>
    tpu.vector_store %arg4[%249, %c0_90, %c0_91], %252 {strides = array<i32>} : memref<3x8x128xf32, #tpu.memory_space<vmem>>, vector<1x8x128xf32>,
    %253 = arith.index_cast %174 : i32 to index
    %c0_92 = arith.constant 0 : index
    %c0_93 = arith.constant 0 : index
    %254 = vector.load %arg5[%253, %c0_92, %c0_93] : memref<3x8x128xf32, #tpu.memory_space<vmem>>, vector<1x8x128xf32>
    %255 = vector.shape_cast %254 : vector<1x8x128xf32> to vector<8x128xf32>
    %256 = vector.shape_cast %248 : vector<8x128xf32> to vector<1x8x128xf32>
    tpu.vector_store %arg5[%253, %c0_92, %c0_93], %256 {strides = array<i32>} : memref<3x8x128xf32, #tpu.memory_space<vmem>>, vector<1x8x128xf32>,
    %c3_i32 = arith.constant 3 : i32
    %c0_94 = arith.constant 0 : index
    %c0_95 = arith.constant 0 : index
    %257 = vector.load %arg6[%c0_94, %c0_95] : memref<8x128xf32, #tpu.memory_space<vmem>>, vector<8x128xf32>
    tpu.vector_store %arg6[%c0_94, %c0_95], %217 {strides = array<i32>} : memref<8x128xf32, #tpu.memory_space<vmem>>, vector<8x128xf32>,
    %c0_96 = arith.constant 0 : index
    %c0_97 = arith.constant 0 : index
    %258 = vector.load %arg7[%c0_96, %c0_97] : memref<8x128xf32, #tpu.memory_space<vmem>>, vector<8x128xf32>
    tpu.vector_store %arg7[%c0_96, %c0_97], %215 {strides = array<i32>} : memref<8x128xf32, #tpu.memory_space<vmem>>, vector<8x128xf32>,
    %c0_98 = arith.constant 0 : index
    %c0_99 = arith.constant 0 : index
    %259 = vector.load %arg8[%c0_98, %c0_99] : memref<8x128xf32, #tpu.memory_space<vmem>>, vector<8x128xf32>
    tpu.vector_store %arg8[%c0_98, %c0_99], %248 {strides = array<i32>} : memref<8x128xf32, #tpu.memory_space<vmem>>, vector<8x128xf32>,
    %c0_100 = arith.constant 0 : index
    %c0_101 = arith.constant 0 : index
    %260 = vector.load %arg9[%c0_100, %c0_101] : memref<8x128xf32, #tpu.memory_space<vmem>>, vector<8x128xf32>
    tpu.vector_store %arg9[%c0_100, %c0_101], %246 {strides = array<i32>} : memref<8x128xf32, #tpu.memory_space<vmem>>, vector<8x128xf32>,
    return
  }
  func.func @transform_0(%arg0: i32) -> (i32, i32, i32) {
    %c0_i32 = arith.constant 0 : i32
    %c0_i32_0 = arith.constant 0 : i32
    %c0_i32_1 = arith.constant 0 : i32
    return %arg0, %c0_i32, %c0_i32_0 : i32, i32, i32
  }
  func.func @transform_1(%arg0: i32) -> (i32, i32, i32) {
    %c2_i32 = arith.constant 2 : i32
    %0 = arith.subi %c2_i32, %arg0 : i32
    %c0_i32 = arith.constant 0 : i32
    %c0_i32_0 = arith.constant 0 : i32
    %c0_i32_1 = arith.constant 0 : i32
    return %0, %c0_i32, %c0_i32_0 : i32, i32, i32
  }
  func.func @transform_2(%arg0: i32) -> (i32, i32) {
    %c0_i32 = arith.constant 0 : i32
    %c0_i32_0 = arith.constant 0 : i32
    %c0_i32_1 = arith.constant 0 : i32
    return %c0_i32, %c0_i32_0 : i32, i32
  }
  func.func @transform_3(%arg0: i32) -> (i32, i32, i32) {
    %c0_i32 = arith.constant 0 : i32
    %c0_i32_0 = arith.constant 0 : i32
    %c0_i32_1 = arith.constant 0 : i32
    return %arg0, %c0_i32, %c0_i32_0 : i32, i32, i32
  }
  func.func @transform_4(%arg0: i32) -> (i32, i32, i32) {
    %c2_i32 = arith.constant 2 : i32
    %0 = arith.subi %c2_i32, %arg0 : i32
    %c0_i32 = arith.constant 0 : i32
    %c0_i32_0 = arith.constant 0 : i32
    %c0_i32_1 = arith.constant 0 : i32
    return %0, %c0_i32, %c0_i32_0 : i32, i32, i32
  }
}

module attributes {stable_mosaic.version = 11 : i64} {
  func.func @_fused_bilstm_kernel(%arg0: i32, %arg1: memref<3x8x512xf32, #tpu.memory_space<vmem>>, %arg2: memref<3x8x512xf32, #tpu.memory_space<vmem>>, %arg3: memref<256x1024xf32, #tpu.memory_space<vmem>>, %arg4: memref<3x8x128xf32, #tpu.memory_space<vmem>>, %arg5: memref<3x8x128xf32, #tpu.memory_space<vmem>>, %arg6: memref<8x128xf32, #tpu.memory_space<vmem>>, %arg7: memref<8x128xf32, #tpu.memory_space<vmem>>, %arg8: memref<8x128xf32, #tpu.memory_space<vmem>>, %arg9: memref<8x128xf32, #tpu.memory_space<vmem>>) attributes {dimension_semantics = [#tpu.dimension_semantics<arbitrary>], iteration_bounds = array<i64: 3>, scalar_prefetch = 0 : i64, scratch_operands = 4 : i64, tpu.core_type = #tpu.core_type<tc>, window_params = [{transform_indices = @transform_0, window_bounds = array<i64: 3, 8, 512>}, {transform_indices = @transform_1, window_bounds = array<i64: 3, 8, 512>}, {pipeline_mode = #tpu.pipeline_mode<synchronous>, transform_indices = @transform_2, window_bounds = array<i64: 256, 1024>}, {transform_indices = @transform_3, window_bounds = array<i64: 3, 8, 128>}, {transform_indices = @transform_4, window_bounds = array<i64: 3, 8, 128>}]} {
    %c0_i32 = arith.constant 0 : i32
    %0 = arith.cmpi eq, %arg0, %c0_i32 : i32
    %1 = arith.extui %0 : i1 to i32
    %c0_i32_0 = arith.constant 0 : i32
    %2 = arith.cmpi ne, %1, %c0_i32_0 : i32
    scf.if %2 {
      %cst_102 = arith.constant 0.000000e+00 : f32
      %261 = vector.broadcast %cst_102 : f32 to vector<8x128xf32>
      %c0_103 = arith.constant 0 : index
      %c0_104 = arith.constant 0 : index
      %262 = vector.load %arg6[%c0_103, %c0_104] : memref<8x128xf32, #tpu.memory_space<vmem>>, vector<8x128xf32>
      tpu.vector_store %arg6[%c0_103, %c0_104], %261 {strides = array<i32>} : memref<8x128xf32, #tpu.memory_space<vmem>>, vector<8x128xf32>,
      %cst_105 = arith.constant 0.000000e+00 : f32
      %263 = vector.broadcast %cst_105 : f32 to vector<8x128xf32>
      %c0_106 = arith.constant 0 : index
      %c0_107 = arith.constant 0 : index
      %264 = vector.load %arg7[%c0_106, %c0_107] : memref<8x128xf32, #tpu.memory_space<vmem>>, vector<8x128xf32>
      tpu.vector_store %arg7[%c0_106, %c0_107], %263 {strides = array<i32>} : memref<8x128xf32, #tpu.memory_space<vmem>>, vector<8x128xf32>,
      %cst_108 = arith.constant 0.000000e+00 : f32
      %265 = vector.broadcast %cst_108 : f32 to vector<8x128xf32>
      %c0_109 = arith.constant 0 : index
      %c0_110 = arith.constant 0 : index
      %266 = vector.load %arg8[%c0_109, %c0_110] : memref<8x128xf32, #tpu.memory_space<vmem>>, vector<8x128xf32>
      tpu.vector_store %arg8[%c0_109, %c0_110], %265 {strides = array<i32>} : memref<8x128xf32, #tpu.memory_space<vmem>>, vector<8x128xf32>,
      %cst_111 = arith.constant 0.000000e+00 : f32
      %267 = vector.broadcast %cst_111 : f32 to vector<8x128xf32>
      %c0_112 = arith.constant 0 : index
      %c0_113 = arith.constant 0 : index
      %268 = vector.load %arg9[%c0_112, %c0_113] : memref<8x128xf32, #tpu.memory_space<vmem>>, vector<8x128xf32>
      tpu.vector_store %arg9[%c0_112, %c0_113], %267 {strides = array<i32>} : memref<8x128xf32, #tpu.memory_space<vmem>>, vector<8x128xf32>,
    } else {
    }
    %c0 = arith.constant 0 : index
    %c0_1 = arith.constant 0 : index
    %3 = vector.load %arg3[%c0, %c0_1] : memref<256x1024xf32, #tpu.memory_space<vmem>>, vector<256x1024xf32>
    %c0_2 = arith.constant 0 : index
    %c0_3 = arith.constant 0 : index
    %4 = vector.load %arg6[%c0_2, %c0_3] : memref<8x128xf32, #tpu.memory_space<vmem>>, vector<8x128xf32>
    %c0_4 = arith.constant 0 : index
    %c0_5 = arith.constant 0 : index
    %5 = vector.load %arg7[%c0_4, %c0_5] : memref<8x128xf32, #tpu.memory_space<vmem>>, vector<8x128xf32>
    %c0_6 = arith.constant 0 : index
    %c0_7 = arith.constant 0 : index
    %6 = vector.load %arg8[%c0_6, %c0_7] : memref<8x128xf32, #tpu.memory_space<vmem>>, vector<8x128xf32>
    %c0_8 = arith.constant 0 : index
    %c0_9 = arith.constant 0 : index
    %7 = vector.load %arg9[%c0_8, %c0_9] : memref<8x128xf32, #tpu.memory_space<vmem>>, vector<8x128xf32>
    %c0_i32_10 = arith.constant 0 : i32
    %c2_i32 = arith.constant 2 : i32
    %8 = arith.subi %c2_i32, %c0_i32_10 : i32
    %9 = arith.index_cast %c0_i32_10 : i32 to index
    %c0_11 = arith.constant 0 : index
    %c0_12 = arith.constant 0 : index
    %10 = vector.load %arg1[%9, %c0_11, %c0_12] : memref<3x8x512xf32, #tpu.memory_space<vmem>>, vector<1x8x512xf32>
    %11 = vector.shape_cast %10 : vector<1x8x512xf32> to vector<8x512xf32>
    %12 = arith.index_cast %8 : i32 to index
    %c0_13 = arith.constant 0 : index
    %c0_14 = arith.constant 0 : index
    %13 = vector.load %arg2[%12, %c0_13, %c0_14] : memref<3x8x512xf32, #tpu.memory_space<vmem>>, vector<1x8x512xf32>
    %14 = vector.shape_cast %13 : vector<1x8x512xf32> to vector<8x512xf32>
    %15 = tpu.concatenate %4, %6 in 1 : vector<8x128xf32>, vector<8x128xf32> -> vector<8x256xf32>
    %cst = arith.constant dense<0.000000e+00> : vector<8x1024xf32>
    %16 = tpu.matmul %15, %3, %cst {dimension_numbers = #tpu.dot_dimension_numbers<[1], [0], [0], [1], [0, 0, 1, 1], [], []>} : vector<8x256xf32>, vector<256x1024xf32>, vector<8x1024xf32> -> vector<8x1024xf32>
    %17 = vector.extract_strided_slice %16 {offsets = [0, 0], sizes = [8, 512], strides = [1, 1]} : vector<8x1024xf32> to vector<8x512xf32>
    %18 = arith.addf %11, %17 : vector<8x512xf32>
    %19 = vector.extract_strided_slice %16 {offsets = [0, 512], sizes = [8, 512], strides = [1, 1]} : vector<8x1024xf32> to vector<8x512xf32>
    %20 = arith.addf %14, %19 : vector<8x512xf32>
    %21 = vector.extract_strided_slice %18 {offsets = [0, 0], sizes = [8, 128], strides = [1, 1]} : vector<8x512xf32> to vector<8x128xf32>
    %cst_15 = arith.constant 5.000000e-01 : f32
    %22 = vector.broadcast %cst_15 : f32 to vector<8x128xf32>
    %23 = arith.mulf %22, %21 : vector<8x128xf32>
    %24 = math.tanh %23 : vector<8x128xf32>
    %cst_16 = arith.constant 5.000000e-01 : f32
    %25 = vector.broadcast %cst_16 : f32 to vector<8x128xf32>
    %26 = arith.mulf %25, %24 : vector<8x128xf32>
    %cst_17 = arith.constant 5.000000e-01 : f32
    %27 = vector.broadcast %cst_17 : f32 to vector<8x128xf32>
    %28 = arith.addf %26, %27 : vector<8x128xf32>
    %29 = vector.extract_strided_slice %18 {offsets = [0, 128], sizes = [8, 128], strides = [1, 1]} : vector<8x512xf32> to vector<8x128xf32>
    %cst_18 = arith.constant 5.000000e-01 : f32
    %30 = vector.broadcast %cst_18 : f32 to vector<8x128xf32>
    %31 = arith.mulf %30, %29 : vector<8x128xf32>
    %32 = math.tanh %31 : vector<8x128xf32>
    %cst_19 = arith.constant 5.000000e-01 : f32
    %33 = vector.broadcast %cst_19 : f32 to vector<8x128xf32>
    %34 = arith.mulf %33, %32 : vector<8x128xf32>
    %cst_20 = arith.constant 5.000000e-01 : f32
    %35 = vector.broadcast %cst_20 : f32 to vector<8x128xf32>
    %36 = arith.addf %34, %35 : vector<8x128xf32>
    %37 = vector.extract_strided_slice %18 {offsets = [0, 256], sizes = [8, 128], strides = [1, 1]} : vector<8x512xf32> to vector<8x128xf32>
    %38 = math.tanh %37 : vector<8x128xf32>
    %39 = vector.extract_strided_slice %18 {offsets = [0, 384], sizes = [8, 128], strides = [1, 1]} : vector<8x512xf32> to vector<8x128xf32>
    %cst_21 = arith.constant 5.000000e-01 : f32
    %40 = vector.broadcast %cst_21 : f32 to vector<8x128xf32>
    %41 = arith.mulf %40, %39 : vector<8x128xf32>
    %42 = math.tanh %41 : vector<8x128xf32>
    %cst_22 = arith.constant 5.000000e-01 : f32
    %43 = vector.broadcast %cst_22 : f32 to vector<8x128xf32>
    %44 = arith.mulf %43, %42 : vector<8x128xf32>
    %cst_23 = arith.constant 5.000000e-01 : f32
    %45 = vector.broadcast %cst_23 : f32 to vector<8x128xf32>
    %46 = arith.addf %44, %45 : vector<8x128xf32>
    %47 = arith.mulf %36, %5 : vector<8x128xf32>
    %48 = arith.mulf %28, %38 : vector<8x128xf32>
    %49 = arith.addf %47, %48 : vector<8x128xf32>
    %50 = math.tanh %49 : vector<8x128xf32>
    %51 = arith.mulf %46, %50 : vector<8x128xf32>
    %52 = vector.extract_strided_slice %20 {offsets = [0, 0], sizes = [8, 128], strides = [1, 1]} : vector<8x512xf32> to vector<8x128xf32>
    %cst_24 = arith.constant 5.000000e-01 : f32
    %53 = vector.broadcast %cst_24 : f32 to vector<8x128xf32>
    %54 = arith.mulf %53, %52 : vector<8x128xf32>
    %55 = math.tanh %54 : vector<8x128xf32>
    %cst_25 = arith.constant 5.000000e-01 : f32
    %56 = vector.broadcast %cst_25 : f32 to vector<8x128xf32>
    %57 = arith.mulf %56, %55 : vector<8x128xf32>
    %cst_26 = arith.constant 5.000000e-01 : f32
    %58 = vector.broadcast %cst_26 : f32 to vector<8x128xf32>
    %59 = arith.addf %57, %58 : vector<8x128xf32>
    %60 = vector.extract_strided_slice %20 {offsets = [0, 128], sizes = [8, 128], strides = [1, 1]} : vector<8x512xf32> to vector<8x128xf32>
    %cst_27 = arith.constant 5.000000e-01 : f32
    %61 = vector.broadcast %cst_27 : f32 to vector<8x128xf32>
    %62 = arith.mulf %61, %60 : vector<8x128xf32>
    %63 = math.tanh %62 : vector<8x128xf32>
    %cst_28 = arith.constant 5.000000e-01 : f32
    %64 = vector.broadcast %cst_28 : f32 to vector<8x128xf32>
    %65 = arith.mulf %64, %63 : vector<8x128xf32>
    %cst_29 = arith.constant 5.000000e-01 : f32
    %66 = vector.broadcast %cst_29 : f32 to vector<8x128xf32>
    %67 = arith.addf %65, %66 : vector<8x128xf32>
    %68 = vector.extract_strided_slice %20 {offsets = [0, 256], sizes = [8, 128], strides = [1, 1]} : vector<8x512xf32> to vector<8x128xf32>
    %69 = math.tanh %68 : vector<8x128xf32>
    %70 = vector.extract_strided_slice %20 {offsets = [0, 384], sizes = [8, 128], strides = [1, 1]} : vector<8x512xf32> to vector<8x128xf32>
    %cst_30 = arith.constant 5.000000e-01 : f32
    %71 = vector.broadcast %cst_30 : f32 to vector<8x128xf32>
    %72 = arith.mulf %71, %70 : vector<8x128xf32>
    %73 = math.tanh %72 : vector<8x128xf32>
    %cst_31 = arith.constant 5.000000e-01 : f32
    %74 = vector.broadcast %cst_31 : f32 to vector<8x128xf32>
    %75 = arith.mulf %74, %73 : vector<8x128xf32>
    %cst_32 = arith.constant 5.000000e-01 : f32
    %76 = vector.broadcast %cst_32 : f32 to vector<8x128xf32>
    %77 = arith.addf %75, %76 : vector<8x128xf32>
    %78 = arith.mulf %67, %7 : vector<8x128xf32>
    %79 = arith.mulf %59, %69 : vector<8x128xf32>
    %80 = arith.addf %78, %79 : vector<8x128xf32>
    %81 = math.tanh %80 : vector<8x128xf32>
    %82 = arith.mulf %77, %81 : vector<8x128xf32>
    %83 = arith.index_cast %c0_i32_10 : i32 to index
    %c0_33 = arith.constant 0 : index
    %c0_34 = arith.constant 0 : index
    %84 = vector.load %arg4[%83, %c0_33, %c0_34] : memref<3x8x128xf32, #tpu.memory_space<vmem>>, vector<1x8x128xf32>
    %85 = vector.shape_cast %84 : vector<1x8x128xf32> to vector<8x128xf32>
    %86 = vector.shape_cast %51 : vector<8x128xf32> to vector<1x8x128xf32>
    tpu.vector_store %arg4[%83, %c0_33, %c0_34], %86 {strides = array<i32>} : memref<3x8x128xf32, #tpu.memory_space<vmem>>, vector<1x8x128xf32>,
    %87 = arith.index_cast %8 : i32 to index
    %c0_35 = arith.constant 0 : index
    %c0_36 = arith.constant 0 : index
    %88 = vector.load %arg5[%87, %c0_35, %c0_36] : memref<3x8x128xf32, #tpu.memory_space<vmem>>, vector<1x8x128xf32>
    %89 = vector.shape_cast %88 : vector<1x8x128xf32> to vector<8x128xf32>
    %90 = vector.shape_cast %82 : vector<8x128xf32> to vector<1x8x128xf32>
    tpu.vector_store %arg5[%87, %c0_35, %c0_36], %90 {strides = array<i32>} : memref<3x8x128xf32, #tpu.memory_space<vmem>>, vector<1x8x128xf32>,
    %c1_i32 = arith.constant 1 : i32
    %c2_i32_37 = arith.constant 2 : i32
    %91 = arith.subi %c2_i32_37, %c1_i32 : i32
    %92 = arith.index_cast %c1_i32 : i32 to index
    %c0_38 = arith.constant 0 : index
    %c0_39 = arith.constant 0 : index
    %93 = vector.load %arg1[%92, %c0_38, %c0_39] : memref<3x8x512xf32, #tpu.memory_space<vmem>>, vector<1x8x512xf32>
    %94 = vector.shape_cast %93 : vector<1x8x512xf32> to vector<8x512xf32>
    %95 = arith.index_cast %91 : i32 to index
    %c0_40 = arith.constant 0 : index
    %c0_41 = arith.constant 0 : index
    %96 = vector.load %arg2[%95, %c0_40, %c0_41] : memref<3x8x512xf32, #tpu.memory_space<vmem>>, vector<1x8x512xf32>
    %97 = vector.shape_cast %96 : vector<1x8x512xf32> to vector<8x512xf32>
    %98 = tpu.concatenate %51, %82 in 1 : vector<8x128xf32>, vector<8x128xf32> -> vector<8x256xf32>
    %cst_42 = arith.constant dense<0.000000e+00> : vector<8x1024xf32>
    %99 = tpu.matmul %98, %3, %cst_42 {dimension_numbers = #tpu.dot_dimension_numbers<[1], [0], [0], [1], [0, 0, 1, 1], [], []>} : vector<8x256xf32>, vector<256x1024xf32>, vector<8x1024xf32> -> vector<8x1024xf32>
    %100 = vector.extract_strided_slice %99 {offsets = [0, 0], sizes = [8, 512], strides = [1, 1]} : vector<8x1024xf32> to vector<8x512xf32>
    %101 = arith.addf %94, %100 : vector<8x512xf32>
    %102 = vector.extract_strided_slice %99 {offsets = [0, 512], sizes = [8, 512], strides = [1, 1]} : vector<8x1024xf32> to vector<8x512xf32>
    %103 = arith.addf %97, %102 : vector<8x512xf32>
    %104 = vector.extract_strided_slice %101 {offsets = [0, 0], sizes = [8, 128], strides = [1, 1]} : vector<8x512xf32> to vector<8x128xf32>
    %cst_43 = arith.constant 5.000000e-01 : f32
    %105 = vector.broadcast %cst_43 : f32 to vector<8x128xf32>
    %106 = arith.mulf %105, %104 : vector<8x128xf32>
    %107 = math.tanh %106 : vector<8x128xf32>
    %cst_44 = arith.constant 5.000000e-01 : f32
    %108 = vector.broadcast %cst_44 : f32 to vector<8x128xf32>
    %109 = arith.mulf %108, %107 : vector<8x128xf32>
    %cst_45 = arith.constant 5.000000e-01 : f32
    %110 = vector.broadcast %cst_45 : f32 to vector<8x128xf32>
    %111 = arith.addf %109, %110 : vector<8x128xf32>
    %112 = vector.extract_strided_slice %101 {offsets = [0, 128], sizes = [8, 128], strides = [1, 1]} : vector<8x512xf32> to vector<8x128xf32>
    %cst_46 = arith.constant 5.000000e-01 : f32
    %113 = vector.broadcast %cst_46 : f32 to vector<8x128xf32>
    %114 = arith.mulf %113, %112 : vector<8x128xf32>
    %115 = math.tanh %114 : vector<8x128xf32>
    %cst_47 = arith.constant 5.000000e-01 : f32
    %116 = vector.broadcast %cst_47 : f32 to vector<8x128xf32>
    %117 = arith.mulf %116, %115 : vector<8x128xf32>
    %cst_48 = arith.constant 5.000000e-01 : f32
    %118 = vector.broadcast %cst_48 : f32 to vector<8x128xf32>
    %119 = arith.addf %117, %118 : vector<8x128xf32>
    %120 = vector.extract_strided_slice %101 {offsets = [0, 256], sizes = [8, 128], strides = [1, 1]} : vector<8x512xf32> to vector<8x128xf32>
    %121 = math.tanh %120 : vector<8x128xf32>
    %122 = vector.extract_strided_slice %101 {offsets = [0, 384], sizes = [8, 128], strides = [1, 1]} : vector<8x512xf32> to vector<8x128xf32>
    %cst_49 = arith.constant 5.000000e-01 : f32
    %123 = vector.broadcast %cst_49 : f32 to vector<8x128xf32>
    %124 = arith.mulf %123, %122 : vector<8x128xf32>
    %125 = math.tanh %124 : vector<8x128xf32>
    %cst_50 = arith.constant 5.000000e-01 : f32
    %126 = vector.broadcast %cst_50 : f32 to vector<8x128xf32>
    %127 = arith.mulf %126, %125 : vector<8x128xf32>
    %cst_51 = arith.constant 5.000000e-01 : f32
    %128 = vector.broadcast %cst_51 : f32 to vector<8x128xf32>
    %129 = arith.addf %127, %128 : vector<8x128xf32>
    %130 = arith.mulf %119, %49 : vector<8x128xf32>
    %131 = arith.mulf %111, %121 : vector<8x128xf32>
    %132 = arith.addf %130, %131 : vector<8x128xf32>
    %133 = math.tanh %132 : vector<8x128xf32>
    %134 = arith.mulf %129, %133 : vector<8x128xf32>
    %135 = vector.extract_strided_slice %103 {offsets = [0, 0], sizes = [8, 128], strides = [1, 1]} : vector<8x512xf32> to vector<8x128xf32>
    %cst_52 = arith.constant 5.000000e-01 : f32
    %136 = vector.broadcast %cst_52 : f32 to vector<8x128xf32>
    %137 = arith.mulf %136, %135 : vector<8x128xf32>
    %138 = math.tanh %137 : vector<8x128xf32>
    %cst_53 = arith.constant 5.000000e-01 : f32
    %139 = vector.broadcast %cst_53 : f32 to vector<8x128xf32>
    %140 = arith.mulf %139, %138 : vector<8x128xf32>
    %cst_54 = arith.constant 5.000000e-01 : f32
    %141 = vector.broadcast %cst_54 : f32 to vector<8x128xf32>
    %142 = arith.addf %140, %141 : vector<8x128xf32>
    %143 = vector.extract_strided_slice %103 {offsets = [0, 128], sizes = [8, 128], strides = [1, 1]} : vector<8x512xf32> to vector<8x128xf32>
    %cst_55 = arith.constant 5.000000e-01 : f32
    %144 = vector.broadcast %cst_55 : f32 to vector<8x128xf32>
    %145 = arith.mulf %144, %143 : vector<8x128xf32>
    %146 = math.tanh %145 : vector<8x128xf32>
    %cst_56 = arith.constant 5.000000e-01 : f32
    %147 = vector.broadcast %cst_56 : f32 to vector<8x128xf32>
    %148 = arith.mulf %147, %146 : vector<8x128xf32>
    %cst_57 = arith.constant 5.000000e-01 : f32
    %149 = vector.broadcast %cst_57 : f32 to vector<8x128xf32>
    %150 = arith.addf %148, %149 : vector<8x128xf32>
    %151 = vector.extract_strided_slice %103 {offsets = [0, 256], sizes = [8, 128], strides = [1, 1]} : vector<8x512xf32> to vector<8x128xf32>
    %152 = math.tanh %151 : vector<8x128xf32>
    %153 = vector.extract_strided_slice %103 {offsets = [0, 384], sizes = [8, 128], strides = [1, 1]} : vector<8x512xf32> to vector<8x128xf32>
    %cst_58 = arith.constant 5.000000e-01 : f32
    %154 = vector.broadcast %cst_58 : f32 to vector<8x128xf32>
    %155 = arith.mulf %154, %153 : vector<8x128xf32>
    %156 = math.tanh %155 : vector<8x128xf32>
    %cst_59 = arith.constant 5.000000e-01 : f32
    %157 = vector.broadcast %cst_59 : f32 to vector<8x128xf32>
    %158 = arith.mulf %157, %156 : vector<8x128xf32>
    %cst_60 = arith.constant 5.000000e-01 : f32
    %159 = vector.broadcast %cst_60 : f32 to vector<8x128xf32>
    %160 = arith.addf %158, %159 : vector<8x128xf32>
    %161 = arith.mulf %150, %80 : vector<8x128xf32>
    %162 = arith.mulf %142, %152 : vector<8x128xf32>
    %163 = arith.addf %161, %162 : vector<8x128xf32>
    %164 = math.tanh %163 : vector<8x128xf32>
    %165 = arith.mulf %160, %164 : vector<8x128xf32>
    %166 = arith.index_cast %c1_i32 : i32 to index
    %c0_61 = arith.constant 0 : index
    %c0_62 = arith.constant 0 : index
    %167 = vector.load %arg4[%166, %c0_61, %c0_62] : memref<3x8x128xf32, #tpu.memory_space<vmem>>, vector<1x8x128xf32>
    %168 = vector.shape_cast %167 : vector<1x8x128xf32> to vector<8x128xf32>
    %169 = vector.shape_cast %134 : vector<8x128xf32> to vector<1x8x128xf32>
    tpu.vector_store %arg4[%166, %c0_61, %c0_62], %169 {strides = array<i32>} : memref<3x8x128xf32, #tpu.memory_space<vmem>>, vector<1x8x128xf32>,
    %170 = arith.index_cast %91 : i32 to index
    %c0_63 = arith.constant 0 : index
    %c0_64 = arith.constant 0 : index
    %171 = vector.load %arg5[%170, %c0_63, %c0_64] : memref<3x8x128xf32, #tpu.memory_space<vmem>>, vector<1x8x128xf32>
    %172 = vector.shape_cast %171 : vector<1x8x128xf32> to vector<8x128xf32>
    %173 = vector.shape_cast %165 : vector<8x128xf32> to vector<1x8x128xf32>
    tpu.vector_store %arg5[%170, %c0_63, %c0_64], %173 {strides = array<i32>} : memref<3x8x128xf32, #tpu.memory_space<vmem>>, vector<1x8x128xf32>,
    %c2_i32_65 = arith.constant 2 : i32
    %c2_i32_66 = arith.constant 2 : i32
    %174 = arith.subi %c2_i32_66, %c2_i32_65 : i32
    %175 = arith.index_cast %c2_i32_65 : i32 to index
    %c0_67 = arith.constant 0 : index
    %c0_68 = arith.constant 0 : index
    %176 = vector.load %arg1[%175, %c0_67, %c0_68] : memref<3x8x512xf32, #tpu.memory_space<vmem>>, vector<1x8x512xf32>
    %177 = vector.shape_cast %176 : vector<1x8x512xf32> to vector<8x512xf32>
    %178 = arith.index_cast %174 : i32 to index
    %c0_69 = arith.constant 0 : index
    %c0_70 = arith.constant 0 : index
    %179 = vector.load %arg2[%178, %c0_69, %c0_70] : memref<3x8x512xf32, #tpu.memory_space<vmem>>, vector<1x8x512xf32>
    %180 = vector.shape_cast %179 : vector<1x8x512xf32> to vector<8x512xf32>
    %181 = tpu.concatenate %134, %165 in 1 : vector<8x128xf32>, vector<8x128xf32> -> vector<8x256xf32>
    %cst_71 = arith.constant dense<0.000000e+00> : vector<8x1024xf32>
    %182 = tpu.matmul %181, %3, %cst_71 {dimension_numbers = #tpu.dot_dimension_numbers<[1], [0], [0], [1], [0, 0, 1, 1], [], []>} : vector<8x256xf32>, vector<256x1024xf32>, vector<8x1024xf32> -> vector<8x1024xf32>
    %183 = vector.extract_strided_slice %182 {offsets = [0, 0], sizes = [8, 512], strides = [1, 1]} : vector<8x1024xf32> to vector<8x512xf32>
    %184 = arith.addf %177, %183 : vector<8x512xf32>
    %185 = vector.extract_strided_slice %182 {offsets = [0, 512], sizes = [8, 512], strides = [1, 1]} : vector<8x1024xf32> to vector<8x512xf32>
    %186 = arith.addf %180, %185 : vector<8x512xf32>
    %187 = vector.extract_strided_slice %184 {offsets = [0, 0], sizes = [8, 128], strides = [1, 1]} : vector<8x512xf32> to vector<8x128xf32>
    %cst_72 = arith.constant 5.000000e-01 : f32
    %188 = vector.broadcast %cst_72 : f32 to vector<8x128xf32>
    %189 = arith.mulf %188, %187 : vector<8x128xf32>
    %190 = math.tanh %189 : vector<8x128xf32>
    %cst_73 = arith.constant 5.000000e-01 : f32
    %191 = vector.broadcast %cst_73 : f32 to vector<8x128xf32>
    %192 = arith.mulf %191, %190 : vector<8x128xf32>
    %cst_74 = arith.constant 5.000000e-01 : f32
    %193 = vector.broadcast %cst_74 : f32 to vector<8x128xf32>
    %194 = arith.addf %192, %193 : vector<8x128xf32>
    %195 = vector.extract_strided_slice %184 {offsets = [0, 128], sizes = [8, 128], strides = [1, 1]} : vector<8x512xf32> to vector<8x128xf32>
    %cst_75 = arith.constant 5.000000e-01 : f32
    %196 = vector.broadcast %cst_75 : f32 to vector<8x128xf32>
    %197 = arith.mulf %196, %195 : vector<8x128xf32>
    %198 = math.tanh %197 : vector<8x128xf32>
    %cst_76 = arith.constant 5.000000e-01 : f32
    %199 = vector.broadcast %cst_76 : f32 to vector<8x128xf32>
    %200 = arith.mulf %199, %198 : vector<8x128xf32>
    %cst_77 = arith.constant 5.000000e-01 : f32
    %201 = vector.broadcast %cst_77 : f32 to vector<8x128xf32>
    %202 = arith.addf %200, %201 : vector<8x128xf32>
    %203 = vector.extract_strided_slice %184 {offsets = [0, 256], sizes = [8, 128], strides = [1, 1]} : vector<8x512xf32> to vector<8x128xf32>
    %204 = math.tanh %203 : vector<8x128xf32>
    %205 = vector.extract_strided_slice %184 {offsets = [0, 384], sizes = [8, 128], strides = [1, 1]} : vector<8x512xf32> to vector<8x128xf32>
    %cst_78 = arith.constant 5.000000e-01 : f32
    %206 = vector.broadcast %cst_78 : f32 to vector<8x128xf32>
    %207 = arith.mulf %206, %205 : vector<8x128xf32>
    %208 = math.tanh %207 : vector<8x128xf32>
    %cst_79 = arith.constant 5.000000e-01 : f32
    %209 = vector.broadcast %cst_79 : f32 to vector<8x128xf32>
    %210 = arith.mulf %209, %208 : vector<8x128xf32>
    %cst_80 = arith.constant 5.000000e-01 : f32
    %211 = vector.broadcast %cst_80 : f32 to vector<8x128xf32>
    %212 = arith.addf %210, %211 : vector<8x128xf32>
    %213 = arith.mulf %202, %132 : vector<8x128xf32>
    %214 = arith.mulf %194, %204 : vector<8x128xf32>
    %215 = arith.addf %213, %214 : vector<8x128xf32>
    %216 = math.tanh %215 : vector<8x128xf32>
    %217 = arith.mulf %212, %216 : vector<8x128xf32>
    %218 = vector.extract_strided_slice %186 {offsets = [0, 0], sizes = [8, 128], strides = [1, 1]} : vector<8x512xf32> to vector<8x128xf32>
    %cst_81 = arith.constant 5.000000e-01 : f32
    %219 = vector.broadcast %cst_81 : f32 to vector<8x128xf32>
    %220 = arith.mulf %219, %218 : vector<8x128xf32>
    %221 = math.tanh %220 : vector<8x128xf32>
    %cst_82 = arith.constant 5.000000e-01 : f32
    %222 = vector.broadcast %cst_82 : f32 to vector<8x128xf32>
    %223 = arith.mulf %222, %221 : vector<8x128xf32>
    %cst_83 = arith.constant 5.000000e-01 : f32
    %224 = vector.broadcast %cst_83 : f32 to vector<8x128xf32>
    %225 = arith.addf %223, %224 : vector<8x128xf32>
    %226 = vector.extract_strided_slice %186 {offsets = [0, 128], sizes = [8, 128], strides = [1, 1]} : vector<8x512xf32> to vector<8x128xf32>
    %cst_84 = arith.constant 5.000000e-01 : f32
    %227 = vector.broadcast %cst_84 : f32 to vector<8x128xf32>
    %228 = arith.mulf %227, %226 : vector<8x128xf32>
    %229 = math.tanh %228 : vector<8x128xf32>
    %cst_85 = arith.constant 5.000000e-01 : f32
    %230 = vector.broadcast %cst_85 : f32 to vector<8x128xf32>
    %231 = arith.mulf %230, %229 : vector<8x128xf32>
    %cst_86 = arith.constant 5.000000e-01 : f32
    %232 = vector.broadcast %cst_86 : f32 to vector<8x128xf32>
    %233 = arith.addf %231, %232 : vector<8x128xf32>
    %234 = vector.extract_strided_slice %186 {offsets = [0, 256], sizes = [8, 128], strides = [1, 1]} : vector<8x512xf32> to vector<8x128xf32>
    %235 = math.tanh %234 : vector<8x128xf32>
    %236 = vector.extract_strided_slice %186 {offsets = [0, 384], sizes = [8, 128], strides = [1, 1]} : vector<8x512xf32> to vector<8x128xf32>
    %cst_87 = arith.constant 5.000000e-01 : f32
    %237 = vector.broadcast %cst_87 : f32 to vector<8x128xf32>
    %238 = arith.mulf %237, %236 : vector<8x128xf32>
    %239 = math.tanh %238 : vector<8x128xf32>
    %cst_88 = arith.constant 5.000000e-01 : f32
    %240 = vector.broadcast %cst_88 : f32 to vector<8x128xf32>
    %241 = arith.mulf %240, %239 : vector<8x128xf32>
    %cst_89 = arith.constant 5.000000e-01 : f32
    %242 = vector.broadcast %cst_89 : f32 to vector<8x128xf32>
    %243 = arith.addf %241, %242 : vector<8x128xf32>
    %244 = arith.mulf %233, %163 : vector<8x128xf32>
    %245 = arith.mulf %225, %235 : vector<8x128xf32>
    %246 = arith.addf %244, %245 : vector<8x128xf32>
    %247 = math.tanh %246 : vector<8x128xf32>
    %248 = arith.mulf %243, %247 : vector<8x128xf32>
    %249 = arith.index_cast %c2_i32_65 : i32 to index
    %c0_90 = arith.constant 0 : index
    %c0_91 = arith.constant 0 : index
    %250 = vector.load %arg4[%249, %c0_90, %c0_91] : memref<3x8x128xf32, #tpu.memory_space<vmem>>, vector<1x8x128xf32>
    %251 = vector.shape_cast %250 : vector<1x8x128xf32> to vector<8x128xf32>
    %252 = vector.shape_cast %217 : vector<8x128xf32> to vector<1x8x128xf32>
    tpu.vector_store %arg4[%249, %c0_90, %c0_91], %252 {strides = array<i32>} : memref<3x8x128xf32, #tpu.memory_space<vmem>>, vector<1x8x128xf32>,
    %253 = arith.index_cast %174 : i32 to index
    %c0_92 = arith.constant 0 : index
    %c0_93 = arith.constant 0 : index
    %254 = vector.load %arg5[%253, %c0_92, %c0_93] : memref<3x8x128xf32, #tpu.memory_space<vmem>>, vector<1x8x128xf32>
    %255 = vector.shape_cast %254 : vector<1x8x128xf32> to vector<8x128xf32>
    %256 = vector.shape_cast %248 : vector<8x128xf32> to vector<1x8x128xf32>
    tpu.vector_store %arg5[%253, %c0_92, %c0_93], %256 {strides = array<i32>} : memref<3x8x128xf32, #tpu.memory_space<vmem>>, vector<1x8x128xf32>,
    %c3_i32 = arith.constant 3 : i32
    %c0_94 = arith.constant 0 : index
    %c0_95 = arith.constant 0 : index
    %257 = vector.load %arg6[%c0_94, %c0_95] : memref<8x128xf32, #tpu.memory_space<vmem>>, vector<8x128xf32>
    tpu.vector_store %arg6[%c0_94, %c0_95], %217 {strides = array<i32>} : memref<8x128xf32, #tpu.memory_space<vmem>>, vector<8x128xf32>,
    %c0_96 = arith.constant 0 : index
    %c0_97 = arith.constant 0 : index
    %258 = vector.load %arg7[%c0_96, %c0_97] : memref<8x128xf32, #tpu.memory_space<vmem>>, vector<8x128xf32>
    tpu.vector_store %arg7[%c0_96, %c0_97], %215 {strides = array<i32>} : memref<8x128xf32, #tpu.memory_space<vmem>>, vector<8x128xf32>,
    %c0_98 = arith.constant 0 : index
    %c0_99 = arith.constant 0 : index
    %259 = vector.load %arg8[%c0_98, %c0_99] : memref<8x128xf32, #tpu.memory_space<vmem>>, vector<8x128xf32>
    tpu.vector_store %arg8[%c0_98, %c0_99], %248 {strides = array<i32>} : memref<8x128xf32, #tpu.memory_space<vmem>>, vector<8x128xf32>,
    %c0_100 = arith.constant 0 : index
    %c0_101 = arith.constant 0 : index
    %260 = vector.load %arg9[%c0_100, %c0_101] : memref<8x128xf32, #tpu.memory_space<vmem>>, vector<8x128xf32>
    tpu.vector_store %arg9[%c0_100, %c0_101], %246 {strides = array<i32>} : memref<8x128xf32, #tpu.memory_space<vmem>>, vector<8x128xf32>,
    return
  }
  func.func @transform_0(%arg0: i32) -> (i32, i32, i32) {
    %c0_i32 = arith.constant 0 : i32
    %c0_i32_0 = arith.constant 0 : i32
    %c0_i32_1 = arith.constant 0 : i32
    return %arg0, %c0_i32, %c0_i32_0 : i32, i32, i32
  }
  func.func @transform_1(%arg0: i32) -> (i32, i32, i32) {
    %c2_i32 = arith.constant 2 : i32
    %0 = arith.subi %c2_i32, %arg0 : i32
    %c0_i32 = arith.constant 0 : i32
    %c0_i32_0 = arith.constant 0 : i32
    %c0_i32_1 = arith.constant 0 : i32
    return %0, %c0_i32, %c0_i32_0 : i32, i32, i32
  }
  func.func @transform_2(%arg0: i32) -> (i32, i32) {
    %c0_i32 = arith.constant 0 : i32
    %c0_i32_0 = arith.constant 0 : i32
    %c0_i32_1 = arith.constant 0 : i32
    return %c0_i32, %c0_i32_0 : i32, i32
  }
  func.func @transform_3(%arg0: i32) -> (i32, i32, i32) {
    %c0_i32 = arith.constant 0 : i32
    %c0_i32_0 = arith.constant 0 : i32
    %c0_i32_1 = arith.constant 0 : i32
    return %arg0, %c0_i32, %c0_i32_0 : i32, i32, i32
  }
  func.func @transform_4(%arg0: i32) -> (i32, i32, i32) {
    %c2_i32 = arith.constant 2 : i32
    %0 = arith.subi %c2_i32, %arg0 : i32
    %c0_i32 = arith.constant 0 : i32
    %c0_i32_0 = arith.constant 0 : i32
    %c0_i32_1 = arith.constant 0 : i32
    return %0, %c0_i32, %c0_i32_0 : i32, i32, i32
  }
}

</mosaic_0001>

<llo_original>
// kernel: tpu_custom_call.1
$region0: #{tpu_custom_call.1}
  #allocation0 [shape = 'u32[]', space=smem, size = 0x4, offset = 0x4, fixed_abs, tag = 'smem constant byte address 0x4 - core index']
  #allocation1 [shape = 'u32[72,128]{1,0:T(1,128)}', space=vmem, size = 0x9000, scoped, tag = 'internal scratch']
  #allocation2 [shape = 'f32[8,128]{1,0:T(8,128)}', space=vmem, size = 0x1000, scoped, tag = 'scratch operand']
  #allocation3 [shape = 'f32[8,128]{1,0:T(8,128)}', space=vmem, size = 0x1000, scoped, tag = 'scratch operand']
  #allocation4 [shape = 'f32[8,128]{1,0:T(8,128)}', space=vmem, size = 0x1000, scoped, tag = 'scratch operand']
  #allocation5 [shape = 'f32[8,128]{1,0:T(8,128)}', space=vmem, size = 0x1000, scoped, tag = 'scratch operand']
  %s0 = inlined_call_operand.hbm [shape: f32[9,8,512], index: 0, kind: input, shape index: {}]
  %s1 = inlined_call_operand.hbm [shape: f32[9,8,512], index: 1, kind: input, shape index: {}]
  %s2 = inlined_call_operand.hbm [shape: f32[256,1024], index: 2, kind: input, shape index: {}]
  %s3 = inlined_call_operand.hbm [shape: f32[9,8,128], index: 3, kind: output, shape index: {0}]
  %s4 = inlined_call_operand.hbm [shape: f32[9,8,128], index: 4, kind: output, shape index: {1}]
  %5 = xla_tuple %s3, %s4
  %s6 = sld [smem:[#allocation0]]
  $region69: #{tpu_custom_call.1} parent=0
    _
  %s8 = ssub.s32 1, %s6
  %s9 = scalar_select 0, %s8, %s6
  $region1: #{tpu_custom_call.1} parent=0
    #allocation6 [shape = 'u8[98304]{0}', space=vmem, size = 0x18000, scoped, tag = 'input window, operand 0']
    #allocation7 [shape = 's32[2]{0}', space=sflag, size = 0x8, scoped, tag = 'scoped memory for tpu_custom_call.1']
    #allocation8 [shape = 's32[2]{0}', space=sflag, size = 0x8, scoped, tag = 'scoped memory for tpu_custom_call.1']
    #allocation9 [shape = 'u8[98304]{0}', space=vmem, size = 0x18000, scoped, tag = 'input window, operand 1']
    #allocation10 [shape = 's32[2]{0}', space=sflag, size = 0x8, scoped, tag = 'scoped memory for tpu_custom_call.1']
    #allocation11 [shape = 'u8[1048576]{0}', space=vmem, size = 0x100000, scoped, tag = 'input window, operand 2, single buffered']
    #allocation12 [shape = 'u8[24576]{0}', space=vmem, size = 0x6000, scoped, tag = 'output window, operand 0']
    #allocation13 [shape = 'u8[24576]{0}', space=vmem, size = 0x6000, scoped, tag = 'output window, operand 1']
    #allocation14 [shape = 's32[2]{0}', space=sflag, size = 0x8, scoped, tag = 'scoped memory for tpu_custom_call.1']
    %10 = vsyncpa [#allocation7], 0
    %s11 = scalar_lea.sflag [#allocation7], 1
    %12 = vsyncpa %s11, 0
    %13 = vsyncpa [#allocation10], 0
    %s14 = scalar_lea.sflag [#allocation10], 1
    %15 = vsyncpa %s14, 0
    %16 = vsyncpa [#allocation8], 0
    %s17 = scalar_lea.sflag [#allocation8], 1
    %18 = vsyncpa %s17, 0
    %19 = vsyncpa [#allocation14], 0
    %s20 = scalar_lea.sflag [#allocation14], 1
    %21 = vsyncpa %s20, 0
    loop: start=0, step=1, limit=5
    $region2: #{tpu_custom_call.1} parent=1 // loop_pre_header
      _
    $region3: #{tpu_custom_call.1} parent=1 // loop_header
      %s23 = sphi 0, %s27
      %p24 = scmp.ge.s32.totalorder %s23, 5
      %s33 = sphi 0, %s35
      %s36 = sphi 0, %s33
      %s37 = sphi 0, %s36
      %s53 = sphi 0, %s37
      %s61 = sphi 0, %s63
      %s64 = sphi 0, %s61
      %s65 = sphi 0, %s64
      %s81 = sphi 0, %s65
      %s85 = sphi 0, %s85
      %s87 = sphi 0, %s85
      %s88 = sphi 0, %s87
      %s102 = sphi 0, %s88
      %s108 = sphi 0, %s110
      %s111 = sphi 0, %s108
      %s112 = sphi 0, %s111
      %s128 = sphi 0, %s112
      %s136 = sphi 0, %s138
      %s139 = sphi 0, %s136
      %s140 = sphi 0, %s139
      %s156 = sphi 0, %s140
    $region4: #{tpu_custom_call.1} parent=1 // loop_header_branch
      %26 = sbr.rel (%p24) target = $region8
    $region5: #{tpu_custom_call.1} parent=1 // loop_body
      %s28 = ssub.s32 %s23, 1
      %s29 = ssub.s32 %s23, 2
      %s30 = sadd.s32 %s23, 1
      %s31 = ssub.s32 %s23, %s30
      %p32 = scmp.eq.s32.totalorder %s31, 0
      %s34 = sadd.s32 %s33, 1
      %s35 = scalar_select %p32, %s33, %s34
      %p38 = pneg %p32
      %p39 = scmp.eq.s32.totalorder %s23, 2
      %p40 = por %p38, %p39
      %p41 = scmp.ne.s32.totalorder %s33, %s36
      %p42 = scmp.eq.s32.totalorder %s23, 0
      %p43 = por %p41, %p42
      %p44 = scmp.ne.s32.totalorder %s33, %s36
      %p45 = scmp.eq.s32.totalorder %s28, 2
      %p46 = por %p44, %p45
      %p47 = scmp.ne.s32.totalorder %s36, %s37
      %p48 = scmp.eq.s32.totalorder %s28, 0
      %p49 = por %p47, %p48
      %p50 = scmp.ne.s32.totalorder %s36, %s37
      %p51 = scmp.eq.s32.totalorder %s29, 2
      %p52 = por %p50, %p51
      %p54 = scmp.ne.s32.totalorder %s37, %s53
      %p55 = scmp.eq.s32.totalorder %s29, 0
      %p56 = por %p54, %p55
      %s57 = ssub.s32 2, %s23
      %s58 = ssub.s32 2, %s30
      %s59 = ssub.s32 %s57, %s58
      %p60 = scmp.eq.s32.totalorder %s59, 0
      %s62 = sadd.s32 %s61, 1
      %s63 = scalar_select %p60, %s61, %s62
      %p66 = pneg %p60
      %p67 = scmp.eq.s32.totalorder %s23, 2
      %p68 = por %p66, %p67
      %p69 = scmp.ne.s32.totalorder %s61, %s64
      %p70 = scmp.eq.s32.totalorder %s23, 0
      %p71 = por %p69, %p70
      %p72 = scmp.ne.s32.totalorder %s61, %s64
      %p73 = scmp.eq.s32.totalorder %s28, 2
      %p74 = por %p72, %p73
      %p75 = scmp.ne.s32.totalorder %s64, %s65
      %p76 = scmp.eq.s32.totalorder %s28, 0
      %p77 = por %p75, %p76
      %p78 = scmp.ne.s32.totalorder %s64, %s65
      %p79 = scmp.eq.s32.totalorder %s29, 2
      %p80 = por %p78, %p79
      %p82 = scmp.ne.s32.totalorder %s65, %s81
      %p83 = scmp.eq.s32.totalorder %s29, 0
      %p84 = por %p82, %p83
      %s86 = sadd.s32 %s85, 1
      %p89 = scmp.eq.s32.totalorder %s23, 2
      %p90 = scmp.ne.s32.totalorder %s85, %s87
      %p91 = scmp.eq.s32.totalorder %s23, 0
      %p92 = por %p90, %p91
      %p93 = scmp.ne.s32.totalorder %s85, %s87
      %p94 = scmp.eq.s32.totalorder %s28, 2
      %p95 = por %p93, %p94
      %p96 = scmp.ne.s32.totalorder %s87, %s88
      %p97 = scmp.eq.s32.totalorder %s28, 0
      %p98 = por %p96, %p97
      %p99 = scmp.ne.s32.totalorder %s87, %s88
      %p100 = scmp.eq.s32.totalorder %s29, 2
      %p101 = por %p99, %p100
      %p103 = scmp.ne.s32.totalorder %s88, %s102
      %p104 = scmp.eq.s32.totalorder %s29, 0
      %p105 = por %p103, %p104
      %s106 = ssub.s32 %s23, %s30
      %p107 = scmp.eq.s32.totalorder %s106, 0
      %s109 = sadd.s32 %s108, 1
      %s110 = scalar_select %p107, %s108, %s109
      %p113 = pneg %p107
      %p114 = scmp.eq.s32.totalorder %s23, 2
      %p115 = por %p113, %p114
      %p116 = scmp.ne.s32.totalorder %s108, %s111
      %p117 = scmp.eq.s32.totalorder %s23, 0
      %p118 = por %p116, %p117
      %p119 = scmp.ne.s32.totalorder %s108, %s111
      %p120 = scmp.eq.s32.totalorder %s28, 2
      %p121 = por %p119, %p120
      %p122 = scmp.ne.s32.totalorder %s111, %s112
      %p123 = scmp.eq.s32.totalorder %s28, 0
      %p124 = por %p122, %p123
      %p125 = scmp.ne.s32.totalorder %s111, %s112
      %p126 = scmp.eq.s32.totalorder %s29, 2
      %p127 = por %p125, %p126
      %p129 = scmp.ne.s32.totalorder %s112, %s128
      %p130 = scmp.eq.s32.totalorder %s29, 0
      %p131 = por %p129, %p130
      %s132 = ssub.s32 2, %s23
      %s133 = ssub.s32 2, %s30
      %s134 = ssub.s32 %s132, %s133
      %p135 = scmp.eq.s32.totalorder %s134, 0
      %s137 = sadd.s32 %s136, 1
      %s138 = scalar_select %p135, %s136, %s137
      %p141 = pneg %p135
      %p142 = scmp.eq.s32.totalorder %s23, 2
      %p143 = por %p141, %p142
      %p144 = scmp.ne.s32.totalorder %s136, %s139
      %p145 = scmp.eq.s32.totalorder %s23, 0
      %p146 = por %p144, %p145
      %p147 = scmp.ne.s32.totalorder %s136, %s139
      %p148 = scmp.eq.s32.totalorder %s28, 2
      %p149 = por %p147, %p148
      %p150 = scmp.ne.s32.totalorder %s139, %s140
      %p151 = scmp.eq.s32.totalorder %s28, 0
      %p152 = por %p150, %p151
      %p153 = scmp.ne.s32.totalorder %s139, %s140
      %p154 = scmp.eq.s32.totalorder %s29, 2
      %p155 = por %p153, %p154
      %p157 = scmp.ne.s32.totalorder %s140, %s156
      %p158 = scmp.eq.s32.totalorder %s29, 0
      %p159 = por %p157, %p158
      %p160 = scmp.le.s32.totalorder 1, %s23
      %p161 = scmp.lt.s32.totalorder %s23, 4
      %p162 = pnand %p160, %p161
      %p163 = pneg %p162
      // Predicated region
      $region9: #{tpu_custom_call.1} parent=5 // pred_check
        _
      $region10: #{tpu_custom_call.1} parent=5 // pred_check_branch
        %165 = sbr.rel (%p162) target = $region12
      $region11: #{tpu_custom_call.1} parent=5 // pred_region
        %s166 = ssub.s32 %s23, 1
        // Predicated region
        $region13: #{tpu_custom_call.1} parent=11 // pred_check
          %p167 = pneg %p98
        $region14: #{tpu_custom_call.1} parent=11 // pred_check_branch
          %169 = sbr.rel (%p167) target = $region16
        $region15: #{tpu_custom_call.1} parent=11 // pred_region
          %171 = vsyncadd [#allocation10], 0
          %s172 = sshll.u32 %s2, 4
          %s173 = int_to_ptr.hbm [resolvable:$true] %s172
          %s174 = sshll.u32 [#allocation11], 4
          %s175 = int_to_ptr.vmem [resolvable:$true] %s174
          %180 = dma.hbm_to_vmem [thread:$0]  %s173, 32768, %s175, [#allocation10], 1024, 1024, 64
        $region16: #{tpu_custom_call.1} parent=11 // pred_fallthru
          _
      $region12: #{tpu_custom_call.1} parent=5 // pred_fallthru
        _
      %p181 = scmp.lt.s32.totalorder %s23, 3
      // Predicated region
      $region17: #{tpu_custom_call.1} parent=5 // pred_check
        %p182 = pneg %p181
      $region18: #{tpu_custom_call.1} parent=5 // pred_check_branch
        %184 = sbr.rel (%p182) target = $region20
      $region19: #{tpu_custom_call.1} parent=5 // pred_region
        // Predicated region
        $region21: #{tpu_custom_call.1} parent=19 // pred_check
          %p185 = pneg %p43
        $region22: #{tpu_custom_call.1} parent=19 // pred_check_branch
          %187 = sbr.rel (%p185) target = $region24
        $region23: #{tpu_custom_call.1} parent=19 // pred_region
          %s188 = sand.u32 %s33, 1
          %s189 = scalar_lea.sflag [#allocation7], %s188
          %s190 = sand.u32 %s33, 1
          %s191 = smul.addr %s190, 96
          %s192 = scalar_lea.vmem [#allocation6], %s191
          %s193 = smul.u32 3, %s23
          %195 = vsyncadd %s189, 0
          %s196 = smul.addr %s193, 4
          %s197 = smul.addr %s196, 8
          %s198 = scalar_lea.hbm %s0, %s197
          %s199 = sshll.u32 %s198, 4
          %s200 = int_to_ptr.hbm [resolvable:$true] %s199
          %s201 = sshll.u32 %s192, 4
          %s202 = int_to_ptr.vmem [resolvable:$true] %s201
          %207 = dma.hbm_to_vmem [thread:$0]  %s200, 1536, %s202, %s189, 512, 512, 32
        $region24: #{tpu_custom_call.1} parent=19 // pred_fallthru
          _
        // Predicated region
        $region25: #{tpu_custom_call.1} parent=19 // pred_check
          %p208 = pneg %p71
        $region26: #{tpu_custom_call.1} parent=19 // pred_check_branch
          %210 = sbr.rel (%p208) target = $region28
        $region27: #{tpu_custom_call.1} parent=19 // pred_region
          %s211 = sand.u32 %s23, 1
          %s212 = scalar_lea.sflag [#allocation10], %s211
          %s213 = sand.u32 %s61, 1
          %s214 = smul.addr %s213, 96
          %s215 = scalar_lea.vmem [#allocation9], %s214
          %s216 = ssub.s32 2, %s23
          %s217 = smul.u32 3, %s216
          %219 = vsyncadd %s212, 0
          %s220 = smul.addr %s217, 4
          %s221 = smul.addr %s220, 8
          %s222 = scalar_lea.hbm %s1, %s221
          %s223 = sshll.u32 %s222, 4
          %s224 = int_to_ptr.hbm [resolvable:$true] %s223
          %s225 = sshll.u32 %s215, 4
          %s226 = int_to_ptr.vmem [resolvable:$true] %s225
          %231 = dma.hbm_to_vmem [thread:$0]  %s224, 1536, %s226, %s212, 512, 512, 32
        $region28: #{tpu_custom_call.1} parent=19 // pred_fallthru
          _
      $region20: #{tpu_custom_call.1} parent=5 // pred_fallthru
        _
      %p232 = scmp.le.s32.totalorder 1, %s23
      %p233 = scmp.lt.s32.totalorder %s23, 4
      %p234 = pnand %p232, %p233
      %p235 = pneg %p234
      // Predicated region
      $region29: #{tpu_custom_call.1} parent=5 // pred_check
        _
      $region30: #{tpu_custom_call.1} parent=5 // pred_check_branch
        %237 = sbr.rel (%p234) target = $region32
      $region31: #{tpu_custom_call.1} parent=5 // pred_region
        %s238 = ssub.s32 %s23, 1
        %s239 = sand.u32 %s36, 1
        %s240 = scalar_lea.sflag [#allocation7], %s239
        %s241 = sand.u32 %s36, 1
        %s242 = smul.addr %s241, 96
        %s243 = scalar_lea.vmem [#allocation6], %s242
        // Predicated region
        $region33: #{tpu_custom_call.1} parent=31 // pred_check
          %p244 = pneg %p49
        $region34: #{tpu_custom_call.1} parent=31 // pred_check_branch
          %246 = sbr.rel (%p244) target = $region36
        $region35: #{tpu_custom_call.1} parent=31 // pred_region
          %248 = dma.done %s240, 1536
        $region36: #{tpu_custom_call.1} parent=31 // pred_fallthru
          _
        %s249 = sand.u32 %s28, 1
        %s250 = scalar_lea.sflag [#allocation10], %s249
        %s251 = sand.u32 %s64, 1
        %s252 = smul.addr %s251, 96
        %s253 = scalar_lea.vmem [#allocation9], %s252
        // Predicated region
        $region37: #{tpu_custom_call.1} parent=31 // pred_check
          %p254 = pneg %p77
        $region38: #{tpu_custom_call.1} parent=31 // pred_check_branch
          %256 = sbr.rel (%p254) target = $region40
        $region39: #{tpu_custom_call.1} parent=31 // pred_region
          %258 = dma.done %s250, 1536
        $region40: #{tpu_custom_call.1} parent=31 // pred_fallthru
          _
        // Predicated region
        $region41: #{tpu_custom_call.1} parent=31 // pred_check
          %p259 = pneg %p98
        $region42: #{tpu_custom_call.1} parent=31 // pred_check_branch
          %261 = sbr.rel (%p259) target = $region44
        $region43: #{tpu_custom_call.1} parent=31 // pred_region
          %263 = dma.done [#allocation10], 32768
        $region44: #{tpu_custom_call.1} parent=31 // pred_fallthru
          _
        %s264 = sand.u32 %s36, 1
        %s265 = scalar_lea.sflag [#allocation7], %s264
        %s266 = sand.u32 %s36, 1
        %s267 = smul.addr %s266, 96
        %s268 = scalar_lea.vmem [#allocation6], %s267
        %p269 = pneg %p49
        %p270 = pneg %p46
        %s271 = sand.u32 %s28, 1
        %s272 = scalar_lea.sflag [#allocation10], %s271
        %s273 = sand.u32 %s64, 1
        %s274 = smul.addr %s273, 96
        %s275 = scalar_lea.vmem [#allocation9], %s274
        %p276 = pneg %p77
        %p277 = pneg %p74
        %p278 = pneg %p98
        %p279 = pneg %p95
        %p280 = pneg %p124
        %p281 = pneg %p121
        %s282 = sand.u32 %s111, 1
        %s283 = scalar_lea.sflag [#allocation8], %s282
        %s284 = sand.u32 %s111, 1
        %s285 = smul.addr %s284, 24
        %s286 = scalar_lea.vmem [#allocation12], %s285
        %p287 = pneg %p152
        %p288 = pneg %p149
        %s289 = sand.u32 %s139, 1
        %s290 = scalar_lea.sflag [#allocation14], %s289
        %s291 = sand.u32 %s139, 1
        %s292 = smul.addr %s291, 24
        %s293 = scalar_lea.vmem [#allocation13], %s292
        %s294 = smul.u32 3, %s28
        %s295 = ssub.s32 2, %s28
        %s296 = smul.u32 3, %s295
        %s297 = smul.u32 3, %s28
        %s298 = ssub.s32 2, %s28
        %s299 = smul.u32 3, %s298
        %p300 = scmp.eq.s32.totalorder %s28, 0
        // Predicated region
        $region45: #{tpu_custom_call.1} parent=31 // pred_check
          %p301 = pneg %p300
        $region46: #{tpu_custom_call.1} parent=31 // pred_check_branch
          %303 = sbr.rel (%p301) target = $region48
        $region47: #{tpu_custom_call.1} parent=31 // pred_region
          %304 = vst [vmem:[#allocation2] sm:$0xff] 0.0
          %305 = vst [vmem:[#allocation3] sm:$0xff] 0.0
          %306 = vst [vmem:[#allocation4] sm:$0xff] 0.0
          %307 = vst [vmem:[#allocation5] sm:$0xff] 0.0
        $region48: #{tpu_custom_call.1} parent=31 // pred_fallthru
          _
        %v308 = vld [vmem:[#allocation11] sm:$0xff]
        %v309 = vld [vmem:[#allocation11 + $0x8] sm:$0xff]
        %v310 = vld [vmem:[#allocation11 + $0x10] sm:$0xff]
        %v311 = vld [vmem:[#allocation11 + $0x18] sm:$0xff]
        %v312 = vld [vmem:[#allocation11 + $0x20] sm:$0xff]
        %v313 = vld [vmem:[#allocation11 + $0x28] sm:$0xff]
        %v314 = vld [vmem:[#allocation11 + $0x30] sm:$0xff]
        %v315 = vld [vmem:[#allocation11 + $0x38] sm:$0xff]
        %v316 = vld [vmem:[#allocation11 + $0x40] sm:$0xff]
        %v317 = vld [vmem:[#allocation11 + $0x48] sm:$0xff]
        %v318 = vld [vmem:[#allocation11 + $0x50] sm:$0xff]
        %v319 = vld [vmem:[#allocation11 + $0x58] sm:$0xff]
        %v320 = vld [vmem:[#allocation11 + $0x60] sm:$0xff]
        %v321 = vld [vmem:[#allocation11 + $0x68] sm:$0xff]
        %v322 = vld [vmem:[#allocation11 + $0x70] sm:$0xff]
        %v323 = vld [vmem:[#allocation11 + $0x78] sm:$0xff]
        %v324 = vld [vmem:[#allocation11 + $0x80] sm:$0xff]
        %v325 = vld [vmem:[#allocation11 + $0x88] sm:$0xff]
        %v326 = vld [vmem:[#allocation11 + $0x90] sm:$0xff]
        %v327 = vld [vmem:[#allocation11 + $0x98] sm:$0xff]
        %v328 = vld [vmem:[#allocation11 + $0xa0] sm:$0xff]
        %v329 = vld [vmem:[#allocation11 + $0xa8] sm:$0xff]
        %v330 = vld [vmem:[#allocation11 + $0xb0] sm:$0xff]
        %v331 = vld [vmem:[#allocation11 + $0xb8] sm:$0xff]
        %v332 = vld [vmem:[#allocation11 + $0xc0] sm:$0xff]
        %v333 = vld [vmem:[#allocation11 + $0xc8] sm:$0xff]
        %v334 = vld [vmem:[#allocation11 + $0xd0] sm:$0xff]
        %v335 = vld [vmem:[#allocation11 + $0xd8] sm:$0xff]
        %v336 = vld [vmem:[#allocation11 + $0xe0] sm:$0xff]
        %v337 = vld [vmem:[#allocation11 + $0xe8] sm:$0xff]
        %v338 = vld [vmem:[#allocation11 + $0xf0] sm:$0xff]
        %v339 = vld [vmem:[#allocation11 + $0xf8] sm:$0xff]
        %v340 = vld [vmem:[#allocation11 + $0x100] sm:$0xff]
        %v341 = vld [vmem:[#allocation11 + $0x108] sm:$0xff]
        %v342 = vld [vmem:[#allocation11 + $0x110] sm:$0xff]
        %v343 = vld [vmem:[#allocation11 + $0x118] sm:$0xff]
        %v344 = vld [vmem:[#allocation11 + $0x120] sm:$0xff]
        %v345 = vld [vmem:[#allocation11 + $0x128] sm:$0xff]
        %v346 = vld [vmem:[#allocation11 + $0x130] sm:$0xff]
        %v347 = vld [vmem:[#allocation11 + $0x138] sm:$0xff]
        %v348 = vld [vmem:[#allocation11 + $0x140] sm:$0xff]
        %v349 = vld [vmem:[#allocation11 + $0x148] sm:$0xff]
        %v350 = vld [vmem:[#allocation11 + $0x150] sm:$0xff]
        %v351 = vld [vmem:[#allocation11 + $0x158] sm:$0xff]
        %v352 = vld [vmem:[#allocation11 + $0x160] sm:$0xff]
        %v353 = vld [vmem:[#allocation11 + $0x168] sm:$0xff]
        %v354 = vld [vmem:[#allocation11 + $0x170] sm:$0xff]
        %v355 = vld [vmem:[#allocation11 + $0x178] sm:$0xff]
        %v356 = vld [vmem:[#allocation11 + $0x180] sm:$0xff]
        %v357 = vld [vmem:[#allocation11 + $0x188] sm:$0xff]
        %v358 = vld [vmem:[#allocation11 + $0x190] sm:$0xff]
        %v359 = vld [vmem:[#allocation11 + $0x198] sm:$0xff]
        %v360 = vld [vmem:[#allocation11 + $0x1a0] sm:$0xff]
        %v361 = vld [vmem:[#allocation11 + $0x1a8] sm:$0xff]
        %v362 = vld [vmem:[#allocation11 + $0x1b0] sm:$0xff]
        %v363 = vld [vmem:[#allocation11 + $0x1b8] sm:$0xff]
        %v364 = vld [vmem:[#allocation11 + $0x1c0] sm:$0xff]
        %v365 = vld [vmem:[#allocation11 + $0x1c8] sm:$0xff]
        %v366 = vld [vmem:[#allocation11 + $0x1d0] sm:$0xff]
        %v367 = vld [vmem:[#allocation11 + $0x1d8] sm:$0xff]
        %v368 = vld [vmem:[#allocation11 + $0x1e0] sm:$0xff]
        %v369 = vld [vmem:[#allocation11 + $0x1e8] sm:$0xff]
        %v370 = vld [vmem:[#allocation11 + $0x1f0] sm:$0xff]
        %v371 = vld [vmem:[#allocation11 + $0x1f8] sm:$0xff]
        %v372 = vld [vmem:[#allocation11 + $0x200] sm:$0xff]
        %v373 = vld [vmem:[#allocation11 + $0x208] sm:$0xff]
        %v374 = vld [vmem:[#allocation11 + $0x210] sm:$0xff]
        %v375 = vld [vmem:[#allocation11 + $0x218] sm:$0xff]
        %v376 = vld [vmem:[#allocation11 + $0x220] sm:$0xff]
        %v377 = vld [vmem:[#allocation11 + $0x228] sm:$0xff]
        %v378 = vld [vmem:[#allocation11 + $0x230] sm:$0xff]
        %v379 = vld [vmem:[#allocation11 + $0x238] sm:$0xff]
        %v380 = vld [vmem:[#allocation11 + $0x240] sm:$0xff]
        %v381 = vld [vmem:[#allocation11 + $0x248] sm:$0xff]
        %v382 = vld [vmem:[#allocation11 + $0x250] sm:$0xff]
        %v383 = vld [vmem:[#allocation11 + $0x258] sm:$0xff]
        %v384 = vld [vmem:[#allocation11 + $0x260] sm:$0xff]
        %v385 = vld [vmem:[#allocation11 + $0x268] sm:$0xff]
        %v386 = vld [vmem:[#allocation11 + $0x270] sm:$0xff]
        %v387 = vld [vmem:[#allocation11 + $0x278] sm:$0xff]
        %v388 = vld [vmem:[#allocation11 + $0x280] sm:$0xff]
        %v389 = vld [vmem:[#allocation11 + $0x288] sm:$0xff]
        %v390 = vld [vmem:[#allocation11 + $0x290] sm:$0xff]
        %v391 = vld [vmem:[#allocation11 + $0x298] sm:$0xff]
        %v392 = vld [vmem:[#allocation11 + $0x2a0] sm:$0xff]
        %v393 = vld [vmem:[#allocation11 + $0x2a8] sm:$0xff]
        %v394 = vld [vmem:[#allocation11 + $0x2b0] sm:$0xff]
        %v395 = vld [vmem:[#allocation11 + $0x2b8] sm:$0xff]
        %v396 = vld [vmem:[#allocation11 + $0x2c0] sm:$0xff]
        %v397 = vld [vmem:[#allocation11 + $0x2c8] sm:$0xff]
        %v398 = vld [vmem:[#allocation11 + $0x2d0] sm:$0xff]
        %v399 = vld [vmem:[#allocation11 + $0x2d8] sm:$0xff]
        %v400 = vld [vmem:[#allocation11 + $0x2e0] sm:$0xff]
        %v401 = vld [vmem:[#allocation11 + $0x2e8] sm:$0xff]
        %v402 = vld [vmem:[#allocation11 + $0x2f0] sm:$0xff]
        %v403 = vld [vmem:[#allocation11 + $0x2f8] sm:$0xff]
        %v404 = vld [vmem:[#allocation11 + $0x300] sm:$0xff]
        %v405 = vld [vmem:[#allocation11 + $0x308] sm:$0xff]
        %v406 = vld [vmem:[#allocation11 + $0x310] sm:$0xff]
        %v407 = vld [vmem:[#allocation11 + $0x318] sm:$0xff]
        %v408 = vld [vmem:[#allocation11 + $0x320] sm:$0xff]
        %v409 = vld [vmem:[#allocation11 + $0x328] sm:$0xff]
        %v410 = vld [vmem:[#allocation11 + $0x330] sm:$0xff]
        %v411 = vld [vmem:[#allocation11 + $0x338] sm:$0xff]
        %v412 = vld [vmem:[#allocation11 + $0x340] sm:$0xff]
        %v413 = vld [vmem:[#allocation11 + $0x348] sm:$0xff]
        %v414 = vld [vmem:[#allocation11 + $0x350] sm:$0xff]
        %v415 = vld [vmem:[#allocation11 + $0x358] sm:$0xff]
        %v416 = vld [vmem:[#allocation11 + $0x360] sm:$0xff]
        %v417 = vld [vmem:[#allocation11 + $0x368] sm:$0xff]
        %v418 = vld [vmem:[#allocation11 + $0x370] sm:$0xff]
        %v419 = vld [vmem:[#allocation11 + $0x378] sm:$0xff]
        %v420 = vld [vmem:[#allocation11 + $0x380] sm:$0xff]
        %v421 = vld [vmem:[#allocation11 + $0x388] sm:$0xff]
        %v422 = vld [vmem:[#allocation11 + $0x390] sm:$0xff]
        %v423 = vld [vmem:[#allocation11 + $0x398] sm:$0xff]
        %v424 = vld [vmem:[#allocation11 + $0x3a0] sm:$0xff]
        %v425 = vld [vmem:[#allocation11 + $0x3a8] sm:$0xff]
        %v426 = vld [vmem:[#allocation11 + $0x3b0] sm:$0xff]
        %v427 = vld [vmem:[#allocation11 + $0x3b8] sm:$0xff]
        %v428 = vld [vmem:[#allocation11 + $0x3c0] sm:$0xff]
        %v429 = vld [vmem:[#allocation11 + $0x3c8] sm:$0xff]
        %v430 = vld [vmem:[#allocation11 + $0x3d0] sm:$0xff]
        %v431 = vld [vmem:[#allocation11 + $0x3d8] sm:$0xff]
        %v432 = vld [vmem:[#allocation11 + $0x3e0] sm:$0xff]
        %v433 = vld [vmem:[#allocation11 + $0x3e8] sm:$0xff]
        %v434 = vld [vmem:[#allocation11 + $0x3f0] sm:$0xff]
        %v435 = vld [vmem:[#allocation11 + $0x3f8] sm:$0xff]
        %v436 = vld [vmem:[#allocation11 + $0x400] sm:$0xff]
        %v437 = vld [vmem:[#allocation11 + $0x408] sm:$0xff]
        %v438 = vld [vmem:[#allocation11 + $0x410] sm:$0xff]
        %v439 = vld [vmem:[#allocation11 + $0x418] sm:$0xff]
        %v440 = vld [vmem:[#allocation11 + $0x420] sm:$0xff]
        %v441 = vld [vmem:[#allocation11 + $0x428] sm:$0xff]
        %v442 = vld [vmem:[#allocation11 + $0x430] sm:$0xff]
        %v443 = vld [vmem:[#allocation11 + $0x438] sm:$0xff]
        %v444 = vld [vmem:[#allocation11 + $0x440] sm:$0xff]
        %v445 = vld [vmem:[#allocation11 + $0x448] sm:$0xff]
        %v446 = vld [vmem:[#allocation11 + $0x450] sm:$0xff]
        %v447 = vld [vmem:[#allocation11 + $0x458] sm:$0xff]
        %v448 = vld [vmem:[#allocation11 + $0x460] sm:$0xff]
        %v449 = vld [vmem:[#allocation11 + $0x468] sm:$0xff]
        %v450 = vld [vmem:[#allocation11 + $0x470] sm:$0xff]
        %v451 = vld [vmem:[#allocation11 + $0x478] sm:$0xff]
        %v452 = vld [vmem:[#allocation11 + $0x480] sm:$0xff]
        %v453 = vld [vmem:[#allocation11 + $0x488] sm:$0xff]
        %v454 = vld [vmem:[#allocation11 + $0x490] sm:$0xff]
        %v455 = vld [vmem:[#allocation11 + $0x498] sm:$0xff]
        %v456 = vld [vmem:[#allocation11 + $0x4a0] sm:$0xff]
        %v457 = vld [vmem:[#allocation11 + $0x4a8] sm:$0xff]
        %v458 = vld [vmem:[#allocation11 + $0x4b0] sm:$0xff]
        %v459 = vld [vmem:[#allocation11 + $0x4b8] sm:$0xff]
        %v460 = vld [vmem:[#allocation11 + $0x4c0] sm:$0xff]
        %v461 = vld [vmem:[#allocation11 + $0x4c8] sm:$0xff]
        %v462 = vld [vmem:[#allocation11 + $0x4d0] sm:$0xff]
        %v463 = vld [vmem:[#allocation11 + $0x4d8] sm:$0xff]
        %v464 = vld [vmem:[#allocation11 + $0x4e0] sm:$0xff]
        %v465 = vld [vmem:[#allocation11 + $0x4e8] sm:$0xff]
        %v466 = vld [vmem:[#allocation11 + $0x4f0] sm:$0xff]
        %v467 = vld [vmem:[#allocation11 + $0x4f8] sm:$0xff]
        %v468 = vld [vmem:[#allocation11 + $0x500] sm:$0xff]
        %v469 = vld [vmem:[#allocation11 + $0x508] sm:$0xff]
        %v470 = vld [vmem:[#allocation11 + $0x510] sm:$0xff]
        %v471 = vld [vmem:[#allocation11 + $0x518] sm:$0xff]
        %v472 = vld [vmem:[#allocation11 + $0x520] sm:$0xff]
        %v473 = vld [vmem:[#allocation11 + $0x528] sm:$0xff]
        %v474 = vld [vmem:[#allocation11 + $0x530] sm:$0xff]
        %v475 = vld [vmem:[#allocation11 + $0x538] sm:$0xff]
        %v476 = vld [vmem:[#allocation11 + $0x540] sm:$0xff]
        %v477 = vld [vmem:[#allocation11 + $0x548] sm:$0xff]
        %v478 = vld [vmem:[#allocation11 + $0x550] sm:$0xff]
        %v479 = vld [vmem:[#allocation11 + $0x558] sm:$0xff]
        %v480 = vld [vmem:[#allocation11 + $0x560] sm:$0xff]
        %v481 = vld [vmem:[#allocation11 + $0x568] sm:$0xff]
        %v482 = vld [vmem:[#allocation11 + $0x570] sm:$0xff]
        %v483 = vld [vmem:[#allocation11 + $0x578] sm:$0xff]
        %v484 = vld [vmem:[#allocation11 + $0x580] sm:$0xff]
        %v485 = vld [vmem:[#allocation11 + $0x588] sm:$0xff]
        %v486 = vld [vmem:[#allocation11 + $0x590] sm:$0xff]
        %v487 = vld [vmem:[#allocation11 + $0x598] sm:$0xff]
        %v488 = vld [vmem:[#allocation11 + $0x5a0] sm:$0xff]
        %v489 = vld [vmem:[#allocation11 + $0x5a8] sm:$0xff]
        %v490 = vld [vmem:[#allocation11 + $0x5b0] sm:$0xff]
        %v491 = vld [vmem:[#allocation11 + $0x5b8] sm:$0xff]
        %v492 = vld [vmem:[#allocation11 + $0x5c0] sm:$0xff]
        %v493 = vld [vmem:[#allocation11 + $0x5c8] sm:$0xff]
        %v494 = vld [vmem:[#allocation11 + $0x5d0] sm:$0xff]
        %v495 = vld [vmem:[#allocation11 + $0x5d8] sm:$0xff]
        %v496 = vld [vmem:[#allocation11 + $0x5e0] sm:$0xff]
        %v497 = vld [vmem:[#allocation11 + $0x5e8] sm:$0xff]
        %v498 = vld [vmem:[#allocation11 + $0x5f0] sm:$0xff]
        %v499 = vld [vmem:[#allocation11 + $0x5f8] sm:$0xff]
        %v500 = vld [vmem:[#allocation11 + $0x600] sm:$0xff]
        %v501 = vld [vmem:[#allocation11 + $0x608] sm:$0xff]
        %v502 = vld [vmem:[#allocation11 + $0x610] sm:$0xff]
        %v503 = vld [vmem:[#allocation11 + $0x618] sm:$0xff]
        %v504 = vld [vmem:[#allocation11 + $0x620] sm:$0xff]
        %v505 = vld [vmem:[#allocation11 + $0x628] sm:$0xff]
        %v506 = vld [vmem:[#allocation11 + $0x630] sm:$0xff]
        %v507 = vld [vmem:[#allocation11 + $0x638] sm:$0xff]
        %v508 = vld [vmem:[#allocation11 + $0x640] sm:$0xff]
        %v509 = vld [vmem:[#allocation11 + $0x648] sm:$0xff]
        %v510 = vld [vmem:[#allocation11 + $0x650] sm:$0xff]
        %v511 = vld [vmem:[#allocation11 + $0x658] sm:$0xff]
        %v512 = vld [vmem:[#allocation11 + $0x660] sm:$0xff]
        %v513 = vld [vmem:[#allocation11 + $0x668] sm:$0xff]
        %v514 = vld [vmem:[#allocation11 + $0x670] sm:$0xff]
        %v515 = vld [vmem:[#allocation11 + $0x678] sm:$0xff]
        %v516 = vld [vmem:[#allocation11 + $0x680] sm:$0xff]
        %v517 = vld [vmem:[#allocation11 + $0x688] sm:$0xff]
        %v518 = vld [vmem:[#allocation11 + $0x690] sm:$0xff]
        %v519 = vld [vmem:[#allocation11 + $0x698] sm:$0xff]
        %v520 = vld [vmem:[#allocation11 + $0x6a0] sm:$0xff]
        %v521 = vld [vmem:[#allocation11 + $0x6a8] sm:$0xff]
        %v522 = vld [vmem:[#allocation11 + $0x6b0] sm:$0xff]
        %v523 = vld [vmem:[#allocation11 + $0x6b8] sm:$0xff]
        %v524 = vld [vmem:[#allocation11 + $0x6c0] sm:$0xff]
        %v525 = vld [vmem:[#allocation11 + $0x6c8] sm:$0xff]
        %v526 = vld [vmem:[#allocation11 + $0x6d0] sm:$0xff]
        %v527 = vld [vmem:[#allocation11 + $0x6d8] sm:$0xff]
        %v528 = vld [vmem:[#allocation11 + $0x6e0] sm:$0xff]
        %v529 = vld [vmem:[#allocation11 + $0x6e8] sm:$0xff]
        %v530 = vld [vmem:[#allocation11 + $0x6f0] sm:$0xff]
        %v531 = vld [vmem:[#allocation11 + $0x6f8] sm:$0xff]
        %v532 = vld [vmem:[#allocation11 + $0x700] sm:$0xff]
        %v533 = vld [vmem:[#allocation11 + $0x708] sm:$0xff]
        %v534 = vld [vmem:[#allocation11 + $0x710] sm:$0xff]
        %v535 = vld [vmem:[#allocation11 + $0x718] sm:$0xff]
        %v536 = vld [vmem:[#allocation11 + $0x720] sm:$0xff]
        %v537 = vld [vmem:[#allocation11 + $0x728] sm:$0xff]
        %v538 = vld [vmem:[#allocation11 + $0x730] sm:$0xff]
        %v539 = vld [vmem:[#allocation11 + $0x738] sm:$0xff]
        %v540 = vld [vmem:[#allocation11 + $0x740] sm:$0xff]
        %v541 = vld [vmem:[#allocation11 + $0x748] sm:$0xff]
        %v542 = vld [vmem:[#allocation11 + $0x750] sm:$0xff]
        %v543 = vld [vmem:[#allocation11 + $0x758] sm:$0xff]
        %v544 = vld [vmem:[#allocation11 + $0x760] sm:$0xff]
        %v545 = vld [vmem:[#allocation11 + $0x768] sm:$0xff]
        %v546 = vld [vmem:[#allocation11 + $0x770] sm:$0xff]
        %v547 = vld [vmem:[#allocation11 + $0x778] sm:$0xff]
        %v548 = vld [vmem:[#allocation11 + $0x780] sm:$0xff]
        %v549 = vld [vmem:[#allocation11 + $0x788] sm:$0xff]
        %v550 = vld [vmem:[#allocation11 + $0x790] sm:$0xff]
        %v551 = vld [vmem:[#allocation11 + $0x798] sm:$0xff]
        %v552 = vld [vmem:[#allocation11 + $0x7a0] sm:$0xff]
        %v553 = vld [vmem:[#allocation11 + $0x7a8] sm:$0xff]
        %v554 = vld [vmem:[#allocation11 + $0x7b0] sm:$0xff]
        %v555 = vld [vmem:[#allocation11 + $0x7b8] sm:$0xff]
        %v556 = vld [vmem:[#allocation11 + $0x7c0] sm:$0xff]
        %v557 = vld [vmem:[#allocation11 + $0x7c8] sm:$0xff]
        %v558 = vld [vmem:[#allocation11 + $0x7d0] sm:$0xff]
        %v559 = vld [vmem:[#allocation11 + $0x7d8] sm:$0xff]
        %v560 = vld [vmem:[#allocation11 + $0x7e0] sm:$0xff]
        %v561 = vld [vmem:[#allocation11 + $0x7e8] sm:$0xff]
        %v562 = vld [vmem:[#allocation11 + $0x7f0] sm:$0xff]
        %v563 = vld [vmem:[#allocation11 + $0x7f8] sm:$0xff]
        %v564 = vld [vmem:[#allocation2] sm:$0xff]
        %v565 = vld [vmem:[#allocation3] sm:$0xff]
        %v566 = vld [vmem:[#allocation4] sm:$0xff]
        %v567 = vld [vmem:[#allocation5] sm:$0xff]
        %v568 = vld [vmem:[%s243] sm:$0xff]
        %v569 = vld [vmem:[%s243 + $0x8] sm:$0xff]
        %v570 = vld [vmem:[%s243 + $0x10] sm:$0xff]
        %v571 = vld [vmem:[%s243 + $0x18] sm:$0xff]
        %s572 = scalar_lea.vmem %s253, 64 [#allocation9]
        %v573 = vld [vmem:[%s572] sm:$0xff]
        %v574 = vld [vmem:[%s572 + $0x8] sm:$0xff]
        %v575 = vld [vmem:[%s572 + $0x10] sm:$0xff]
        %v576 = vld [vmem:[%s572 + $0x18] sm:$0xff]
        %577 = vmatpush.msra.mxu0 %v428
        %578 = vmatpush.msra.mxu0 %v420
        %579 = vmatpush.msra.mxu0 %v412
        %580 = vmatpush.msra.mxu0 %v404
        %581 = vmatpush.msra.mxu0 %v396
        %582 = vmatpush.msra.mxu0 %v388
        %583 = vmatpush.msra.mxu0 %v380
        %584 = vmatpush.msra.mxu0 %v372
        %585 = vmatpush.msra.mxu0 %v364
        %586 = vmatpush.msra.mxu0 %v356
        %587 = vmatpush.msra.mxu0 %v348
        %588 = vmatpush.msra.mxu0 %v340
        %589 = vmatpush.msra.mxu0 %v332
        %590 = vmatpush.msra.mxu0 %v324
        %591 = vmatpush.msra.mxu0 %v316
        %592 = vmatpush.msra.mxu0 %v308
        %593 = vmatmul.f32.gmra.mxu0 %v564
        %v594 = vpop.f32.mrf.mxu0
        %v595 = vadd.f32 0.0, %v594
        %596 = vdwg.mxu0
        %597 = vmatpush.msra.mxu0 %v556
        %598 = vmatpush.msra.mxu0 %v548
        %599 = vmatpush.msra.mxu0 %v540
        %600 = vmatpush.msra.mxu0 %v532
        %601 = vmatpush.msra.mxu0 %v524
        %602 = vmatpush.msra.mxu0 %v516
        %603 = vmatpush.msra.mxu0 %v508
        %604 = vmatpush.msra.mxu0 %v500
        %605 = vmatpush.msra.mxu0 %v492
        %606 = vmatpush.msra.mxu0 %v484
        %607 = vmatpush.msra.mxu0 %v476
        %608 = vmatpush.msra.mxu0 %v468
        %609 = vmatpush.msra.mxu0 %v460
        %610 = vmatpush.msra.mxu0 %v452
        %611 = vmatpush.msra.mxu0 %v444
        %612 = vmatpush.msra.mxu0 %v436
        %613 = vmatmul.f32.gmra.mxu0 %v566
        %v614 = vpop.f32.mrf.mxu0
        %v615 = vadd.f32 %v595, %v614
        %616 = vdwg.mxu0
        %617 = vmatpush.msra.mxu0 %v429
        %618 = vmatpush.msra.mxu0 %v421
        %619 = vmatpush.msra.mxu0 %v413
        %620 = vmatpush.msra.mxu0 %v405
        %621 = vmatpush.msra.mxu0 %v397
        %622 = vmatpush.msra.mxu0 %v389
        %623 = vmatpush.msra.mxu0 %v381
        %624 = vmatpush.msra.mxu0 %v373
        %625 = vmatpush.msra.mxu0 %v365
        %626 = vmatpush.msra.mxu0 %v357
        %627 = vmatpush.msra.mxu0 %v349
        %628 = vmatpush.msra.mxu0 %v341
        %629 = vmatpush.msra.mxu0 %v333
        %630 = vmatpush.msra.mxu0 %v325
        %631 = vmatpush.msra.mxu0 %v317
        %632 = vmatpush.msra.mxu0 %v309
        %633 = vmatmul.f32.gmra.mxu0 %v564
        %v634 = vpop.f32.mrf.mxu0
        %v635 = vadd.f32 0.0, %v634
        %636 = vdwg.mxu0
        %637 = vmatpush.msra.mxu0 %v557
        %638 = vmatpush.msra.mxu0 %v549
        %639 = vmatpush.msra.mxu0 %v541
        %640 = vmatpush.msra.mxu0 %v533
        %641 = vmatpush.msra.mxu0 %v525
        %642 = vmatpush.msra.mxu0 %v517
        %643 = vmatpush.msra.mxu0 %v509
        %644 = vmatpush.msra.mxu0 %v501
        %645 = vmatpush.msra.mxu0 %v493
        %646 = vmatpush.msra.mxu0 %v485
        %647 = vmatpush.msra.mxu0 %v477
        %648 = vmatpush.msra.mxu0 %v469
        %649 = vmatpush.msra.mxu0 %v461
        %650 = vmatpush.msra.mxu0 %v453
        %651 = vmatpush.msra.mxu0 %v445
        %652 = vmatpush.msra.mxu0 %v437
        %653 = vmatmul.f32.gmra.mxu0 %v566
        %v654 = vpop.f32.mrf.mxu0
        %v655 = vadd.f32 %v635, %v654
        %656 = vdwg.mxu0
        %657 = vmatpush.msra.mxu0 %v430
        %658 = vmatpush.msra.mxu0 %v422
        %659 = vmatpush.msra.mxu0 %v414
        %660 = vmatpush.msra.mxu0 %v406
        %661 = vmatpush.msra.mxu0 %v398
        %662 = vmatpush.msra.mxu0 %v390
        %663 = vmatpush.msra.mxu0 %v382
        %664 = vmatpush.msra.mxu0 %v374
        %665 = vmatpush.msra.mxu0 %v366
        %666 = vmatpush.msra.mxu0 %v358
        %667 = vmatpush.msra.mxu0 %v350
        %668 = vmatpush.msra.mxu0 %v342
        %669 = vmatpush.msra.mxu0 %v334
        %670 = vmatpush.msra.mxu0 %v326
        %671 = vmatpush.msra.mxu0 %v318
        %672 = vmatpush.msra.mxu0 %v310
        %673 = vmatmul.f32.gmra.mxu0 %v564
        %v674 = vpop.f32.mrf.mxu0
        %v675 = vadd.f32 0.0, %v674
        %676 = vdwg.mxu0
        %677 = vmatpush.msra.mxu0 %v558
        %678 = vmatpush.msra.mxu0 %v550
        %679 = vmatpush.msra.mxu0 %v542
        %680 = vmatpush.msra.mxu0 %v534
        %681 = vmatpush.msra.mxu0 %v526
        %682 = vmatpush.msra.mxu0 %v518
        %683 = vmatpush.msra.mxu0 %v510
        %684 = vmatpush.msra.mxu0 %v502
        %685 = vmatpush.msra.mxu0 %v494
        %686 = vmatpush.msra.mxu0 %v486
        %687 = vmatpush.msra.mxu0 %v478
        %688 = vmatpush.msra.mxu0 %v470
        %689 = vmatpush.msra.mxu0 %v462
        %690 = vmatpush.msra.mxu0 %v454
        %691 = vmatpush.msra.mxu0 %v446
        %692 = vmatpush.msra.mxu0 %v438
        %693 = vmatmul.f32.gmra.mxu0 %v566
        %v694 = vpop.f32.mrf.mxu0
        %v695 = vadd.f32 %v675, %v694
        %696 = vdwg.mxu0
        %697 = vmatpush.msra.mxu0 %v431
        %698 = vmatpush.msra.mxu0 %v423
        %699 = vmatpush.msra.mxu0 %v415
        %700 = vmatpush.msra.mxu0 %v407
        %701 = vmatpush.msra.mxu0 %v399
        %702 = vmatpush.msra.mxu0 %v391
        %703 = vmatpush.msra.mxu0 %v383
        %704 = vmatpush.msra.mxu0 %v375
        %705 = vmatpush.msra.mxu0 %v367
        %706 = vmatpush.msra.mxu0 %v359
        %707 = vmatpush.msra.mxu0 %v351
        %708 = vmatpush.msra.mxu0 %v343
        %709 = vmatpush.msra.mxu0 %v335
        %710 = vmatpush.msra.mxu0 %v327
        %711 = vmatpush.msra.mxu0 %v319
        %712 = vmatpush.msra.mxu0 %v311
        %713 = vmatmul.f32.gmra.mxu0 %v564
        %v714 = vpop.f32.mrf.mxu0
        %v715 = vadd.f32 0.0, %v714
        %716 = vdwg.mxu0
        %717 = vmatpush.msra.mxu0 %v559
        %718 = vmatpush.msra.mxu0 %v551
        %719 = vmatpush.msra.mxu0 %v543
        %720 = vmatpush.msra.mxu0 %v535
        %721 = vmatpush.msra.mxu0 %v527
        %722 = vmatpush.msra.mxu0 %v519
        %723 = vmatpush.msra.mxu0 %v511
        %724 = vmatpush.msra.mxu0 %v503
        %725 = vmatpush.msra.mxu0 %v495
        %726 = vmatpush.msra.mxu0 %v487
        %727 = vmatpush.msra.mxu0 %v479
        %728 = vmatpush.msra.mxu0 %v471
        %729 = vmatpush.msra.mxu0 %v463
        %730 = vmatpush.msra.mxu0 %v455
        %731 = vmatpush.msra.mxu0 %v447
        %732 = vmatpush.msra.mxu0 %v439
        %733 = vmatmul.f32.gmra.mxu0 %v566
        %v734 = vpop.f32.mrf.mxu0
        %v735 = vadd.f32 %v715, %v734
        %736 = vdwg.mxu0
        %737 = vmatpush.msra.mxu0 %v432
        %738 = vmatpush.msra.mxu0 %v424
        %739 = vmatpush.msra.mxu0 %v416
        %740 = vmatpush.msra.mxu0 %v408
        %741 = vmatpush.msra.mxu0 %v400
        %742 = vmatpush.msra.mxu0 %v392
        %743 = vmatpush.msra.mxu0 %v384
        %744 = vmatpush.msra.mxu0 %v376
        %745 = vmatpush.msra.mxu0 %v368
        %746 = vmatpush.msra.mxu0 %v360
        %747 = vmatpush.msra.mxu0 %v352
        %748 = vmatpush.msra.mxu0 %v344
        %749 = vmatpush.msra.mxu0 %v336
        %750 = vmatpush.msra.mxu0 %v328
        %751 = vmatpush.msra.mxu0 %v320
        %752 = vmatpush.msra.mxu0 %v312
        %753 = vmatmul.f32.gmra.mxu0 %v564
        %v754 = vpop.f32.mrf.mxu0
        %v755 = vadd.f32 0.0, %v754
        %756 = vdwg.mxu0
        %757 = vmatpush.msra.mxu0 %v560
        %758 = vmatpush.msra.mxu0 %v552
        %759 = vmatpush.msra.mxu0 %v544
        %760 = vmatpush.msra.mxu0 %v536
        %761 = vmatpush.msra.mxu0 %v528
        %762 = vmatpush.msra.mxu0 %v520
        %763 = vmatpush.msra.mxu0 %v512
        %764 = vmatpush.msra.mxu0 %v504
        %765 = vmatpush.msra.mxu0 %v496
        %766 = vmatpush.msra.mxu0 %v488
        %767 = vmatpush.msra.mxu0 %v480
        %768 = vmatpush.msra.mxu0 %v472
        %769 = vmatpush.msra.mxu0 %v464
        %770 = vmatpush.msra.mxu0 %v456
        %771 = vmatpush.msra.mxu0 %v448
        %772 = vmatpush.msra.mxu0 %v440
        %773 = vmatmul.f32.gmra.mxu0 %v566
        %v774 = vpop.f32.mrf.mxu0
        %v775 = vadd.f32 %v755, %v774
        %776 = vdwg.mxu0
        %777 = vmatpush.msra.mxu0 %v433
        %778 = vmatpush.msra.mxu0 %v425
        %779 = vmatpush.msra.mxu0 %v417
        %780 = vmatpush.msra.mxu0 %v409
        %781 = vmatpush.msra.mxu0 %v401
        %782 = vmatpush.msra.mxu0 %v393
        %783 = vmatpush.msra.mxu0 %v385
        %784 = vmatpush.msra.mxu0 %v377
        %785 = vmatpush.msra.mxu0 %v369
        %786 = vmatpush.msra.mxu0 %v361
        %787 = vmatpush.msra.mxu0 %v353
        %788 = vmatpush.msra.mxu0 %v345
        %789 = vmatpush.msra.mxu0 %v337
        %790 = vmatpush.msra.mxu0 %v329
        %791 = vmatpush.msra.mxu0 %v321
        %792 = vmatpush.msra.mxu0 %v313
        %793 = vmatmul.f32.gmra.mxu0 %v564
        %v794 = vpop.f32.mrf.mxu0
        %v795 = vadd.f32 0.0, %v794
        %796 = vdwg.mxu0
        %797 = vmatpush.msra.mxu0 %v561
        %798 = vmatpush.msra.mxu0 %v553
        %799 = vmatpush.msra.mxu0 %v545
        %800 = vmatpush.msra.mxu0 %v537
        %801 = vmatpush.msra.mxu0 %v529
        %802 = vmatpush.msra.mxu0 %v521
        %803 = vmatpush.msra.mxu0 %v513
        %804 = vmatpush.msra.mxu0 %v505
        %805 = vmatpush.msra.mxu0 %v497
        %806 = vmatpush.msra.mxu0 %v489
        %807 = vmatpush.msra.mxu0 %v481
        %808 = vmatpush.msra.mxu0 %v473
        %809 = vmatpush.msra.mxu0 %v465
        %810 = vmatpush.msra.mxu0 %v457
        %811 = vmatpush.msra.mxu0 %v449
        %812 = vmatpush.msra.mxu0 %v441
        %813 = vmatmul.f32.gmra.mxu0 %v566
        %v814 = vpop.f32.mrf.mxu0
        %v815 = vadd.f32 %v795, %v814
        %816 = vdwg.mxu0
        %817 = vmatpush.msra.mxu0 %v434
        %818 = vmatpush.msra.mxu0 %v426
        %819 = vmatpush.msra.mxu0 %v418
        %820 = vmatpush.msra.mxu0 %v410
        %821 = vmatpush.msra.mxu0 %v402
        %822 = vmatpush.msra.mxu0 %v394
        %823 = vmatpush.msra.mxu0 %v386
        %824 = vmatpush.msra.mxu0 %v378
        %825 = vmatpush.msra.mxu0 %v370
        %826 = vmatpush.msra.mxu0 %v362
        %827 = vmatpush.msra.mxu0 %v354
        %828 = vmatpush.msra.mxu0 %v346
        %829 = vmatpush.msra.mxu0 %v338
        %830 = vmatpush.msra.mxu0 %v330
        %831 = vmatpush.msra.mxu0 %v322
        %832 = vmatpush.msra.mxu0 %v314
        %833 = vmatmul.f32.gmra.mxu0 %v564
        %v834 = vpop.f32.mrf.mxu0
        %v835 = vadd.f32 0.0, %v834
        %836 = vdwg.mxu0
        %837 = vmatpush.msra.mxu0 %v562
        %838 = vmatpush.msra.mxu0 %v554
        %839 = vmatpush.msra.mxu0 %v546
        %840 = vmatpush.msra.mxu0 %v538
        %841 = vmatpush.msra.mxu0 %v530
        %842 = vmatpush.msra.mxu0 %v522
        %843 = vmatpush.msra.mxu0 %v514
        %844 = vmatpush.msra.mxu0 %v506
        %845 = vmatpush.msra.mxu0 %v498
        %846 = vmatpush.msra.mxu0 %v490
        %847 = vmatpush.msra.mxu0 %v482
        %848 = vmatpush.msra.mxu0 %v474
        %849 = vmatpush.msra.mxu0 %v466
        %850 = vmatpush.msra.mxu0 %v458
        %851 = vmatpush.msra.mxu0 %v450
        %852 = vmatpush.msra.mxu0 %v442
        %853 = vmatmul.f32.gmra.mxu0 %v566
        %v854 = vpop.f32.mrf.mxu0
        %v855 = vadd.f32 %v835, %v854
        %856 = vdwg.mxu0
        %857 = vmatpush.msra.mxu0 %v435
        %858 = vmatpush.msra.mxu0 %v427
        %859 = vmatpush.msra.mxu0 %v419
        %860 = vmatpush.msra.mxu0 %v411
        %861 = vmatpush.msra.mxu0 %v403
        %862 = vmatpush.msra.mxu0 %v395
        %863 = vmatpush.msra.mxu0 %v387
        %864 = vmatpush.msra.mxu0 %v379
        %865 = vmatpush.msra.mxu0 %v371
        %866 = vmatpush.msra.mxu0 %v363
        %867 = vmatpush.msra.mxu0 %v355
        %868 = vmatpush.msra.mxu0 %v347
        %869 = vmatpush.msra.mxu0 %v339
        %870 = vmatpush.msra.mxu0 %v331
        %871 = vmatpush.msra.mxu0 %v323
        %872 = vmatpush.msra.mxu0 %v315
        %873 = vmatmul.f32.gmra.mxu0 %v564
        %v874 = vpop.f32.mrf.mxu0
        %v875 = vadd.f32 0.0, %v874
        %876 = vdwg.mxu0
        %877 = vmatpush.msra.mxu0 %v563
        %878 = vmatpush.msra.mxu0 %v555
        %879 = vmatpush.msra.mxu0 %v547
        %880 = vmatpush.msra.mxu0 %v539
        %881 = vmatpush.msra.mxu0 %v531
        %882 = vmatpush.msra.mxu0 %v523
        %883 = vmatpush.msra.mxu0 %v515
        %884 = vmatpush.msra.mxu0 %v507
        %885 = vmatpush.msra.mxu0 %v499
        %886 = vmatpush.msra.mxu0 %v491
        %887 = vmatpush.msra.mxu0 %v483
        %888 = vmatpush.msra.mxu0 %v475
        %889 = vmatpush.msra.mxu0 %v467
        %890 = vmatpush.msra.mxu0 %v459
        %891 = vmatpush.msra.mxu0 %v451
        %892 = vmatpush.msra.mxu0 %v443
        %893 = vmatmul.f32.gmra.mxu0 %v566
        %v894 = vpop.f32.mrf.mxu0
        %v895 = vadd.f32 %v875, %v894
        %896 = vdwg.mxu0
        %v897 = vadd.f32 %v568, %v615
        %v898 = vadd.f32 %v569, %v655
        %v899 = vadd.f32 %v570, %v695
        %v900 = vadd.f32 %v571, %v735
        %v901 = vadd.f32 %v573, %v775
        %v902 = vadd.f32 %v574, %v815
        %v903 = vadd.f32 %v575, %v855
        %v904 = vadd.f32 %v576, %v895
        %v905 = vmul.f32 %v897, 0.5
        %v906 = vtanh.pop %v905
        %v907 = vmul.f32 %v906, 0.5
        %v908 = vadd.f32 %v907, 0.5
        %v909 = vmul.f32 %v898, 0.5
        %v910 = vtanh.pop %v909
        %v911 = vmul.f32 %v910, 0.5
        %v912 = vadd.f32 %v911, 0.5
        %v913 = vtanh.pop %v899
        %v914 = vmul.f32 %v900, 0.5
        %v915 = vtanh.pop %v914
        %v916 = vmul.f32 %v915, 0.5
        %v917 = vadd.f32 %v916, 0.5
        %v918 = vmul.f32 %v912, %v565
        %v919 = vmul.f32 %v908, %v913
        %v920 = vadd.f32 %v918, %v919
        %v921 = vtanh.pop %v920
        %v922 = vmul.f32 %v917, %v921
        %v923 = vmul.f32 %v901, 0.5
        %v924 = vtanh.pop %v923
        %v925 = vmul.f32 %v924, 0.5
        %v926 = vadd.f32 %v925, 0.5
        %v927 = vmul.f32 %v902, 0.5
        %v928 = vtanh.pop %v927
        %v929 = vmul.f32 %v928, 0.5
        %v930 = vadd.f32 %v929, 0.5
        %v931 = vtanh.pop %v903
        %v932 = vmul.f32 %v904, 0.5
        %v933 = vtanh.pop %v932
        %v934 = vmul.f32 %v933, 0.5
        %v935 = vadd.f32 %v934, 0.5
        %v936 = vmul.f32 %v930, %v567
        %v937 = vmul.f32 %v926, %v931
        %v938 = vadd.f32 %v936, %v937
        %v939 = vtanh.pop %v938
        %v940 = vmul.f32 %v935, %v939
        %941 = vst [vmem:[%s286] sm:$0xff] %v922
        %s942 = scalar_lea.vmem %s293, 16 [#allocation13]
        %943 = vst [vmem:[%s942] sm:$0xff] %v940
        %s944 = scalar_lea.vmem %s243, 32 [#allocation6]
        %v945 = vld [vmem:[%s944] sm:$0xff]
        %v946 = vld [vmem:[%s944 + $0x8] sm:$0xff]
        %v947 = vld [vmem:[%s944 + $0x10] sm:$0xff]
        %v948 = vld [vmem:[%s944 + $0x18] sm:$0xff]
        %s949 = scalar_lea.vmem %s253, 32 [#allocation9]
        %v950 = vld [vmem:[%s949] sm:$0xff]
        %v951 = vld [vmem:[%s949 + $0x8] sm:$0xff]
        %v952 = vld [vmem:[%s949 + $0x10] sm:$0xff]
        %v953 = vld [vmem:[%s949 + $0x18] sm:$0xff]
        %954 = vmatpush.msra.mxu0 %v428
        %955 = vmatpush.msra.mxu0 %v420
        %956 = vmatpush.msra.mxu0 %v412
        %957 = vmatpush.msra.mxu0 %v404
        %958 = vmatpush.msra.mxu0 %v396
        %959 = vmatpush.msra.mxu0 %v388
        %960 = vmatpush.msra.mxu0 %v380
        %961 = vmatpush.msra.mxu0 %v372
        %962 = vmatpush.msra.mxu0 %v364
        %963 = vmatpush.msra.mxu0 %v356
        %964 = vmatpush.msra.mxu0 %v348
        %965 = vmatpush.msra.mxu0 %v340
        %966 = vmatpush.msra.mxu0 %v332
        %967 = vmatpush.msra.mxu0 %v324
        %968 = vmatpush.msra.mxu0 %v316
        %969 = vmatpush.msra.mxu0 %v308
        %970 = vmatmul.f32.gmra.mxu0 %v922
        %v971 = vpop.f32.mrf.mxu0
        %v972 = vadd.f32 0.0, %v971
        %973 = vdwg.mxu0
        %974 = vmatpush.msra.mxu0 %v556
        %975 = vmatpush.msra.mxu0 %v548
        %976 = vmatpush.msra.mxu0 %v540
        %977 = vmatpush.msra.mxu0 %v532
        %978 = vmatpush.msra.mxu0 %v524
        %979 = vmatpush.msra.mxu0 %v516
        %980 = vmatpush.msra.mxu0 %v508
        %981 = vmatpush.msra.mxu0 %v500
        %982 = vmatpush.msra.mxu0 %v492
        %983 = vmatpush.msra.mxu0 %v484
        %984 = vmatpush.msra.mxu0 %v476
        %985 = vmatpush.msra.mxu0 %v468
        %986 = vmatpush.msra.mxu0 %v460
        %987 = vmatpush.msra.mxu0 %v452
        %988 = vmatpush.msra.mxu0 %v444
        %989 = vmatpush.msra.mxu0 %v436
        %990 = vmatmul.f32.gmra.mxu0 %v940
        %v991 = vpop.f32.mrf.mxu0
        %v992 = vadd.f32 %v972, %v991
        %993 = vdwg.mxu0
        %994 = vmatpush.msra.mxu0 %v429
        %995 = vmatpush.msra.mxu0 %v421
        %996 = vmatpush.msra.mxu0 %v413
        %997 = vmatpush.msra.mxu0 %v405
        %998 = vmatpush.msra.mxu0 %v397
        %999 = vmatpush.msra.mxu0 %v389
        %1000 = vmatpush.msra.mxu0 %v381
        %1001 = vmatpush.msra.mxu0 %v373
        %1002 = vmatpush.msra.mxu0 %v365
        %1003 = vmatpush.msra.mxu0 %v357
        %1004 = vmatpush.msra.mxu0 %v349
        %1005 = vmatpush.msra.mxu0 %v341
        %1006 = vmatpush.msra.mxu0 %v333
        %1007 = vmatpush.msra.mxu0 %v325
        %1008 = vmatpush.msra.mxu0 %v317
        %1009 = vmatpush.msra.mxu0 %v309
        %1010 = vmatmul.f32.gmra.mxu0 %v922
        %v1011 = vpop.f32.mrf.mxu0
        %v1012 = vadd.f32 0.0, %v1011
        %1013 = vdwg.mxu0
        %1014 = vmatpush.msra.mxu0 %v557
        %1015 = vmatpush.msra.mxu0 %v549
        %1016 = vmatpush.msra.mxu0 %v541
        %1017 = vmatpush.msra.mxu0 %v533
        %1018 = vmatpush.msra.mxu0 %v525
        %1019 = vmatpush.msra.mxu0 %v517
        %1020 = vmatpush.msra.mxu0 %v509
        %1021 = vmatpush.msra.mxu0 %v501
        %1022 = vmatpush.msra.mxu0 %v493
        %1023 = vmatpush.msra.mxu0 %v485
        %1024 = vmatpush.msra.mxu0 %v477
        %1025 = vmatpush.msra.mxu0 %v469
        %1026 = vmatpush.msra.mxu0 %v461
        %1027 = vmatpush.msra.mxu0 %v453
        %1028 = vmatpush.msra.mxu0 %v445
        %1029 = vmatpush.msra.mxu0 %v437
        %1030 = vmatmul.f32.gmra.mxu0 %v940
        %v1031 = vpop.f32.mrf.mxu0
        %v1032 = vadd.f32 %v1012, %v1031
        %1033 = vdwg.mxu0
        %1034 = vmatpush.msra.mxu0 %v430
        %1035 = vmatpush.msra.mxu0 %v422
        %1036 = vmatpush.msra.mxu0 %v414
        %1037 = vmatpush.msra.mxu0 %v406
        %1038 = vmatpush.msra.mxu0 %v398
        %1039 = vmatpush.msra.mxu0 %v390
        %1040 = vmatpush.msra.mxu0 %v382
        %1041 = vmatpush.msra.mxu0 %v374
        %1042 = vmatpush.msra.mxu0 %v366
        %1043 = vmatpush.msra.mxu0 %v358
        %1044 = vmatpush.msra.mxu0 %v350
        %1045 = vmatpush.msra.mxu0 %v342
        %1046 = vmatpush.msra.mxu0 %v334
        %1047 = vmatpush.msra.mxu0 %v326
        %1048 = vmatpush.msra.mxu0 %v318
        %1049 = vmatpush.msra.mxu0 %v310
        %1050 = vmatmul.f32.gmra.mxu0 %v922
        %v1051 = vpop.f32.mrf.mxu0
        %v1052 = vadd.f32 0.0, %v1051
        %1053 = vdwg.mxu0
        %1054 = vmatpush.msra.mxu0 %v558
        %1055 = vmatpush.msra.mxu0 %v550
        %1056 = vmatpush.msra.mxu0 %v542
        %1057 = vmatpush.msra.mxu0 %v534
        %1058 = vmatpush.msra.mxu0 %v526
        %1059 = vmatpush.msra.mxu0 %v518
        %1060 = vmatpush.msra.mxu0 %v510
        %1061 = vmatpush.msra.mxu0 %v502
        %1062 = vmatpush.msra.mxu0 %v494
        %1063 = vmatpush.msra.mxu0 %v486
        %1064 = vmatpush.msra.mxu0 %v478
        %1065 = vmatpush.msra.mxu0 %v470
        %1066 = vmatpush.msra.mxu0 %v462
        %1067 = vmatpush.msra.mxu0 %v454
        %1068 = vmatpush.msra.mxu0 %v446
        %1069 = vmatpush.msra.mxu0 %v438
        %1070 = vmatmul.f32.gmra.mxu0 %v940
        %v1071 = vpop.f32.mrf.mxu0
        %v1072 = vadd.f32 %v1052, %v1071
        %1073 = vdwg.mxu0
        %1074 = vmatpush.msra.mxu0 %v431
        %1075 = vmatpush.msra.mxu0 %v423
        %1076 = vmatpush.msra.mxu0 %v415
        %1077 = vmatpush.msra.mxu0 %v407
        %1078 = vmatpush.msra.mxu0 %v399
        %1079 = vmatpush.msra.mxu0 %v391
        %1080 = vmatpush.msra.mxu0 %v383
        %1081 = vmatpush.msra.mxu0 %v375
        %1082 = vmatpush.msra.mxu0 %v367
        %1083 = vmatpush.msra.mxu0 %v359
        %1084 = vmatpush.msra.mxu0 %v351
        %1085 = vmatpush.msra.mxu0 %v343
        %1086 = vmatpush.msra.mxu0 %v335
        %1087 = vmatpush.msra.mxu0 %v327
        %1088 = vmatpush.msra.mxu0 %v319
        %1089 = vmatpush.msra.mxu0 %v311
        %1090 = vmatmul.f32.gmra.mxu0 %v922
        %v1091 = vpop.f32.mrf.mxu0
        %v1092 = vadd.f32 0.0, %v1091
        %1093 = vdwg.mxu0
        %1094 = vmatpush.msra.mxu0 %v559
        %1095 = vmatpush.msra.mxu0 %v551
        %1096 = vmatpush.msra.mxu0 %v543
        %1097 = vmatpush.msra.mxu0 %v535
        %1098 = vmatpush.msra.mxu0 %v527
        %1099 = vmatpush.msra.mxu0 %v519
        %1100 = vmatpush.msra.mxu0 %v511
        %1101 = vmatpush.msra.mxu0 %v503
        %1102 = vmatpush.msra.mxu0 %v495
        %1103 = vmatpush.msra.mxu0 %v487
        %1104 = vmatpush.msra.mxu0 %v479
        %1105 = vmatpush.msra.mxu0 %v471
        %1106 = vmatpush.msra.mxu0 %v463
        %1107 = vmatpush.msra.mxu0 %v455
        %1108 = vmatpush.msra.mxu0 %v447
        %1109 = vmatpush.msra.mxu0 %v439
        %1110 = vmatmul.f32.gmra.mxu0 %v940
        %v1111 = vpop.f32.mrf.mxu0
        %v1112 = vadd.f32 %v1092, %v1111
        %1113 = vdwg.mxu0
        %1114 = vmatpush.msra.mxu0 %v432
        %1115 = vmatpush.msra.mxu0 %v424
        %1116 = vmatpush.msra.mxu0 %v416
        %1117 = vmatpush.msra.mxu0 %v408
        %1118 = vmatpush.msra.mxu0 %v400
        %1119 = vmatpush.msra.mxu0 %v392
        %1120 = vmatpush.msra.mxu0 %v384
        %1121 = vmatpush.msra.mxu0 %v376
        %1122 = vmatpush.msra.mxu0 %v368
        %1123 = vmatpush.msra.mxu0 %v360
        %1124 = vmatpush.msra.mxu0 %v352
        %1125 = vmatpush.msra.mxu0 %v344
        %1126 = vmatpush.msra.mxu0 %v336
        %1127 = vmatpush.msra.mxu0 %v328
        %1128 = vmatpush.msra.mxu0 %v320
        %1129 = vmatpush.msra.mxu0 %v312
        %1130 = vmatmul.f32.gmra.mxu0 %v922
        %v1131 = vpop.f32.mrf.mxu0
        %v1132 = vadd.f32 0.0, %v1131
        %1133 = vdwg.mxu0
        %1134 = vmatpush.msra.mxu0 %v560
        %1135 = vmatpush.msra.mxu0 %v552
        %1136 = vmatpush.msra.mxu0 %v544
        %1137 = vmatpush.msra.mxu0 %v536
        %1138 = vmatpush.msra.mxu0 %v528
        %1139 = vmatpush.msra.mxu0 %v520
        %1140 = vmatpush.msra.mxu0 %v512
        %1141 = vmatpush.msra.mxu0 %v504
        %1142 = vmatpush.msra.mxu0 %v496
        %1143 = vmatpush.msra.mxu0 %v488
        %1144 = vmatpush.msra.mxu0 %v480
        %1145 = vmatpush.msra.mxu0 %v472
        %1146 = vmatpush.msra.mxu0 %v464
        %1147 = vmatpush.msra.mxu0 %v456
        %1148 = vmatpush.msra.mxu0 %v448
        %1149 = vmatpush.msra.mxu0 %v440
        %1150 = vmatmul.f32.gmra.mxu0 %v940
        %v1151 = vpop.f32.mrf.mxu0
        %v1152 = vadd.f32 %v1132, %v1151
        %1153 = vdwg.mxu0
        %1154 = vmatpush.msra.mxu0 %v433
        %1155 = vmatpush.msra.mxu0 %v425
        %1156 = vmatpush.msra.mxu0 %v417
        %1157 = vmatpush.msra.mxu0 %v409
        %1158 = vmatpush.msra.mxu0 %v401
        %1159 = vmatpush.msra.mxu0 %v393
        %1160 = vmatpush.msra.mxu0 %v385
        %1161 = vmatpush.msra.mxu0 %v377
        %1162 = vmatpush.msra.mxu0 %v369
        %1163 = vmatpush.msra.mxu0 %v361
        %1164 = vmatpush.msra.mxu0 %v353
        %1165 = vmatpush.msra.mxu0 %v345
        %1166 = vmatpush.msra.mxu0 %v337
        %1167 = vmatpush.msra.mxu0 %v329
        %1168 = vmatpush.msra.mxu0 %v321
        %1169 = vmatpush.msra.mxu0 %v313
        %1170 = vmatmul.f32.gmra.mxu0 %v922
        %v1171 = vpop.f32.mrf.mxu0
        %v1172 = vadd.f32 0.0, %v1171
        %1173 = vdwg.mxu0
        %1174 = vmatpush.msra.mxu0 %v561
        %1175 = vmatpush.msra.mxu0 %v553
        %1176 = vmatpush.msra.mxu0 %v545
        %1177 = vmatpush.msra.mxu0 %v537
        %1178 = vmatpush.msra.mxu0 %v529
        %1179 = vmatpush.msra.mxu0 %v521
        %1180 = vmatpush.msra.mxu0 %v513
        %1181 = vmatpush.msra.mxu0 %v505
        %1182 = vmatpush.msra.mxu0 %v497
        %1183 = vmatpush.msra.mxu0 %v489
        %1184 = vmatpush.msra.mxu0 %v481
        %1185 = vmatpush.msra.mxu0 %v473
        %1186 = vmatpush.msra.mxu0 %v465
        %1187 = vmatpush.msra.mxu0 %v457
        %1188 = vmatpush.msra.mxu0 %v449
        %1189 = vmatpush.msra.mxu0 %v441
        %1190 = vmatmul.f32.gmra.mxu0 %v940
        %v1191 = vpop.f32.mrf.mxu0
        %v1192 = vadd.f32 %v1172, %v1191
        %1193 = vdwg.mxu0
        %1194 = vmatpush.msra.mxu0 %v434
        %1195 = vmatpush.msra.mxu0 %v426
        %1196 = vmatpush.msra.mxu0 %v418
        %1197 = vmatpush.msra.mxu0 %v410
        %1198 = vmatpush.msra.mxu0 %v402
        %1199 = vmatpush.msra.mxu0 %v394
        %1200 = vmatpush.msra.mxu0 %v386
        %1201 = vmatpush.msra.mxu0 %v378
        %1202 = vmatpush.msra.mxu0 %v370
        %1203 = vmatpush.msra.mxu0 %v362
        %1204 = vmatpush.msra.mxu0 %v354
        %1205 = vmatpush.msra.mxu0 %v346
        %1206 = vmatpush.msra.mxu0 %v338
        %1207 = vmatpush.msra.mxu0 %v330
        %1208 = vmatpush.msra.mxu0 %v322
        %1209 = vmatpush.msra.mxu0 %v314
        %1210 = vmatmul.f32.gmra.mxu0 %v922
        %v1211 = vpop.f32.mrf.mxu0
        %v1212 = vadd.f32 0.0, %v1211
        %1213 = vdwg.mxu0
        %1214 = vmatpush.msra.mxu0 %v562
        %1215 = vmatpush.msra.mxu0 %v554
        %1216 = vmatpush.msra.mxu0 %v546
        %1217 = vmatpush.msra.mxu0 %v538
        %1218 = vmatpush.msra.mxu0 %v530
        %1219 = vmatpush.msra.mxu0 %v522
        %1220 = vmatpush.msra.mxu0 %v514
        %1221 = vmatpush.msra.mxu0 %v506
        %1222 = vmatpush.msra.mxu0 %v498
        %1223 = vmatpush.msra.mxu0 %v490
        %1224 = vmatpush.msra.mxu0 %v482
        %1225 = vmatpush.msra.mxu0 %v474
        %1226 = vmatpush.msra.mxu0 %v466
        %1227 = vmatpush.msra.mxu0 %v458
        %1228 = vmatpush.msra.mxu0 %v450
        %1229 = vmatpush.msra.mxu0 %v442
        %1230 = vmatmul.f32.gmra.mxu0 %v940
        %v1231 = vpop.f32.mrf.mxu0
        %v1232 = vadd.f32 %v1212, %v1231
        %1233 = vdwg.mxu0
        %1234 = vmatpush.msra.mxu0 %v435
        %1235 = vmatpush.msra.mxu0 %v427
        %1236 = vmatpush.msra.mxu0 %v419
        %1237 = vmatpush.msra.mxu0 %v411
        %1238 = vmatpush.msra.mxu0 %v403
        %1239 = vmatpush.msra.mxu0 %v395
        %1240 = vmatpush.msra.mxu0 %v387
        %1241 = vmatpush.msra.mxu0 %v379
        %1242 = vmatpush.msra.mxu0 %v371
        %1243 = vmatpush.msra.mxu0 %v363
        %1244 = vmatpush.msra.mxu0 %v355
        %1245 = vmatpush.msra.mxu0 %v347
        %1246 = vmatpush.msra.mxu0 %v339
        %1247 = vmatpush.msra.mxu0 %v331
        %1248 = vmatpush.msra.mxu0 %v323
        %1249 = vmatpush.msra.mxu0 %v315
        %1250 = vmatmul.f32.gmra.mxu0 %v922
        %v1251 = vpop.f32.mrf.mxu0
        %v1252 = vadd.f32 0.0, %v1251
        %1253 = vdwg.mxu0
        %1254 = vmatpush.msra.mxu0 %v563
        %1255 = vmatpush.msra.mxu0 %v555
        %1256 = vmatpush.msra.mxu0 %v547
        %1257 = vmatpush.msra.mxu0 %v539
        %1258 = vmatpush.msra.mxu0 %v531
        %1259 = vmatpush.msra.mxu0 %v523
        %1260 = vmatpush.msra.mxu0 %v515
        %1261 = vmatpush.msra.mxu0 %v507
        %1262 = vmatpush.msra.mxu0 %v499
        %1263 = vmatpush.msra.mxu0 %v491
        %1264 = vmatpush.msra.mxu0 %v483
        %1265 = vmatpush.msra.mxu0 %v475
        %1266 = vmatpush.msra.mxu0 %v467
        %1267 = vmatpush.msra.mxu0 %v459
        %1268 = vmatpush.msra.mxu0 %v451
        %1269 = vmatpush.msra.mxu0 %v443
        %1270 = vmatmul.f32.gmra.mxu0 %v940
        %v1271 = vpop.f32.mrf.mxu0
        %v1272 = vadd.f32 %v1252, %v1271
        %1273 = vdwg.mxu0
        %v1274 = vadd.f32 %v945, %v992
        %v1275 = vadd.f32 %v946, %v1032
        %v1276 = vadd.f32 %v947, %v1072
        %v1277 = vadd.f32 %v948, %v1112
        %v1278 = vadd.f32 %v950, %v1152
        %v1279 = vadd.f32 %v951, %v1192
        %v1280 = vadd.f32 %v952, %v1232
        %v1281 = vadd.f32 %v953, %v1272
        %v1282 = vmul.f32 %v1274, 0.5
        %v1283 = vtanh.pop %v1282
        %v1284 = vmul.f32 %v1283, 0.5
        %v1285 = vadd.f32 %v1284, 0.5
        %v1286 = vmul.f32 %v1275, 0.5
        %v1287 = vtanh.pop %v1286
        %v1288 = vmul.f32 %v1287, 0.5
        %v1289 = vadd.f32 %v1288, 0.5
        %v1290 = vtanh.pop %v1276
        %v1291 = vmul.f32 %v1277, 0.5
        %v1292 = vtanh.pop %v1291
        %v1293 = vmul.f32 %v1292, 0.5
        %v1294 = vadd.f32 %v1293, 0.5
        %v1295 = vmul.f32 %v1289, %v920
        %v1296 = vmul.f32 %v1285, %v1290
        %v1297 = vadd.f32 %v1295, %v1296
        %v1298 = vtanh.pop %v1297
        %v1299 = vmul.f32 %v1294, %v1298
        %v1300 = vmul.f32 %v1278, 0.5
        %v1301 = vtanh.pop %v1300
        %v1302 = vmul.f32 %v1301, 0.5
        %v1303 = vadd.f32 %v1302, 0.5
        %v1304 = vmul.f32 %v1279, 0.5
        %v1305 = vtanh.pop %v1304
        %v1306 = vmul.f32 %v1305, 0.5
        %v1307 = vadd.f32 %v1306, 0.5
        %v1308 = vtanh.pop %v1280
        %v1309 = vmul.f32 %v1281, 0.5
        %v1310 = vtanh.pop %v1309
        %v1311 = vmul.f32 %v1310, 0.5
        %v1312 = vadd.f32 %v1311, 0.5
        %v1313 = vmul.f32 %v1307, %v938
        %v1314 = vmul.f32 %v1303, %v1308
        %v1315 = vadd.f32 %v1313, %v1314
        %v1316 = vtanh.pop %v1315
        %v1317 = vmul.f32 %v1312, %v1316
        %s1318 = scalar_lea.vmem %s286, 8 [#allocation12]
        %1319 = vst [vmem:[%s1318] sm:$0xff] %v1299
        %s1320 = scalar_lea.vmem %s293, 8 [#allocation13]
        %1321 = vst [vmem:[%s1320] sm:$0xff] %v1317
        %s1322 = scalar_lea.vmem %s243, 64 [#allocation6]
        %v1323 = vld [vmem:[%s1322] sm:$0xff]
        %v1324 = vld [vmem:[%s1322 + $0x8] sm:$0xff]
        %v1325 = vld [vmem:[%s1322 + $0x10] sm:$0xff]
        %v1326 = vld [vmem:[%s1322 + $0x18] sm:$0xff]
        %v1327 = vld [vmem:[%s253] sm:$0xff]
        %v1328 = vld [vmem:[%s253 + $0x8] sm:$0xff]
        %v1329 = vld [vmem:[%s253 + $0x10] sm:$0xff]
        %v1330 = vld [vmem:[%s253 + $0x18] sm:$0xff]
        %1331 = vmatpush.msra.mxu0 %v428
        %1332 = vmatpush.msra.mxu0 %v420
        %1333 = vmatpush.msra.mxu0 %v412
        %1334 = vmatpush.msra.mxu0 %v404
        %1335 = vmatpush.msra.mxu0 %v396
        %1336 = vmatpush.msra.mxu0 %v388
        %1337 = vmatpush.msra.mxu0 %v380
        %1338 = vmatpush.msra.mxu0 %v372
        %1339 = vmatpush.msra.mxu0 %v364
        %1340 = vmatpush.msra.mxu0 %v356
        %1341 = vmatpush.msra.mxu0 %v348
        %1342 = vmatpush.msra.mxu0 %v340
        %1343 = vmatpush.msra.mxu0 %v332
        %1344 = vmatpush.msra.mxu0 %v324
        %1345 = vmatpush.msra.mxu0 %v316
        %1346 = vmatpush.msra.mxu0 %v308
        %1347 = vmatmul.f32.gmra.mxu0 %v1299
        %v1348 = vpop.f32.mrf.mxu0
        %v1349 = vadd.f32 0.0, %v1348
        %1350 = vdwg.mxu0
        %1351 = vmatpush.msra.mxu0 %v556
        %1352 = vmatpush.msra.mxu0 %v548
        %1353 = vmatpush.msra.mxu0 %v540
        %1354 = vmatpush.msra.mxu0 %v532
        %1355 = vmatpush.msra.mxu0 %v524
        %1356 = vmatpush.msra.mxu0 %v516
        %1357 = vmatpush.msra.mxu0 %v508
        %1358 = vmatpush.msra.mxu0 %v500
        %1359 = vmatpush.msra.mxu0 %v492
        %1360 = vmatpush.msra.mxu0 %v484
        %1361 = vmatpush.msra.mxu0 %v476
        %1362 = vmatpush.msra.mxu0 %v468
        %1363 = vmatpush.msra.mxu0 %v460
        %1364 = vmatpush.msra.mxu0 %v452
        %1365 = vmatpush.msra.mxu0 %v444
        %1366 = vmatpush.msra.mxu0 %v436
        %1367 = vmatmul.f32.gmra.mxu0 %v1317
        %v1368 = vpop.f32.mrf.mxu0
        %v1369 = vadd.f32 %v1349, %v1368
        %1370 = vdwg.mxu0
        %1371 = vmatpush.msra.mxu0 %v429
        %1372 = vmatpush.msra.mxu0 %v421
        %1373 = vmatpush.msra.mxu0 %v413
        %1374 = vmatpush.msra.mxu0 %v405
        %1375 = vmatpush.msra.mxu0 %v397
        %1376 = vmatpush.msra.mxu0 %v389
        %1377 = vmatpush.msra.mxu0 %v381
        %1378 = vmatpush.msra.mxu0 %v373
        %1379 = vmatpush.msra.mxu0 %v365
        %1380 = vmatpush.msra.mxu0 %v357
        %1381 = vmatpush.msra.mxu0 %v349
        %1382 = vmatpush.msra.mxu0 %v341
        %1383 = vmatpush.msra.mxu0 %v333
        %1384 = vmatpush.msra.mxu0 %v325
        %1385 = vmatpush.msra.mxu0 %v317
        %1386 = vmatpush.msra.mxu0 %v309
        %1387 = vmatmul.f32.gmra.mxu0 %v1299
        %v1388 = vpop.f32.mrf.mxu0
        %v1389 = vadd.f32 0.0, %v1388
        %1390 = vdwg.mxu0
        %1391 = vmatpush.msra.mxu0 %v557
        %1392 = vmatpush.msra.mxu0 %v549
        %1393 = vmatpush.msra.mxu0 %v541
        %1394 = vmatpush.msra.mxu0 %v533
        %1395 = vmatpush.msra.mxu0 %v525
        %1396 = vmatpush.msra.mxu0 %v517
        %1397 = vmatpush.msra.mxu0 %v509
        %1398 = vmatpush.msra.mxu0 %v501
        %1399 = vmatpush.msra.mxu0 %v493
        %1400 = vmatpush.msra.mxu0 %v485
        %1401 = vmatpush.msra.mxu0 %v477
        %1402 = vmatpush.msra.mxu0 %v469
        %1403 = vmatpush.msra.mxu0 %v461
        %1404 = vmatpush.msra.mxu0 %v453
        %1405 = vmatpush.msra.mxu0 %v445
        %1406 = vmatpush.msra.mxu0 %v437
        %1407 = vmatmul.f32.gmra.mxu0 %v1317
        %v1408 = vpop.f32.mrf.mxu0
        %v1409 = vadd.f32 %v1389, %v1408
        %1410 = vdwg.mxu0
        %1411 = vmatpush.msra.mxu0 %v430
        %1412 = vmatpush.msra.mxu0 %v422
        %1413 = vmatpush.msra.mxu0 %v414
        %1414 = vmatpush.msra.mxu0 %v406
        %1415 = vmatpush.msra.mxu0 %v398
        %1416 = vmatpush.msra.mxu0 %v390
        %1417 = vmatpush.msra.mxu0 %v382
        %1418 = vmatpush.msra.mxu0 %v374
        %1419 = vmatpush.msra.mxu0 %v366
        %1420 = vmatpush.msra.mxu0 %v358
        %1421 = vmatpush.msra.mxu0 %v350
        %1422 = vmatpush.msra.mxu0 %v342
        %1423 = vmatpush.msra.mxu0 %v334
        %1424 = vmatpush.msra.mxu0 %v326
        %1425 = vmatpush.msra.mxu0 %v318
        %1426 = vmatpush.msra.mxu0 %v310
        %1427 = vmatmul.f32.gmra.mxu0 %v1299
        %v1428 = vpop.f32.mrf.mxu0
        %v1429 = vadd.f32 0.0, %v1428
        %1430 = vdwg.mxu0
        %1431 = vmatpush.msra.mxu0 %v558
        %1432 = vmatpush.msra.mxu0 %v550
        %1433 = vmatpush.msra.mxu0 %v542
        %1434 = vmatpush.msra.mxu0 %v534
        %1435 = vmatpush.msra.mxu0 %v526
        %1436 = vmatpush.msra.mxu0 %v518
        %1437 = vmatpush.msra.mxu0 %v510
        %1438 = vmatpush.msra.mxu0 %v502
        %1439 = vmatpush.msra.mxu0 %v494
        %1440 = vmatpush.msra.mxu0 %v486
        %1441 = vmatpush.msra.mxu0 %v478
        %1442 = vmatpush.msra.mxu0 %v470
        %1443 = vmatpush.msra.mxu0 %v462
        %1444 = vmatpush.msra.mxu0 %v454
        %1445 = vmatpush.msra.mxu0 %v446
        %1446 = vmatpush.msra.mxu0 %v438
        %1447 = vmatmul.f32.gmra.mxu0 %v1317
        %v1448 = vpop.f32.mrf.mxu0
        %v1449 = vadd.f32 %v1429, %v1448
        %1450 = vdwg.mxu0
        %1451 = vmatpush.msra.mxu0 %v431
        %1452 = vmatpush.msra.mxu0 %v423
        %1453 = vmatpush.msra.mxu0 %v415
        %1454 = vmatpush.msra.mxu0 %v407
        %1455 = vmatpush.msra.mxu0 %v399
        %1456 = vmatpush.msra.mxu0 %v391
        %1457 = vmatpush.msra.mxu0 %v383
        %1458 = vmatpush.msra.mxu0 %v375
        %1459 = vmatpush.msra.mxu0 %v367
        %1460 = vmatpush.msra.mxu0 %v359
        %1461 = vmatpush.msra.mxu0 %v351
        %1462 = vmatpush.msra.mxu0 %v343
        %1463 = vmatpush.msra.mxu0 %v335
        %1464 = vmatpush.msra.mxu0 %v327
        %1465 = vmatpush.msra.mxu0 %v319
        %1466 = vmatpush.msra.mxu0 %v311
        %1467 = vmatmul.f32.gmra.mxu0 %v1299
        %v1468 = vpop.f32.mrf.mxu0
        %v1469 = vadd.f32 0.0, %v1468
        %1470 = vdwg.mxu0
        %1471 = vmatpush.msra.mxu0 %v559
        %1472 = vmatpush.msra.mxu0 %v551
        %1473 = vmatpush.msra.mxu0 %v543
        %1474 = vmatpush.msra.mxu0 %v535
        %1475 = vmatpush.msra.mxu0 %v527
        %1476 = vmatpush.msra.mxu0 %v519
        %1477 = vmatpush.msra.mxu0 %v511
        %1478 = vmatpush.msra.mxu0 %v503
        %1479 = vmatpush.msra.mxu0 %v495
        %1480 = vmatpush.msra.mxu0 %v487
        %1481 = vmatpush.msra.mxu0 %v479
        %1482 = vmatpush.msra.mxu0 %v471
        %1483 = vmatpush.msra.mxu0 %v463
        %1484 = vmatpush.msra.mxu0 %v455
        %1485 = vmatpush.msra.mxu0 %v447
        %1486 = vmatpush.msra.mxu0 %v439
        %1487 = vmatmul.f32.gmra.mxu0 %v1317
        %v1488 = vpop.f32.mrf.mxu0
        %v1489 = vadd.f32 %v1469, %v1488
        %1490 = vdwg.mxu0
        %1491 = vmatpush.msra.mxu0 %v432
        %1492 = vmatpush.msra.mxu0 %v424
        %1493 = vmatpush.msra.mxu0 %v416
        %1494 = vmatpush.msra.mxu0 %v408
        %1495 = vmatpush.msra.mxu0 %v400
        %1496 = vmatpush.msra.mxu0 %v392
        %1497 = vmatpush.msra.mxu0 %v384
        %1498 = vmatpush.msra.mxu0 %v376
        %1499 = vmatpush.msra.mxu0 %v368
        %1500 = vmatpush.msra.mxu0 %v360
        %1501 = vmatpush.msra.mxu0 %v352
        %1502 = vmatpush.msra.mxu0 %v344
        %1503 = vmatpush.msra.mxu0 %v336
        %1504 = vmatpush.msra.mxu0 %v328
        %1505 = vmatpush.msra.mxu0 %v320
        %1506 = vmatpush.msra.mxu0 %v312
        %1507 = vmatmul.f32.gmra.mxu0 %v1299
        %v1508 = vpop.f32.mrf.mxu0
        %v1509 = vadd.f32 0.0, %v1508
        %1510 = vdwg.mxu0
        %1511 = vmatpush.msra.mxu0 %v560
        %1512 = vmatpush.msra.mxu0 %v552
        %1513 = vmatpush.msra.mxu0 %v544
        %1514 = vmatpush.msra.mxu0 %v536
        %1515 = vmatpush.msra.mxu0 %v528
        %1516 = vmatpush.msra.mxu0 %v520
        %1517 = vmatpush.msra.mxu0 %v512
        %1518 = vmatpush.msra.mxu0 %v504
        %1519 = vmatpush.msra.mxu0 %v496
        %1520 = vmatpush.msra.mxu0 %v488
        %1521 = vmatpush.msra.mxu0 %v480
        %1522 = vmatpush.msra.mxu0 %v472
        %1523 = vmatpush.msra.mxu0 %v464
        %1524 = vmatpush.msra.mxu0 %v456
        %1525 = vmatpush.msra.mxu0 %v448
        %1526 = vmatpush.msra.mxu0 %v440
        %1527 = vmatmul.f32.gmra.mxu0 %v1317
        %v1528 = vpop.f32.mrf.mxu0
        %v1529 = vadd.f32 %v1509, %v1528
        %1530 = vdwg.mxu0
        %1531 = vmatpush.msra.mxu0 %v433
        %1532 = vmatpush.msra.mxu0 %v425
        %1533 = vmatpush.msra.mxu0 %v417
        %1534 = vmatpush.msra.mxu0 %v409
        %1535 = vmatpush.msra.mxu0 %v401
        %1536 = vmatpush.msra.mxu0 %v393
        %1537 = vmatpush.msra.mxu0 %v385
        %1538 = vmatpush.msra.mxu0 %v377
        %1539 = vmatpush.msra.mxu0 %v369
        %1540 = vmatpush.msra.mxu0 %v361
        %1541 = vmatpush.msra.mxu0 %v353
        %1542 = vmatpush.msra.mxu0 %v345
        %1543 = vmatpush.msra.mxu0 %v337
        %1544 = vmatpush.msra.mxu0 %v329
        %1545 = vmatpush.msra.mxu0 %v321
        %1546 = vmatpush.msra.mxu0 %v313
        %1547 = vmatmul.f32.gmra.mxu0 %v1299
        %v1548 = vpop.f32.mrf.mxu0
        %v1549 = vadd.f32 0.0, %v1548
        %1550 = vdwg.mxu0
        %1551 = vmatpush.msra.mxu0 %v561
        %1552 = vmatpush.msra.mxu0 %v553
        %1553 = vmatpush.msra.mxu0 %v545
        %1554 = vmatpush.msra.mxu0 %v537
        %1555 = vmatpush.msra.mxu0 %v529
        %1556 = vmatpush.msra.mxu0 %v521
        %1557 = vmatpush.msra.mxu0 %v513
        %1558 = vmatpush.msra.mxu0 %v505
        %1559 = vmatpush.msra.mxu0 %v497
        %1560 = vmatpush.msra.mxu0 %v489
        %1561 = vmatpush.msra.mxu0 %v481
        %1562 = vmatpush.msra.mxu0 %v473
        %1563 = vmatpush.msra.mxu0 %v465
        %1564 = vmatpush.msra.mxu0 %v457
        %1565 = vmatpush.msra.mxu0 %v449
        %1566 = vmatpush.msra.mxu0 %v441
        %1567 = vmatmul.f32.gmra.mxu0 %v1317
        %v1568 = vpop.f32.mrf.mxu0
        %v1569 = vadd.f32 %v1549, %v1568
        %1570 = vdwg.mxu0
        %1571 = vmatpush.msra.mxu0 %v434
        %1572 = vmatpush.msra.mxu0 %v426
        %1573 = vmatpush.msra.mxu0 %v418
        %1574 = vmatpush.msra.mxu0 %v410
        %1575 = vmatpush.msra.mxu0 %v402
        %1576 = vmatpush.msra.mxu0 %v394
        %1577 = vmatpush.msra.mxu0 %v386
        %1578 = vmatpush.msra.mxu0 %v378
        %1579 = vmatpush.msra.mxu0 %v370
        %1580 = vmatpush.msra.mxu0 %v362
        %1581 = vmatpush.msra.mxu0 %v354
        %1582 = vmatpush.msra.mxu0 %v346
        %1583 = vmatpush.msra.mxu0 %v338
        %1584 = vmatpush.msra.mxu0 %v330
        %1585 = vmatpush.msra.mxu0 %v322
        %1586 = vmatpush.msra.mxu0 %v314
        %1587 = vmatmul.f32.gmra.mxu0 %v1299
        %v1588 = vpop.f32.mrf.mxu0
        %v1589 = vadd.f32 0.0, %v1588
        %1590 = vdwg.mxu0
        %1591 = vmatpush.msra.mxu0 %v562
        %1592 = vmatpush.msra.mxu0 %v554
        %1593 = vmatpush.msra.mxu0 %v546
        %1594 = vmatpush.msra.mxu0 %v538
        %1595 = vmatpush.msra.mxu0 %v530
        %1596 = vmatpush.msra.mxu0 %v522
        %1597 = vmatpush.msra.mxu0 %v514
        %1598 = vmatpush.msra.mxu0 %v506
        %1599 = vmatpush.msra.mxu0 %v498
        %1600 = vmatpush.msra.mxu0 %v490
        %1601 = vmatpush.msra.mxu0 %v482
        %1602 = vmatpush.msra.mxu0 %v474
        %1603 = vmatpush.msra.mxu0 %v466
        %1604 = vmatpush.msra.mxu0 %v458
        %1605 = vmatpush.msra.mxu0 %v450
        %1606 = vmatpush.msra.mxu0 %v442
        %1607 = vmatmul.f32.gmra.mxu0 %v1317
        %v1608 = vpop.f32.mrf.mxu0
        %v1609 = vadd.f32 %v1589, %v1608
        %1610 = vdwg.mxu0
        %1611 = vmatpush.msra.mxu0 %v435
        %1612 = vmatpush.msra.mxu0 %v427
        %1613 = vmatpush.msra.mxu0 %v419
        %1614 = vmatpush.msra.mxu0 %v411
        %1615 = vmatpush.msra.mxu0 %v403
        %1616 = vmatpush.msra.mxu0 %v395
        %1617 = vmatpush.msra.mxu0 %v387
        %1618 = vmatpush.msra.mxu0 %v379
        %1619 = vmatpush.msra.mxu0 %v371
        %1620 = vmatpush.msra.mxu0 %v363
        %1621 = vmatpush.msra.mxu0 %v355
        %1622 = vmatpush.msra.mxu0 %v347
        %1623 = vmatpush.msra.mxu0 %v339
        %1624 = vmatpush.msra.mxu0 %v331
        %1625 = vmatpush.msra.mxu0 %v323
        %1626 = vmatpush.msra.mxu0 %v315
        %1627 = vmatmul.f32.gmra.mxu0 %v1299
        %v1628 = vpop.f32.mrf.mxu0
        %v1629 = vadd.f32 0.0, %v1628
        %1630 = vdwg.mxu0
        %1631 = vmatpush.msra.mxu0 %v563
        %1632 = vmatpush.msra.mxu0 %v555
        %1633 = vmatpush.msra.mxu0 %v547
        %1634 = vmatpush.msra.mxu0 %v539
        %1635 = vmatpush.msra.mxu0 %v531
        %1636 = vmatpush.msra.mxu0 %v523
        %1637 = vmatpush.msra.mxu0 %v515
        %1638 = vmatpush.msra.mxu0 %v507
        %1639 = vmatpush.msra.mxu0 %v499
        %1640 = vmatpush.msra.mxu0 %v491
        %1641 = vmatpush.msra.mxu0 %v483
        %1642 = vmatpush.msra.mxu0 %v475
        %1643 = vmatpush.msra.mxu0 %v467
        %1644 = vmatpush.msra.mxu0 %v459
        %1645 = vmatpush.msra.mxu0 %v451
        %1646 = vmatpush.msra.mxu0 %v443
        %1647 = vmatmul.f32.gmra.mxu0 %v1317
        %v1648 = vpop.f32.mrf.mxu0
        %v1649 = vadd.f32 %v1629, %v1648
        %1650 = vdwg.mxu0
        %v1651 = vadd.f32 %v1323, %v1369
        %v1652 = vadd.f32 %v1324, %v1409
        %v1653 = vadd.f32 %v1325, %v1449
        %v1654 = vadd.f32 %v1326, %v1489
        %v1655 = vadd.f32 %v1327, %v1529
        %v1656 = vadd.f32 %v1328, %v1569
        %v1657 = vadd.f32 %v1329, %v1609
        %v1658 = vadd.f32 %v1330, %v1649
        %v1659 = vmul.f32 %v1651, 0.5
        %v1660 = vtanh.pop %v1659
        %v1661 = vmul.f32 %v1660, 0.5
        %v1662 = vadd.f32 %v1661, 0.5
        %v1663 = vmul.f32 %v1652, 0.5
        %v1664 = vtanh.pop %v1663
        %v1665 = vmul.f32 %v1664, 0.5
        %v1666 = vadd.f32 %v1665, 0.5
        %v1667 = vtanh.pop %v1653
        %v1668 = vmul.f32 %v1654, 0.5
        %v1669 = vtanh.pop %v1668
        %v1670 = vmul.f32 %v1669, 0.5
        %v1671 = vadd.f32 %v1670, 0.5
        %v1672 = vmul.f32 %v1666, %v1297
        %v1673 = vmul.f32 %v1662, %v1667
        %v1674 = vadd.f32 %v1672, %v1673
        %v1675 = vtanh.pop %v1674
        %v1676 = vmul.f32 %v1671, %v1675
        %v1677 = vmul.f32 %v1655, 0.5
        %v1678 = vtanh.pop %v1677
        %v1679 = vmul.f32 %v1678, 0.5
        %v1680 = vadd.f32 %v1679, 0.5
        %v1681 = vmul.f32 %v1656, 0.5
        %v1682 = vtanh.pop %v1681
        %v1683 = vmul.f32 %v1682, 0.5
        %v1684 = vadd.f32 %v1683, 0.5
        %v1685 = vtanh.pop %v1657
        %v1686 = vmul.f32 %v1658, 0.5
        %v1687 = vtanh.pop %v1686
        %v1688 = vmul.f32 %v1687, 0.5
        %v1689 = vadd.f32 %v1688, 0.5
        %v1690 = vmul.f32 %v1684, %v1315
        %v1691 = vmul.f32 %v1680, %v1685
        %v1692 = vadd.f32 %v1690, %v1691
        %v1693 = vtanh.pop %v1692
        %v1694 = vmul.f32 %v1689, %v1693
        %s1695 = scalar_lea.vmem %s286, 16 [#allocation12]
        %1696 = vst [vmem:[%s1695] sm:$0xff] %v1676
        %1697 = vst [vmem:[%s293] sm:$0xff] %v1694
        %1698 = vst [vmem:[#allocation2] sm:$0xff] %v1676
        %1699 = vst [vmem:[#allocation3] sm:$0xff] %v1674
        %1700 = vst [vmem:[#allocation4] sm:$0xff] %v1694
        %1701 = vst [vmem:[#allocation5] sm:$0xff] %v1692
        %s1702 = sand.u32 %s111, 1
        %s1703 = scalar_lea.sflag [#allocation8], %s1702
        %s1704 = sand.u32 %s111, 1
        %s1705 = smul.addr %s1704, 24
        %s1706 = scalar_lea.vmem [#allocation12], %s1705
        %s1707 = sand.u32 %s139, 1
        %s1708 = scalar_lea.sflag [#allocation14], %s1707
        %s1709 = sand.u32 %s139, 1
        %s1710 = smul.addr %s1709, 24
        %s1711 = scalar_lea.vmem [#allocation13], %s1710
        // Predicated region
        $region49: #{tpu_custom_call.1} parent=31 // pred_check
          %p1712 = pneg %p121
        $region50: #{tpu_custom_call.1} parent=31 // pred_check_branch
          %1714 = sbr.rel (%p1712) target = $region52
        $region51: #{tpu_custom_call.1} parent=31 // pred_region
          %s1715 = smul.u32 3, %s28
          %1717 = vsyncadd %s1703, 0
          %s1718 = smul.addr %s1715, 8
          %s1719 = scalar_lea.hbm %s3, %s1718
          %s1720 = sshll.u32 %s1706, 4
          %s1721 = int_to_ptr.vmem [resolvable:$true] %s1720
          %s1722 = sshll.u32 %s1719, 4
          %s1723 = int_to_ptr.hbm [resolvable:$true] %s1722
          %1728 = dma.vmem_to_hbm [thread:$0]  %s1721, 384, %s1723, %s1703, 128, 128, 8
        $region52: #{tpu_custom_call.1} parent=31 // pred_fallthru
          _
        // Predicated region
        $region53: #{tpu_custom_call.1} parent=31 // pred_check
          %p1729 = pneg %p149
        $region54: #{tpu_custom_call.1} parent=31 // pred_check_branch
          %1731 = sbr.rel (%p1729) target = $region56
        $region55: #{tpu_custom_call.1} parent=31 // pred_region
          %s1732 = ssub.s32 2, %s28
          %s1733 = smul.u32 3, %s1732
          %1735 = vsyncadd %s1708, 0
          %s1736 = smul.addr %s1733, 8
          %s1737 = scalar_lea.hbm %s4, %s1736
          %s1738 = sshll.u32 %s1711, 4
          %s1739 = int_to_ptr.vmem [resolvable:$true] %s1738
          %s1740 = sshll.u32 %s1737, 4
          %s1741 = int_to_ptr.hbm [resolvable:$true] %s1740
          %1746 = dma.vmem_to_hbm [thread:$0]  %s1739, 384, %s1741, %s1708, 128, 128, 8
        $region56: #{tpu_custom_call.1} parent=31 // pred_fallthru
          _
      $region32: #{tpu_custom_call.1} parent=5 // pred_fallthru
        _
      %p1747 = scmp.le.s32.totalorder 2, %s23
      // Predicated region
      $region57: #{tpu_custom_call.1} parent=5 // pred_check
        %p1748 = pneg %p1747
      $region58: #{tpu_custom_call.1} parent=5 // pred_check_branch
        %1750 = sbr.rel (%p1748) target = $region60
      $region59: #{tpu_custom_call.1} parent=5 // pred_region
        %s1751 = ssub.s32 %s23, 2
        // Predicated region
        $region61: #{tpu_custom_call.1} parent=59 // pred_check
          %p1752 = pneg %p127
        $region62: #{tpu_custom_call.1} parent=59 // pred_check_branch
          %1754 = sbr.rel (%p1752) target = $region64
        $region63: #{tpu_custom_call.1} parent=59 // pred_region
          %s1755 = sand.u32 %s112, 1
          %s1756 = scalar_lea.sflag [#allocation8], %s1755
          %s1757 = sand.u32 %s112, 1
          %s1758 = smul.addr %s1757, 24
          %s1759 = scalar_lea.vmem [#allocation12], %s1758
          %1761 = dma.done %s1756, 384
        $region64: #{tpu_custom_call.1} parent=59 // pred_fallthru
          _
        // Predicated region
        $region65: #{tpu_custom_call.1} parent=59 // pred_check
          %p1762 = pneg %p155
        $region66: #{tpu_custom_call.1} parent=59 // pred_check_branch
          %1764 = sbr.rel (%p1762) target = $region68
        $region67: #{tpu_custom_call.1} parent=59 // pred_region
          %s1765 = sand.u32 %s140, 1
          %s1766 = scalar_lea.sflag [#allocation14], %s1765
          %s1767 = sand.u32 %s140, 1
          %s1768 = smul.addr %s1767, 24
          %s1769 = scalar_lea.vmem [#allocation13], %s1768
          %1771 = dma.done %s1766, 384
        $region68: #{tpu_custom_call.1} parent=59 // pred_fallthru
          _
      $region60: #{tpu_custom_call.1} parent=5 // pred_fallthru
        _
    $region6: #{tpu_custom_call.1} parent=1 // loop_footer
      %s27 = sadd.s32 1, %s23
    $region7: #{tpu_custom_call.1} parent=1 // loop_footer_branch
      %22 = sbr.rel target = $region3
    $region8: #{tpu_custom_call.1} parent=1 // loop_exit
      _
    %1772 = vsyncpa [#allocation7], 1
    %s1773 = scalar_lea.sflag [#allocation7], 1
    %1774 = vsyncpa %s1773, 1
    %1775 = vsyncpa [#allocation10], 1
    %s1776 = scalar_lea.sflag [#allocation10], 1
    %1777 = vsyncpa %s1776, 1
    %1778 = vsyncpa [#allocation8], 1
    %s1779 = scalar_lea.sflag [#allocation8], 1
    %1780 = vsyncpa %s1779, 1
    %1781 = vsyncpa [#allocation14], 1
    %s1782 = scalar_lea.sflag [#allocation14], 1
    %1783 = vsyncpa %s1782, 1

// kernel: tpu_custom_call.1
$region0: #{tpu_custom_call.1}
  #allocation0 [shape = 'u32[]', space=smem, size = 0x4, offset = 0x4, fixed_abs, tag = 'smem constant byte address 0x4 - core index']
  #allocation1 [shape = 'u32[72,128]{1,0:T(1,128)}', space=vmem, size = 0x9000, scoped, tag = 'internal scratch']
  #allocation2 [shape = 'f32[8,128]{1,0:T(8,128)}', space=vmem, size = 0x1000, scoped, tag = 'scratch operand']
  #allocation3 [shape = 'f32[8,128]{1,0:T(8,128)}', space=vmem, size = 0x1000, scoped, tag = 'scratch operand']
  #allocation4 [shape = 'f32[8,128]{1,0:T(8,128)}', space=vmem, size = 0x1000, scoped, tag = 'scratch operand']
  #allocation5 [shape = 'f32[8,128]{1,0:T(8,128)}', space=vmem, size = 0x1000, scoped, tag = 'scratch operand']
  %s0 = inlined_call_operand.hbm [shape: f32[9,8,512], index: 0, kind: input, shape index: {}]
  %s1 = inlined_call_operand.hbm [shape: f32[9,8,512], index: 1, kind: input, shape index: {}]
  %s2 = inlined_call_operand.hbm [shape: f32[256,1024], index: 2, kind: input, shape index: {}]
  %s3 = inlined_call_operand.hbm [shape: f32[9,8,128], index: 3, kind: output, shape index: {0}]
  %s4 = inlined_call_operand.hbm [shape: f32[9,8,128], index: 4, kind: output, shape index: {1}]
  %5 = xla_tuple %s3, %s4
  %s6 = sld [smem:[#allocation0]]
  $region69: #{tpu_custom_call.1} parent=0
    _
  %s8 = ssub.s32 1, %s6
  %s9 = scalar_select 0, %s8, %s6
  $region1: #{tpu_custom_call.1} parent=0
    #allocation6 [shape = 'u8[98304]{0}', space=vmem, size = 0x18000, scoped, tag = 'input window, operand 0']
    #allocation7 [shape = 's32[2]{0}', space=sflag, size = 0x8, scoped, tag = 'scoped memory for tpu_custom_call.1']
    #allocation8 [shape = 's32[2]{0}', space=sflag, size = 0x8, scoped, tag = 'scoped memory for tpu_custom_call.1']
    #allocation9 [shape = 'u8[98304]{0}', space=vmem, size = 0x18000, scoped, tag = 'input window, operand 1']
    #allocation10 [shape = 's32[2]{0}', space=sflag, size = 0x8, scoped, tag = 'scoped memory for tpu_custom_call.1']
    #allocation11 [shape = 'u8[1048576]{0}', space=vmem, size = 0x100000, scoped, tag = 'input window, operand 2, single buffered']
    #allocation12 [shape = 'u8[24576]{0}', space=vmem, size = 0x6000, scoped, tag = 'output window, operand 0']
    #allocation13 [shape = 'u8[24576]{0}', space=vmem, size = 0x6000, scoped, tag = 'output window, operand 1']
    #allocation14 [shape = 's32[2]{0}', space=sflag, size = 0x8, scoped, tag = 'scoped memory for tpu_custom_call.1']
    %10 = vsyncpa [#allocation7], 0
    %s11 = scalar_lea.sflag [#allocation7], 1
    %12 = vsyncpa %s11, 0
    %13 = vsyncpa [#allocation10], 0
    %s14 = scalar_lea.sflag [#allocation10], 1
    %15 = vsyncpa %s14, 0
    %16 = vsyncpa [#allocation8], 0
    %s17 = scalar_lea.sflag [#allocation8], 1
    %18 = vsyncpa %s17, 0
    %19 = vsyncpa [#allocation14], 0
    %s20 = scalar_lea.sflag [#allocation14], 1
    %21 = vsyncpa %s20, 0
    loop: start=0, step=1, limit=5
    $region2: #{tpu_custom_call.1} parent=1 // loop_pre_header
      _
    $region3: #{tpu_custom_call.1} parent=1 // loop_header
      %s23 = sphi 0, %s27
      %p24 = scmp.ge.s32.totalorder %s23, 5
      %s33 = sphi 0, %s35
      %s36 = sphi 0, %s33
      %s37 = sphi 0, %s36
      %s53 = sphi 0, %s37
      %s61 = sphi 0, %s63
      %s64 = sphi 0, %s61
      %s65 = sphi 0, %s64
      %s81 = sphi 0, %s65
      %s85 = sphi 0, %s85
      %s87 = sphi 0, %s85
      %s88 = sphi 0, %s87
      %s102 = sphi 0, %s88
      %s108 = sphi 0, %s110
      %s111 = sphi 0, %s108
      %s112 = sphi 0, %s111
      %s128 = sphi 0, %s112
      %s136 = sphi 0, %s138
      %s139 = sphi 0, %s136
      %s140 = sphi 0, %s139
      %s156 = sphi 0, %s140
    $region4: #{tpu_custom_call.1} parent=1 // loop_header_branch
      %26 = sbr.rel (%p24) target = $region8
    $region5: #{tpu_custom_call.1} parent=1 // loop_body
      %s28 = ssub.s32 %s23, 1
      %s29 = ssub.s32 %s23, 2
      %s30 = sadd.s32 %s23, 1
      %s31 = ssub.s32 %s23, %s30
      %p32 = scmp.eq.s32.totalorder %s31, 0
      %s34 = sadd.s32 %s33, 1
      %s35 = scalar_select %p32, %s33, %s34
      %p38 = pneg %p32
      %p39 = scmp.eq.s32.totalorder %s23, 2
      %p40 = por %p38, %p39
      %p41 = scmp.ne.s32.totalorder %s33, %s36
      %p42 = scmp.eq.s32.totalorder %s23, 0
      %p43 = por %p41, %p42
      %p44 = scmp.ne.s32.totalorder %s33, %s36
      %p45 = scmp.eq.s32.totalorder %s28, 2
      %p46 = por %p44, %p45
      %p47 = scmp.ne.s32.totalorder %s36, %s37
      %p48 = scmp.eq.s32.totalorder %s28, 0
      %p49 = por %p47, %p48
      %p50 = scmp.ne.s32.totalorder %s36, %s37
      %p51 = scmp.eq.s32.totalorder %s29, 2
      %p52 = por %p50, %p51
      %p54 = scmp.ne.s32.totalorder %s37, %s53
      %p55 = scmp.eq.s32.totalorder %s29, 0
      %p56 = por %p54, %p55
      %s57 = ssub.s32 2, %s23
      %s58 = ssub.s32 2, %s30
      %s59 = ssub.s32 %s57, %s58
      %p60 = scmp.eq.s32.totalorder %s59, 0
      %s62 = sadd.s32 %s61, 1
      %s63 = scalar_select %p60, %s61, %s62
      %p66 = pneg %p60
      %p67 = scmp.eq.s32.totalorder %s23, 2
      %p68 = por %p66, %p67
      %p69 = scmp.ne.s32.totalorder %s61, %s64
      %p70 = scmp.eq.s32.totalorder %s23, 0
      %p71 = por %p69, %p70
      %p72 = scmp.ne.s32.totalorder %s61, %s64
      %p73 = scmp.eq.s32.totalorder %s28, 2
      %p74 = por %p72, %p73
      %p75 = scmp.ne.s32.totalorder %s64, %s65
      %p76 = scmp.eq.s32.totalorder %s28, 0
      %p77 = por %p75, %p76
      %p78 = scmp.ne.s32.totalorder %s64, %s65
      %p79 = scmp.eq.s32.totalorder %s29, 2
      %p80 = por %p78, %p79
      %p82 = scmp.ne.s32.totalorder %s65, %s81
      %p83 = scmp.eq.s32.totalorder %s29, 0
      %p84 = por %p82, %p83
      %s86 = sadd.s32 %s85, 1
      %p89 = scmp.eq.s32.totalorder %s23, 2
      %p90 = scmp.ne.s32.totalorder %s85, %s87
      %p91 = scmp.eq.s32.totalorder %s23, 0
      %p92 = por %p90, %p91
      %p93 = scmp.ne.s32.totalorder %s85, %s87
      %p94 = scmp.eq.s32.totalorder %s28, 2
      %p95 = por %p93, %p94
      %p96 = scmp.ne.s32.totalorder %s87, %s88
      %p97 = scmp.eq.s32.totalorder %s28, 0
      %p98 = por %p96, %p97
      %p99 = scmp.ne.s32.totalorder %s87, %s88
      %p100 = scmp.eq.s32.totalorder %s29, 2
      %p101 = por %p99, %p100
      %p103 = scmp.ne.s32.totalorder %s88, %s102
      %p104 = scmp.eq.s32.totalorder %s29, 0
      %p105 = por %p103, %p104
      %s106 = ssub.s32 %s23, %s30
      %p107 = scmp.eq.s32.totalorder %s106, 0
      %s109 = sadd.s32 %s108, 1
      %s110 = scalar_select %p107, %s108, %s109
      %p113 = pneg %p107
      %p114 = scmp.eq.s32.totalorder %s23, 2
      %p115 = por %p113, %p114
      %p116 = scmp.ne.s32.totalorder %s108, %s111
      %p117 = scmp.eq.s32.totalorder %s23, 0
      %p118 = por %p116, %p117
      %p119 = scmp.ne.s32.totalorder %s108, %s111
      %p120 = scmp.eq.s32.totalorder %s28, 2
      %p121 = por %p119, %p120
      %p122 = scmp.ne.s32.totalorder %s111, %s112
      %p123 = scmp.eq.s32.totalorder %s28, 0
      %p124 = por %p122, %p123
      %p125 = scmp.ne.s32.totalorder %s111, %s112
      %p126 = scmp.eq.s32.totalorder %s29, 2
      %p127 = por %p125, %p126
      %p129 = scmp.ne.s32.totalorder %s112, %s128
      %p130 = scmp.eq.s32.totalorder %s29, 0
      %p131 = por %p129, %p130
      %s132 = ssub.s32 2, %s23
      %s133 = ssub.s32 2, %s30
      %s134 = ssub.s32 %s132, %s133
      %p135 = scmp.eq.s32.totalorder %s134, 0
      %s137 = sadd.s32 %s136, 1
      %s138 = scalar_select %p135, %s136, %s137
      %p141 = pneg %p135
      %p142 = scmp.eq.s32.totalorder %s23, 2
      %p143 = por %p141, %p142
      %p144 = scmp.ne.s32.totalorder %s136, %s139
      %p145 = scmp.eq.s32.totalorder %s23, 0
      %p146 = por %p144, %p145
      %p147 = scmp.ne.s32.totalorder %s136, %s139
      %p148 = scmp.eq.s32.totalorder %s28, 2
      %p149 = por %p147, %p148
      %p150 = scmp.ne.s32.totalorder %s139, %s140
      %p151 = scmp.eq.s32.totalorder %s28, 0
      %p152 = por %p150, %p151
      %p153 = scmp.ne.s32.totalorder %s139, %s140
      %p154 = scmp.eq.s32.totalorder %s29, 2
      %p155 = por %p153, %p154
      %p157 = scmp.ne.s32.totalorder %s140, %s156
      %p158 = scmp.eq.s32.totalorder %s29, 0
      %p159 = por %p157, %p158
      %p160 = scmp.le.s32.totalorder 1, %s23
      %p161 = scmp.lt.s32.totalorder %s23, 4
      %p162 = pnand %p160, %p161
      %p163 = pneg %p162
      // Predicated region
      $region9: #{tpu_custom_call.1} parent=5 // pred_check
        _
      $region10: #{tpu_custom_call.1} parent=5 // pred_check_branch
        %165 = sbr.rel (%p162) target = $region12
      $region11: #{tpu_custom_call.1} parent=5 // pred_region
        %s166 = ssub.s32 %s23, 1
        // Predicated region
        $region13: #{tpu_custom_call.1} parent=11 // pred_check
          %p167 = pneg %p98
        $region14: #{tpu_custom_call.1} parent=11 // pred_check_branch
          %169 = sbr.rel (%p167) target = $region16
        $region15: #{tpu_custom_call.1} parent=11 // pred_region
          %171 = vsyncadd [#allocation10], 0
          %s172 = sshll.u32 %s2, 4
          %s173 = int_to_ptr.hbm [resolvable:$true] %s172
          %s174 = sshll.u32 [#allocation11], 4
          %s175 = int_to_ptr.vmem [resolvable:$true] %s174
          %180 = dma.hbm_to_vmem [thread:$0]  %s173, 32768, %s175, [#allocation10], 1024, 1024, 64
        $region16: #{tpu_custom_call.1} parent=11 // pred_fallthru
          _
      $region12: #{tpu_custom_call.1} parent=5 // pred_fallthru
        _
      %p181 = scmp.lt.s32.totalorder %s23, 3
      // Predicated region
      $region17: #{tpu_custom_call.1} parent=5 // pred_check
        %p182 = pneg %p181
      $region18: #{tpu_custom_call.1} parent=5 // pred_check_branch
        %184 = sbr.rel (%p182) target = $region20
      $region19: #{tpu_custom_call.1} parent=5 // pred_region
        // Predicated region
        $region21: #{tpu_custom_call.1} parent=19 // pred_check
          %p185 = pneg %p43
        $region22: #{tpu_custom_call.1} parent=19 // pred_check_branch
          %187 = sbr.rel (%p185) target = $region24
        $region23: #{tpu_custom_call.1} parent=19 // pred_region
          %s188 = sand.u32 %s33, 1
          %s189 = scalar_lea.sflag [#allocation7], %s188
          %s190 = sand.u32 %s33, 1
          %s191 = smul.addr %s190, 96
          %s192 = scalar_lea.vmem [#allocation6], %s191
          %s193 = smul.u32 3, %s23
          %195 = vsyncadd %s189, 0
          %s196 = smul.addr %s193, 4
          %s197 = smul.addr %s196, 8
          %s198 = scalar_lea.hbm %s0, %s197
          %s199 = sshll.u32 %s198, 4
          %s200 = int_to_ptr.hbm [resolvable:$true] %s199
          %s201 = sshll.u32 %s192, 4
          %s202 = int_to_ptr.vmem [resolvable:$true] %s201
          %207 = dma.hbm_to_vmem [thread:$0]  %s200, 1536, %s202, %s189, 512, 512, 32
        $region24: #{tpu_custom_call.1} parent=19 // pred_fallthru
          _
        // Predicated region
        $region25: #{tpu_custom_call.1} parent=19 // pred_check
          %p208 = pneg %p71
        $region26: #{tpu_custom_call.1} parent=19 // pred_check_branch
          %210 = sbr.rel (%p208) target = $region28
        $region27: #{tpu_custom_call.1} parent=19 // pred_region
          %s211 = sand.u32 %s23, 1
          %s212 = scalar_lea.sflag [#allocation10], %s211
          %s213 = sand.u32 %s61, 1
          %s214 = smul.addr %s213, 96
          %s215 = scalar_lea.vmem [#allocation9], %s214
          %s216 = ssub.s32 2, %s23
          %s217 = smul.u32 3, %s216
          %219 = vsyncadd %s212, 0
          %s220 = smul.addr %s217, 4
          %s221 = smul.addr %s220, 8
          %s222 = scalar_lea.hbm %s1, %s221
          %s223 = sshll.u32 %s222, 4
          %s224 = int_to_ptr.hbm [resolvable:$true] %s223
          %s225 = sshll.u32 %s215, 4
          %s226 = int_to_ptr.vmem [resolvable:$true] %s225
          %231 = dma.hbm_to_vmem [thread:$0]  %s224, 1536, %s226, %s212, 512, 512, 32
        $region28: #{tpu_custom_call.1} parent=19 // pred_fallthru
          _
      $region20: #{tpu_custom_call.1} parent=5 // pred_fallthru
        _
      %p232 = scmp.le.s32.totalorder 1, %s23
      %p233 = scmp.lt.s32.totalorder %s23, 4
      %p234 = pnand %p232, %p233
      %p235 = pneg %p234
      // Predicated region
      $region29: #{tpu_custom_call.1} parent=5 // pred_check
        _
      $region30: #{tpu_custom_call.1} parent=5 // pred_check_branch
        %237 = sbr.rel (%p234) target = $region32
      $region31: #{tpu_custom_call.1} parent=5 // pred_region
        %s238 = ssub.s32 %s23, 1
        %s239 = sand.u32 %s36, 1
        %s240 = scalar_lea.sflag [#allocation7], %s239
        %s241 = sand.u32 %s36, 1
        %s242 = smul.addr %s241, 96
        %s243 = scalar_lea.vmem [#allocation6], %s242
        // Predicated region
        $region33: #{tpu_custom_call.1} parent=31 // pred_check
          %p244 = pneg %p49
        $region34: #{tpu_custom_call.1} parent=31 // pred_check_branch
          %246 = sbr.rel (%p244) target = $region36
        $region35: #{tpu_custom_call.1} parent=31 // pred_region
          %248 = dma.done %s240, 1536
        $region36: #{tpu_custom_call.1} parent=31 // pred_fallthru
          _
        %s249 = sand.u32 %s28, 1
        %s250 = scalar_lea.sflag [#allocation10], %s249
        %s251 = sand.u32 %s64, 1
        %s252 = smul.addr %s251, 96
        %s253 = scalar_lea.vmem [#allocation9], %s252
        // Predicated region
        $region37: #{tpu_custom_call.1} parent=31 // pred_check
          %p254 = pneg %p77
        $region38: #{tpu_custom_call.1} parent=31 // pred_check_branch
          %256 = sbr.rel (%p254) target = $region40
        $region39: #{tpu_custom_call.1} parent=31 // pred_region
          %258 = dma.done %s250, 1536
        $region40: #{tpu_custom_call.1} parent=31 // pred_fallthru
          _
        // Predicated region
        $region41: #{tpu_custom_call.1} parent=31 // pred_check
          %p259 = pneg %p98
        $region42: #{tpu_custom_call.1} parent=31 // pred_check_branch
          %261 = sbr.rel (%p259) target = $region44
        $region43: #{tpu_custom_call.1} parent=31 // pred_region
          %263 = dma.done [#allocation10], 32768
        $region44: #{tpu_custom_call.1} parent=31 // pred_fallthru
          _
        %s264 = sand.u32 %s36, 1
        %s265 = scalar_lea.sflag [#allocation7], %s264
        %s266 = sand.u32 %s36, 1
        %s267 = smul.addr %s266, 96
        %s268 = scalar_lea.vmem [#allocation6], %s267
        %p269 = pneg %p49
        %p270 = pneg %p46
        %s271 = sand.u32 %s28, 1
        %s272 = scalar_lea.sflag [#allocation10], %s271
        %s273 = sand.u32 %s64, 1
        %s274 = smul.addr %s273, 96
        %s275 = scalar_lea.vmem [#allocation9], %s274
        %p276 = pneg %p77
        %p277 = pneg %p74
        %p278 = pneg %p98
        %p279 = pneg %p95
        %p280 = pneg %p124
        %p281 = pneg %p121
        %s282 = sand.u32 %s111, 1
        %s283 = scalar_lea.sflag [#allocation8], %s282
        %s284 = sand.u32 %s111, 1
        %s285 = smul.addr %s284, 24
        %s286 = scalar_lea.vmem [#allocation12], %s285
        %p287 = pneg %p152
        %p288 = pneg %p149
        %s289 = sand.u32 %s139, 1
        %s290 = scalar_lea.sflag [#allocation14], %s289
        %s291 = sand.u32 %s139, 1
        %s292 = smul.addr %s291, 24
        %s293 = scalar_lea.vmem [#allocation13], %s292
        %s294 = smul.u32 3, %s28
        %s295 = ssub.s32 2, %s28
        %s296 = smul.u32 3, %s295
        %s297 = smul.u32 3, %s28
        %s298 = ssub.s32 2, %s28
        %s299 = smul.u32 3, %s298
        %p300 = scmp.eq.s32.totalorder %s28, 0
        // Predicated region
        $region45: #{tpu_custom_call.1} parent=31 // pred_check
          %p301 = pneg %p300
        $region46: #{tpu_custom_call.1} parent=31 // pred_check_branch
          %303 = sbr.rel (%p301) target = $region48
        $region47: #{tpu_custom_call.1} parent=31 // pred_region
          %304 = vst [vmem:[#allocation2] sm:$0xff] 0.0
          %305 = vst [vmem:[#allocation3] sm:$0xff] 0.0
          %306 = vst [vmem:[#allocation4] sm:$0xff] 0.0
          %307 = vst [vmem:[#allocation5] sm:$0xff] 0.0
        $region48: #{tpu_custom_call.1} parent=31 // pred_fallthru
          _
        %v308 = vld [vmem:[#allocation11] sm:$0xff]
        %v309 = vld [vmem:[#allocation11 + $0x8] sm:$0xff]
        %v310 = vld [vmem:[#allocation11 + $0x10] sm:$0xff]
        %v311 = vld [vmem:[#allocation11 + $0x18] sm:$0xff]
        %v312 = vld [vmem:[#allocation11 + $0x20] sm:$0xff]
        %v313 = vld [vmem:[#allocation11 + $0x28] sm:$0xff]
        %v314 = vld [vmem:[#allocation11 + $0x30] sm:$0xff]
        %v315 = vld [vmem:[#allocation11 + $0x38] sm:$0xff]
        %v316 = vld [vmem:[#allocation11 + $0x40] sm:$0xff]
        %v317 = vld [vmem:[#allocation11 + $0x48] sm:$0xff]
        %v318 = vld [vmem:[#allocation11 + $0x50] sm:$0xff]
        %v319 = vld [vmem:[#allocation11 + $0x58] sm:$0xff]
        %v320 = vld [vmem:[#allocation11 + $0x60] sm:$0xff]
        %v321 = vld [vmem:[#allocation11 + $0x68] sm:$0xff]
        %v322 = vld [vmem:[#allocation11 + $0x70] sm:$0xff]
        %v323 = vld [vmem:[#allocation11 + $0x78] sm:$0xff]
        %v324 = vld [vmem:[#allocation11 + $0x80] sm:$0xff]
        %v325 = vld [vmem:[#allocation11 + $0x88] sm:$0xff]
        %v326 = vld [vmem:[#allocation11 + $0x90] sm:$0xff]
        %v327 = vld [vmem:[#allocation11 + $0x98] sm:$0xff]
        %v328 = vld [vmem:[#allocation11 + $0xa0] sm:$0xff]
        %v329 = vld [vmem:[#allocation11 + $0xa8] sm:$0xff]
        %v330 = vld [vmem:[#allocation11 + $0xb0] sm:$0xff]
        %v331 = vld [vmem:[#allocation11 + $0xb8] sm:$0xff]
        %v332 = vld [vmem:[#allocation11 + $0xc0] sm:$0xff]
        %v333 = vld [vmem:[#allocation11 + $0xc8] sm:$0xff]
        %v334 = vld [vmem:[#allocation11 + $0xd0] sm:$0xff]
        %v335 = vld [vmem:[#allocation11 + $0xd8] sm:$0xff]
        %v336 = vld [vmem:[#allocation11 + $0xe0] sm:$0xff]
        %v337 = vld [vmem:[#allocation11 + $0xe8] sm:$0xff]
        %v338 = vld [vmem:[#allocation11 + $0xf0] sm:$0xff]
        %v339 = vld [vmem:[#allocation11 + $0xf8] sm:$0xff]
        %v340 = vld [vmem:[#allocation11 + $0x100] sm:$0xff]
        %v341 = vld [vmem:[#allocation11 + $0x108] sm:$0xff]
        %v342 = vld [vmem:[#allocation11 + $0x110] sm:$0xff]
        %v343 = vld [vmem:[#allocation11 + $0x118] sm:$0xff]
        %v344 = vld [vmem:[#allocation11 + $0x120] sm:$0xff]
        %v345 = vld [vmem:[#allocation11 + $0x128] sm:$0xff]
        %v346 = vld [vmem:[#allocation11 + $0x130] sm:$0xff]
        %v347 = vld [vmem:[#allocation11 + $0x138] sm:$0xff]
        %v348 = vld [vmem:[#allocation11 + $0x140] sm:$0xff]
        %v349 = vld [vmem:[#allocation11 + $0x148] sm:$0xff]
        %v350 = vld [vmem:[#allocation11 + $0x150] sm:$0xff]
        %v351 = vld [vmem:[#allocation11 + $0x158] sm:$0xff]
        %v352 = vld [vmem:[#allocation11 + $0x160] sm:$0xff]
        %v353 = vld [vmem:[#allocation11 + $0x168] sm:$0xff]
        %v354 = vld [vmem:[#allocation11 + $0x170] sm:$0xff]
        %v355 = vld [vmem:[#allocation11 + $0x178] sm:$0xff]
        %v356 = vld [vmem:[#allocation11 + $0x180] sm:$0xff]
        %v357 = vld [vmem:[#allocation11 + $0x188] sm:$0xff]
        %v358 = vld [vmem:[#allocation11 + $0x190] sm:$0xff]
        %v359 = vld [vmem:[#allocation11 + $0x198] sm:$0xff]
        %v360 = vld [vmem:[#allocation11 + $0x1a0] sm:$0xff]
        %v361 = vld [vmem:[#allocation11 + $0x1a8] sm:$0xff]
        %v362 = vld [vmem:[#allocation11 + $0x1b0] sm:$0xff]
        %v363 = vld [vmem:[#allocation11 + $0x1b8] sm:$0xff]
        %v364 = vld [vmem:[#allocation11 + $0x1c0] sm:$0xff]
        %v365 = vld [vmem:[#allocation11 + $0x1c8] sm:$0xff]
        %v366 = vld [vmem:[#allocation11 + $0x1d0] sm:$0xff]
        %v367 = vld [vmem:[#allocation11 + $0x1d8] sm:$0xff]
        %v368 = vld [vmem:[#allocation11 + $0x1e0] sm:$0xff]
        %v369 = vld [vmem:[#allocation11 + $0x1e8] sm:$0xff]
        %v370 = vld [vmem:[#allocation11 + $0x1f0] sm:$0xff]
        %v371 = vld [vmem:[#allocation11 + $0x1f8] sm:$0xff]
        %v372 = vld [vmem:[#allocation11 + $0x200] sm:$0xff]
        %v373 = vld [vmem:[#allocation11 + $0x208] sm:$0xff]
        %v374 = vld [vmem:[#allocation11 + $0x210] sm:$0xff]
        %v375 = vld [vmem:[#allocation11 + $0x218] sm:$0xff]
        %v376 = vld [vmem:[#allocation11 + $0x220] sm:$0xff]
        %v377 = vld [vmem:[#allocation11 + $0x228] sm:$0xff]
        %v378 = vld [vmem:[#allocation11 + $0x230] sm:$0xff]
        %v379 = vld [vmem:[#allocation11 + $0x238] sm:$0xff]
        %v380 = vld [vmem:[#allocation11 + $0x240] sm:$0xff]
        %v381 = vld [vmem:[#allocation11 + $0x248] sm:$0xff]
        %v382 = vld [vmem:[#allocation11 + $0x250] sm:$0xff]
        %v383 = vld [vmem:[#allocation11 + $0x258] sm:$0xff]
        %v384 = vld [vmem:[#allocation11 + $0x260] sm:$0xff]
        %v385 = vld [vmem:[#allocation11 + $0x268] sm:$0xff]
        %v386 = vld [vmem:[#allocation11 + $0x270] sm:$0xff]
        %v387 = vld [vmem:[#allocation11 + $0x278] sm:$0xff]
        %v388 = vld [vmem:[#allocation11 + $0x280] sm:$0xff]
        %v389 = vld [vmem:[#allocation11 + $0x288] sm:$0xff]
        %v390 = vld [vmem:[#allocation11 + $0x290] sm:$0xff]
        %v391 = vld [vmem:[#allocation11 + $0x298] sm:$0xff]
        %v392 = vld [vmem:[#allocation11 + $0x2a0] sm:$0xff]
        %v393 = vld [vmem:[#allocation11 + $0x2a8] sm:$0xff]
        %v394 = vld [vmem:[#allocation11 + $0x2b0] sm:$0xff]
        %v395 = vld [vmem:[#allocation11 + $0x2b8] sm:$0xff]
        %v396 = vld [vmem:[#allocation11 + $0x2c0] sm:$0xff]
        %v397 = vld [vmem:[#allocation11 + $0x2c8] sm:$0xff]
        %v398 = vld [vmem:[#allocation11 + $0x2d0] sm:$0xff]
        %v399 = vld [vmem:[#allocation11 + $0x2d8] sm:$0xff]
        %v400 = vld [vmem:[#allocation11 + $0x2e0] sm:$0xff]
        %v401 = vld [vmem:[#allocation11 + $0x2e8] sm:$0xff]
        %v402 = vld [vmem:[#allocation11 + $0x2f0] sm:$0xff]
        %v403 = vld [vmem:[#allocation11 + $0x2f8] sm:$0xff]
        %v404 = vld [vmem:[#allocation11 + $0x300] sm:$0xff]
        %v405 = vld [vmem:[#allocation11 + $0x308] sm:$0xff]
        %v406 = vld [vmem:[#allocation11 + $0x310] sm:$0xff]
        %v407 = vld [vmem:[#allocation11 + $0x318] sm:$0xff]
        %v408 = vld [vmem:[#allocation11 + $0x320] sm:$0xff]
        %v409 = vld [vmem:[#allocation11 + $0x328] sm:$0xff]
        %v410 = vld [vmem:[#allocation11 + $0x330] sm:$0xff]
        %v411 = vld [vmem:[#allocation11 + $0x338] sm:$0xff]
        %v412 = vld [vmem:[#allocation11 + $0x340] sm:$0xff]
        %v413 = vld [vmem:[#allocation11 + $0x348] sm:$0xff]
        %v414 = vld [vmem:[#allocation11 + $0x350] sm:$0xff]
        %v415 = vld [vmem:[#allocation11 + $0x358] sm:$0xff]
        %v416 = vld [vmem:[#allocation11 + $0x360] sm:$0xff]
        %v417 = vld [vmem:[#allocation11 + $0x368] sm:$0xff]
        %v418 = vld [vmem:[#allocation11 + $0x370] sm:$0xff]
        %v419 = vld [vmem:[#allocation11 + $0x378] sm:$0xff]
        %v420 = vld [vmem:[#allocation11 + $0x380] sm:$0xff]
        %v421 = vld [vmem:[#allocation11 + $0x388] sm:$0xff]
        %v422 = vld [vmem:[#allocation11 + $0x390] sm:$0xff]
        %v423 = vld [vmem:[#allocation11 + $0x398] sm:$0xff]
        %v424 = vld [vmem:[#allocation11 + $0x3a0] sm:$0xff]
        %v425 = vld [vmem:[#allocation11 + $0x3a8] sm:$0xff]
        %v426 = vld [vmem:[#allocation11 + $0x3b0] sm:$0xff]
        %v427 = vld [vmem:[#allocation11 + $0x3b8] sm:$0xff]
        %v428 = vld [vmem:[#allocation11 + $0x3c0] sm:$0xff]
        %v429 = vld [vmem:[#allocation11 + $0x3c8] sm:$0xff]
        %v430 = vld [vmem:[#allocation11 + $0x3d0] sm:$0xff]
        %v431 = vld [vmem:[#allocation11 + $0x3d8] sm:$0xff]
        %v432 = vld [vmem:[#allocation11 + $0x3e0] sm:$0xff]
        %v433 = vld [vmem:[#allocation11 + $0x3e8] sm:$0xff]
        %v434 = vld [vmem:[#allocation11 + $0x3f0] sm:$0xff]
        %v435 = vld [vmem:[#allocation11 + $0x3f8] sm:$0xff]
        %v436 = vld [vmem:[#allocation11 + $0x400] sm:$0xff]
        %v437 = vld [vmem:[#allocation11 + $0x408] sm:$0xff]
        %v438 = vld [vmem:[#allocation11 + $0x410] sm:$0xff]
        %v439 = vld [vmem:[#allocation11 + $0x418] sm:$0xff]
        %v440 = vld [vmem:[#allocation11 + $0x420] sm:$0xff]
        %v441 = vld [vmem:[#allocation11 + $0x428] sm:$0xff]
        %v442 = vld [vmem:[#allocation11 + $0x430] sm:$0xff]
        %v443 = vld [vmem:[#allocation11 + $0x438] sm:$0xff]
        %v444 = vld [vmem:[#allocation11 + $0x440] sm:$0xff]
        %v445 = vld [vmem:[#allocation11 + $0x448] sm:$0xff]
        %v446 = vld [vmem:[#allocation11 + $0x450] sm:$0xff]
        %v447 = vld [vmem:[#allocation11 + $0x458] sm:$0xff]
        %v448 = vld [vmem:[#allocation11 + $0x460] sm:$0xff]
        %v449 = vld [vmem:[#allocation11 + $0x468] sm:$0xff]
        %v450 = vld [vmem:[#allocation11 + $0x470] sm:$0xff]
        %v451 = vld [vmem:[#allocation11 + $0x478] sm:$0xff]
        %v452 = vld [vmem:[#allocation11 + $0x480] sm:$0xff]
        %v453 = vld [vmem:[#allocation11 + $0x488] sm:$0xff]
        %v454 = vld [vmem:[#allocation11 + $0x490] sm:$0xff]
        %v455 = vld [vmem:[#allocation11 + $0x498] sm:$0xff]
        %v456 = vld [vmem:[#allocation11 + $0x4a0] sm:$0xff]
        %v457 = vld [vmem:[#allocation11 + $0x4a8] sm:$0xff]
        %v458 = vld [vmem:[#allocation11 + $0x4b0] sm:$0xff]
        %v459 = vld [vmem:[#allocation11 + $0x4b8] sm:$0xff]
        %v460 = vld [vmem:[#allocation11 + $0x4c0] sm:$0xff]
        %v461 = vld [vmem:[#allocation11 + $0x4c8] sm:$0xff]
        %v462 = vld [vmem:[#allocation11 + $0x4d0] sm:$0xff]
        %v463 = vld [vmem:[#allocation11 + $0x4d8] sm:$0xff]
        %v464 = vld [vmem:[#allocation11 + $0x4e0] sm:$0xff]
        %v465 = vld [vmem:[#allocation11 + $0x4e8] sm:$0xff]
        %v466 = vld [vmem:[#allocation11 + $0x4f0] sm:$0xff]
        %v467 = vld [vmem:[#allocation11 + $0x4f8] sm:$0xff]
        %v468 = vld [vmem:[#allocation11 + $0x500] sm:$0xff]
        %v469 = vld [vmem:[#allocation11 + $0x508] sm:$0xff]
        %v470 = vld [vmem:[#allocation11 + $0x510] sm:$0xff]
        %v471 = vld [vmem:[#allocation11 + $0x518] sm:$0xff]
        %v472 = vld [vmem:[#allocation11 + $0x520] sm:$0xff]
        %v473 = vld [vmem:[#allocation11 + $0x528] sm:$0xff]
        %v474 = vld [vmem:[#allocation11 + $0x530] sm:$0xff]
        %v475 = vld [vmem:[#allocation11 + $0x538] sm:$0xff]
        %v476 = vld [vmem:[#allocation11 + $0x540] sm:$0xff]
        %v477 = vld [vmem:[#allocation11 + $0x548] sm:$0xff]
        %v478 = vld [vmem:[#allocation11 + $0x550] sm:$0xff]
        %v479 = vld [vmem:[#allocation11 + $0x558] sm:$0xff]
        %v480 = vld [vmem:[#allocation11 + $0x560] sm:$0xff]
        %v481 = vld [vmem:[#allocation11 + $0x568] sm:$0xff]
        %v482 = vld [vmem:[#allocation11 + $0x570] sm:$0xff]
        %v483 = vld [vmem:[#allocation11 + $0x578] sm:$0xff]
        %v484 = vld [vmem:[#allocation11 + $0x580] sm:$0xff]
        %v485 = vld [vmem:[#allocation11 + $0x588] sm:$0xff]
        %v486 = vld [vmem:[#allocation11 + $0x590] sm:$0xff]
        %v487 = vld [vmem:[#allocation11 + $0x598] sm:$0xff]
        %v488 = vld [vmem:[#allocation11 + $0x5a0] sm:$0xff]
        %v489 = vld [vmem:[#allocation11 + $0x5a8] sm:$0xff]
        %v490 = vld [vmem:[#allocation11 + $0x5b0] sm:$0xff]
        %v491 = vld [vmem:[#allocation11 + $0x5b8] sm:$0xff]
        %v492 = vld [vmem:[#allocation11 + $0x5c0] sm:$0xff]
        %v493 = vld [vmem:[#allocation11 + $0x5c8] sm:$0xff]
        %v494 = vld [vmem:[#allocation11 + $0x5d0] sm:$0xff]
        %v495 = vld [vmem:[#allocation11 + $0x5d8] sm:$0xff]
        %v496 = vld [vmem:[#allocation11 + $0x5e0] sm:$0xff]
        %v497 = vld [vmem:[#allocation11 + $0x5e8] sm:$0xff]
        %v498 = vld [vmem:[#allocation11 + $0x5f0] sm:$0xff]
        %v499 = vld [vmem:[#allocation11 + $0x5f8] sm:$0xff]
        %v500 = vld [vmem:[#allocation11 + $0x600] sm:$0xff]
        %v501 = vld [vmem:[#allocation11 + $0x608] sm:$0xff]
        %v502 = vld [vmem:[#allocation11 + $0x610] sm:$0xff]
        %v503 = vld [vmem:[#allocation11 + $0x618] sm:$0xff]
        %v504 = vld [vmem:[#allocation11 + $0x620] sm:$0xff]
        %v505 = vld [vmem:[#allocation11 + $0x628] sm:$0xff]
        %v506 = vld [vmem:[#allocation11 + $0x630] sm:$0xff]
        %v507 = vld [vmem:[#allocation11 + $0x638] sm:$0xff]
        %v508 = vld [vmem:[#allocation11 + $0x640] sm:$0xff]
        %v509 = vld [vmem:[#allocation11 + $0x648] sm:$0xff]
        %v510 = vld [vmem:[#allocation11 + $0x650] sm:$0xff]
        %v511 = vld [vmem:[#allocation11 + $0x658] sm:$0xff]
        %v512 = vld [vmem:[#allocation11 + $0x660] sm:$0xff]
        %v513 = vld [vmem:[#allocation11 + $0x668] sm:$0xff]
        %v514 = vld [vmem:[#allocation11 + $0x670] sm:$0xff]
        %v515 = vld [vmem:[#allocation11 + $0x678] sm:$0xff]
        %v516 = vld [vmem:[#allocation11 + $0x680] sm:$0xff]
        %v517 = vld [vmem:[#allocation11 + $0x688] sm:$0xff]
        %v518 = vld [vmem:[#allocation11 + $0x690] sm:$0xff]
        %v519 = vld [vmem:[#allocation11 + $0x698] sm:$0xff]
        %v520 = vld [vmem:[#allocation11 + $0x6a0] sm:$0xff]
        %v521 = vld [vmem:[#allocation11 + $0x6a8] sm:$0xff]
        %v522 = vld [vmem:[#allocation11 + $0x6b0] sm:$0xff]
        %v523 = vld [vmem:[#allocation11 + $0x6b8] sm:$0xff]
        %v524 = vld [vmem:[#allocation11 + $0x6c0] sm:$0xff]
        %v525 = vld [vmem:[#allocation11 + $0x6c8] sm:$0xff]
        %v526 = vld [vmem:[#allocation11 + $0x6d0] sm:$0xff]
        %v527 = vld [vmem:[#allocation11 + $0x6d8] sm:$0xff]
        %v528 = vld [vmem:[#allocation11 + $0x6e0] sm:$0xff]
        %v529 = vld [vmem:[#allocation11 + $0x6e8] sm:$0xff]
        %v530 = vld [vmem:[#allocation11 + $0x6f0] sm:$0xff]
        %v531 = vld [vmem:[#allocation11 + $0x6f8] sm:$0xff]
        %v532 = vld [vmem:[#allocation11 + $0x700] sm:$0xff]
        %v533 = vld [vmem:[#allocation11 + $0x708] sm:$0xff]
        %v534 = vld [vmem:[#allocation11 + $0x710] sm:$0xff]
        %v535 = vld [vmem:[#allocation11 + $0x718] sm:$0xff]
        %v536 = vld [vmem:[#allocation11 + $0x720] sm:$0xff]
        %v537 = vld [vmem:[#allocation11 + $0x728] sm:$0xff]
        %v538 = vld [vmem:[#allocation11 + $0x730] sm:$0xff]
        %v539 = vld [vmem:[#allocation11 + $0x738] sm:$0xff]
        %v540 = vld [vmem:[#allocation11 + $0x740] sm:$0xff]
        %v541 = vld [vmem:[#allocation11 + $0x748] sm:$0xff]
        %v542 = vld [vmem:[#allocation11 + $0x750] sm:$0xff]
        %v543 = vld [vmem:[#allocation11 + $0x758] sm:$0xff]
        %v544 = vld [vmem:[#allocation11 + $0x760] sm:$0xff]
        %v545 = vld [vmem:[#allocation11 + $0x768] sm:$0xff]
        %v546 = vld [vmem:[#allocation11 + $0x770] sm:$0xff]
        %v547 = vld [vmem:[#allocation11 + $0x778] sm:$0xff]
        %v548 = vld [vmem:[#allocation11 + $0x780] sm:$0xff]
        %v549 = vld [vmem:[#allocation11 + $0x788] sm:$0xff]
        %v550 = vld [vmem:[#allocation11 + $0x790] sm:$0xff]
        %v551 = vld [vmem:[#allocation11 + $0x798] sm:$0xff]
        %v552 = vld [vmem:[#allocation11 + $0x7a0] sm:$0xff]
        %v553 = vld [vmem:[#allocation11 + $0x7a8] sm:$0xff]
        %v554 = vld [vmem:[#allocation11 + $0x7b0] sm:$0xff]
        %v555 = vld [vmem:[#allocation11 + $0x7b8] sm:$0xff]
        %v556 = vld [vmem:[#allocation11 + $0x7c0] sm:$0xff]
        %v557 = vld [vmem:[#allocation11 + $0x7c8] sm:$0xff]
        %v558 = vld [vmem:[#allocation11 + $0x7d0] sm:$0xff]
        %v559 = vld [vmem:[#allocation11 + $0x7d8] sm:$0xff]
        %v560 = vld [vmem:[#allocation11 + $0x7e0] sm:$0xff]
        %v561 = vld [vmem:[#allocation11 + $0x7e8] sm:$0xff]
        %v562 = vld [vmem:[#allocation11 + $0x7f0] sm:$0xff]
        %v563 = vld [vmem:[#allocation11 + $0x7f8] sm:$0xff]
        %v564 = vld [vmem:[#allocation2] sm:$0xff]
        %v565 = vld [vmem:[#allocation3] sm:$0xff]
        %v566 = vld [vmem:[#allocation4] sm:$0xff]
        %v567 = vld [vmem:[#allocation5] sm:$0xff]
        %v568 = vld [vmem:[%s243] sm:$0xff]
        %v569 = vld [vmem:[%s243 + $0x8] sm:$0xff]
        %v570 = vld [vmem:[%s243 + $0x10] sm:$0xff]
        %v571 = vld [vmem:[%s243 + $0x18] sm:$0xff]
        %s572 = scalar_lea.vmem %s253, 64 [#allocation9]
        %v573 = vld [vmem:[%s572] sm:$0xff]
        %v574 = vld [vmem:[%s572 + $0x8] sm:$0xff]
        %v575 = vld [vmem:[%s572 + $0x10] sm:$0xff]
        %v576 = vld [vmem:[%s572 + $0x18] sm:$0xff]
        %577 = vmatpush.msra.mxu0 %v428
        %578 = vmatpush.msra.mxu0 %v420
        %579 = vmatpush.msra.mxu0 %v412
        %580 = vmatpush.msra.mxu0 %v404
        %581 = vmatpush.msra.mxu0 %v396
        %582 = vmatpush.msra.mxu0 %v388
        %583 = vmatpush.msra.mxu0 %v380
        %584 = vmatpush.msra.mxu0 %v372
        %585 = vmatpush.msra.mxu0 %v364
        %586 = vmatpush.msra.mxu0 %v356
        %587 = vmatpush.msra.mxu0 %v348
        %588 = vmatpush.msra.mxu0 %v340
        %589 = vmatpush.msra.mxu0 %v332
        %590 = vmatpush.msra.mxu0 %v324
        %591 = vmatpush.msra.mxu0 %v316
        %592 = vmatpush.msra.mxu0 %v308
        %593 = vmatmul.f32.gmra.mxu0 %v564
        %v594 = vpop.f32.mrf.mxu0
        %v595 = vadd.f32 0.0, %v594
        %596 = vdwg.mxu0
        %597 = vmatpush.msra.mxu0 %v556
        %598 = vmatpush.msra.mxu0 %v548
        %599 = vmatpush.msra.mxu0 %v540
        %600 = vmatpush.msra.mxu0 %v532
        %601 = vmatpush.msra.mxu0 %v524
        %602 = vmatpush.msra.mxu0 %v516
        %603 = vmatpush.msra.mxu0 %v508
        %604 = vmatpush.msra.mxu0 %v500
        %605 = vmatpush.msra.mxu0 %v492
        %606 = vmatpush.msra.mxu0 %v484
        %607 = vmatpush.msra.mxu0 %v476
        %608 = vmatpush.msra.mxu0 %v468
        %609 = vmatpush.msra.mxu0 %v460
        %610 = vmatpush.msra.mxu0 %v452
        %611 = vmatpush.msra.mxu0 %v444
        %612 = vmatpush.msra.mxu0 %v436
        %613 = vmatmul.f32.gmra.mxu0 %v566
        %v614 = vpop.f32.mrf.mxu0
        %v615 = vadd.f32 %v595, %v614
        %616 = vdwg.mxu0
        %617 = vmatpush.msra.mxu0 %v429
        %618 = vmatpush.msra.mxu0 %v421
        %619 = vmatpush.msra.mxu0 %v413
        %620 = vmatpush.msra.mxu0 %v405
        %621 = vmatpush.msra.mxu0 %v397
        %622 = vmatpush.msra.mxu0 %v389
        %623 = vmatpush.msra.mxu0 %v381
        %624 = vmatpush.msra.mxu0 %v373
        %625 = vmatpush.msra.mxu0 %v365
        %626 = vmatpush.msra.mxu0 %v357
        %627 = vmatpush.msra.mxu0 %v349
        %628 = vmatpush.msra.mxu0 %v341
        %629 = vmatpush.msra.mxu0 %v333
        %630 = vmatpush.msra.mxu0 %v325
        %631 = vmatpush.msra.mxu0 %v317
        %632 = vmatpush.msra.mxu0 %v309
        %633 = vmatmul.f32.gmra.mxu0 %v564
        %v634 = vpop.f32.mrf.mxu0
        %v635 = vadd.f32 0.0, %v634
        %636 = vdwg.mxu0
        %637 = vmatpush.msra.mxu0 %v557
        %638 = vmatpush.msra.mxu0 %v549
        %639 = vmatpush.msra.mxu0 %v541
        %640 = vmatpush.msra.mxu0 %v533
        %641 = vmatpush.msra.mxu0 %v525
        %642 = vmatpush.msra.mxu0 %v517
        %643 = vmatpush.msra.mxu0 %v509
        %644 = vmatpush.msra.mxu0 %v501
        %645 = vmatpush.msra.mxu0 %v493
        %646 = vmatpush.msra.mxu0 %v485
        %647 = vmatpush.msra.mxu0 %v477
        %648 = vmatpush.msra.mxu0 %v469
        %649 = vmatpush.msra.mxu0 %v461
        %650 = vmatpush.msra.mxu0 %v453
        %651 = vmatpush.msra.mxu0 %v445
        %652 = vmatpush.msra.mxu0 %v437
        %653 = vmatmul.f32.gmra.mxu0 %v566
        %v654 = vpop.f32.mrf.mxu0
        %v655 = vadd.f32 %v635, %v654
        %656 = vdwg.mxu0
        %657 = vmatpush.msra.mxu0 %v430
        %658 = vmatpush.msra.mxu0 %v422
        %659 = vmatpush.msra.mxu0 %v414
        %660 = vmatpush.msra.mxu0 %v406
        %661 = vmatpush.msra.mxu0 %v398
        %662 = vmatpush.msra.mxu0 %v390
        %663 = vmatpush.msra.mxu0 %v382
        %664 = vmatpush.msra.mxu0 %v374
        %665 = vmatpush.msra.mxu0 %v366
        %666 = vmatpush.msra.mxu0 %v358
        %667 = vmatpush.msra.mxu0 %v350
        %668 = vmatpush.msra.mxu0 %v342
        %669 = vmatpush.msra.mxu0 %v334
        %670 = vmatpush.msra.mxu0 %v326
        %671 = vmatpush.msra.mxu0 %v318
        %672 = vmatpush.msra.mxu0 %v310
        %673 = vmatmul.f32.gmra.mxu0 %v564
        %v674 = vpop.f32.mrf.mxu0
        %v675 = vadd.f32 0.0, %v674
        %676 = vdwg.mxu0
        %677 = vmatpush.msra.mxu0 %v558
        %678 = vmatpush.msra.mxu0 %v550
        %679 = vmatpush.msra.mxu0 %v542
        %680 = vmatpush.msra.mxu0 %v534
        %681 = vmatpush.msra.mxu0 %v526
        %682 = vmatpush.msra.mxu0 %v518
        %683 = vmatpush.msra.mxu0 %v510
        %684 = vmatpush.msra.mxu0 %v502
        %685 = vmatpush.msra.mxu0 %v494
        %686 = vmatpush.msra.mxu0 %v486
        %687 = vmatpush.msra.mxu0 %v478
        %688 = vmatpush.msra.mxu0 %v470
        %689 = vmatpush.msra.mxu0 %v462
        %690 = vmatpush.msra.mxu0 %v454
        %691 = vmatpush.msra.mxu0 %v446
        %692 = vmatpush.msra.mxu0 %v438
        %693 = vmatmul.f32.gmra.mxu0 %v566
        %v694 = vpop.f32.mrf.mxu0
        %v695 = vadd.f32 %v675, %v694
        %696 = vdwg.mxu0
        %697 = vmatpush.msra.mxu0 %v431
        %698 = vmatpush.msra.mxu0 %v423
        %699 = vmatpush.msra.mxu0 %v415
        %700 = vmatpush.msra.mxu0 %v407
        %701 = vmatpush.msra.mxu0 %v399
        %702 = vmatpush.msra.mxu0 %v391
        %703 = vmatpush.msra.mxu0 %v383
        %704 = vmatpush.msra.mxu0 %v375
        %705 = vmatpush.msra.mxu0 %v367
        %706 = vmatpush.msra.mxu0 %v359
        %707 = vmatpush.msra.mxu0 %v351
        %708 = vmatpush.msra.mxu0 %v343
        %709 = vmatpush.msra.mxu0 %v335
        %710 = vmatpush.msra.mxu0 %v327
        %711 = vmatpush.msra.mxu0 %v319
        %712 = vmatpush.msra.mxu0 %v311
        %713 = vmatmul.f32.gmra.mxu0 %v564
        %v714 = vpop.f32.mrf.mxu0
        %v715 = vadd.f32 0.0, %v714
        %716 = vdwg.mxu0
        %717 = vmatpush.msra.mxu0 %v559
        %718 = vmatpush.msra.mxu0 %v551
        %719 = vmatpush.msra.mxu0 %v543
        %720 = vmatpush.msra.mxu0 %v535
        %721 = vmatpush.msra.mxu0 %v527
        %722 = vmatpush.msra.mxu0 %v519
        %723 = vmatpush.msra.mxu0 %v511
        %724 = vmatpush.msra.mxu0 %v503
        %725 = vmatpush.msra.mxu0 %v495
        %726 = vmatpush.msra.mxu0 %v487
        %727 = vmatpush.msra.mxu0 %v479
        %728 = vmatpush.msra.mxu0 %v471
        %729 = vmatpush.msra.mxu0 %v463
        %730 = vmatpush.msra.mxu0 %v455
        %731 = vmatpush.msra.mxu0 %v447
        %732 = vmatpush.msra.mxu0 %v439
        %733 = vmatmul.f32.gmra.mxu0 %v566
        %v734 = vpop.f32.mrf.mxu0
        %v735 = vadd.f32 %v715, %v734
        %736 = vdwg.mxu0
        %737 = vmatpush.msra.mxu0 %v432
        %738 = vmatpush.msra.mxu0 %v424
        %739 = vmatpush.msra.mxu0 %v416
        %740 = vmatpush.msra.mxu0 %v408
        %741 = vmatpush.msra.mxu0 %v400
        %742 = vmatpush.msra.mxu0 %v392
        %743 = vmatpush.msra.mxu0 %v384
        %744 = vmatpush.msra.mxu0 %v376
        %745 = vmatpush.msra.mxu0 %v368
        %746 = vmatpush.msra.mxu0 %v360
        %747 = vmatpush.msra.mxu0 %v352
        %748 = vmatpush.msra.mxu0 %v344
        %749 = vmatpush.msra.mxu0 %v336
        %750 = vmatpush.msra.mxu0 %v328
        %751 = vmatpush.msra.mxu0 %v320
        %752 = vmatpush.msra.mxu0 %v312
        %753 = vmatmul.f32.gmra.mxu0 %v564
        %v754 = vpop.f32.mrf.mxu0
        %v755 = vadd.f32 0.0, %v754
        %756 = vdwg.mxu0
        %757 = vmatpush.msra.mxu0 %v560
        %758 = vmatpush.msra.mxu0 %v552
        %759 = vmatpush.msra.mxu0 %v544
        %760 = vmatpush.msra.mxu0 %v536
        %761 = vmatpush.msra.mxu0 %v528
        %762 = vmatpush.msra.mxu0 %v520
        %763 = vmatpush.msra.mxu0 %v512
        %764 = vmatpush.msra.mxu0 %v504
        %765 = vmatpush.msra.mxu0 %v496
        %766 = vmatpush.msra.mxu0 %v488
        %767 = vmatpush.msra.mxu0 %v480
        %768 = vmatpush.msra.mxu0 %v472
        %769 = vmatpush.msra.mxu0 %v464
        %770 = vmatpush.msra.mxu0 %v456
        %771 = vmatpush.msra.mxu0 %v448
        %772 = vmatpush.msra.mxu0 %v440
        %773 = vmatmul.f32.gmra.mxu0 %v566
        %v774 = vpop.f32.mrf.mxu0
        %v775 = vadd.f32 %v755, %v774
        %776 = vdwg.mxu0
        %777 = vmatpush.msra.mxu0 %v433
        %778 = vmatpush.msra.mxu0 %v425
        %779 = vmatpush.msra.mxu0 %v417
        %780 = vmatpush.msra.mxu0 %v409
        %781 = vmatpush.msra.mxu0 %v401
        %782 = vmatpush.msra.mxu0 %v393
        %783 = vmatpush.msra.mxu0 %v385
        %784 = vmatpush.msra.mxu0 %v377
        %785 = vmatpush.msra.mxu0 %v369
        %786 = vmatpush.msra.mxu0 %v361
        %787 = vmatpush.msra.mxu0 %v353
        %788 = vmatpush.msra.mxu0 %v345
        %789 = vmatpush.msra.mxu0 %v337
        %790 = vmatpush.msra.mxu0 %v329
        %791 = vmatpush.msra.mxu0 %v321
        %792 = vmatpush.msra.mxu0 %v313
        %793 = vmatmul.f32.gmra.mxu0 %v564
        %v794 = vpop.f32.mrf.mxu0
        %v795 = vadd.f32 0.0, %v794
        %796 = vdwg.mxu0
        %797 = vmatpush.msra.mxu0 %v561
        %798 = vmatpush.msra.mxu0 %v553
        %799 = vmatpush.msra.mxu0 %v545
        %800 = vmatpush.msra.mxu0 %v537
        %801 = vmatpush.msra.mxu0 %v529
        %802 = vmatpush.msra.mxu0 %v521
        %803 = vmatpush.msra.mxu0 %v513
        %804 = vmatpush.msra.mxu0 %v505
        %805 = vmatpush.msra.mxu0 %v497
        %806 = vmatpush.msra.mxu0 %v489
        %807 = vmatpush.msra.mxu0 %v481
        %808 = vmatpush.msra.mxu0 %v473
        %809 = vmatpush.msra.mxu0 %v465
        %810 = vmatpush.msra.mxu0 %v457
        %811 = vmatpush.msra.mxu0 %v449
        %812 = vmatpush.msra.mxu0 %v441
        %813 = vmatmul.f32.gmra.mxu0 %v566
        %v814 = vpop.f32.mrf.mxu0
        %v815 = vadd.f32 %v795, %v814
        %816 = vdwg.mxu0
        %817 = vmatpush.msra.mxu0 %v434
        %818 = vmatpush.msra.mxu0 %v426
        %819 = vmatpush.msra.mxu0 %v418
        %820 = vmatpush.msra.mxu0 %v410
        %821 = vmatpush.msra.mxu0 %v402
        %822 = vmatpush.msra.mxu0 %v394
        %823 = vmatpush.msra.mxu0 %v386
        %824 = vmatpush.msra.mxu0 %v378
        %825 = vmatpush.msra.mxu0 %v370
        %826 = vmatpush.msra.mxu0 %v362
        %827 = vmatpush.msra.mxu0 %v354
        %828 = vmatpush.msra.mxu0 %v346
        %829 = vmatpush.msra.mxu0 %v338
        %830 = vmatpush.msra.mxu0 %v330
        %831 = vmatpush.msra.mxu0 %v322
        %832 = vmatpush.msra.mxu0 %v314
        %833 = vmatmul.f32.gmra.mxu0 %v564
        %v834 = vpop.f32.mrf.mxu0
        %v835 = vadd.f32 0.0, %v834
        %836 = vdwg.mxu0
        %837 = vmatpush.msra.mxu0 %v562
        %838 = vmatpush.msra.mxu0 %v554
        %839 = vmatpush.msra.mxu0 %v546
        %840 = vmatpush.msra.mxu0 %v538
        %841 = vmatpush.msra.mxu0 %v530
        %842 = vmatpush.msra.mxu0 %v522
        %843 = vmatpush.msra.mxu0 %v514
        %844 = vmatpush.msra.mxu0 %v506
        %845 = vmatpush.msra.mxu0 %v498
        %846 = vmatpush.msra.mxu0 %v490
        %847 = vmatpush.msra.mxu0 %v482
        %848 = vmatpush.msra.mxu0 %v474
        %849 = vmatpush.msra.mxu0 %v466
        %850 = vmatpush.msra.mxu0 %v458
        %851 = vmatpush.msra.mxu0 %v450
        %852 = vmatpush.msra.mxu0 %v442
        %853 = vmatmul.f32.gmra.mxu0 %v566
        %v854 = vpop.f32.mrf.mxu0
        %v855 = vadd.f32 %v835, %v854
        %856 = vdwg.mxu0
        %857 = vmatpush.msra.mxu0 %v435
        %858 = vmatpush.msra.mxu0 %v427
        %859 = vmatpush.msra.mxu0 %v419
        %860 = vmatpush.msra.mxu0 %v411
        %861 = vmatpush.msra.mxu0 %v403
        %862 = vmatpush.msra.mxu0 %v395
        %863 = vmatpush.msra.mxu0 %v387
        %864 = vmatpush.msra.mxu0 %v379
        %865 = vmatpush.msra.mxu0 %v371
        %866 = vmatpush.msra.mxu0 %v363
        %867 = vmatpush.msra.mxu0 %v355
        %868 = vmatpush.msra.mxu0 %v347
        %869 = vmatpush.msra.mxu0 %v339
        %870 = vmatpush.msra.mxu0 %v331
        %871 = vmatpush.msra.mxu0 %v323
        %872 = vmatpush.msra.mxu0 %v315
        %873 = vmatmul.f32.gmra.mxu0 %v564
        %v874 = vpop.f32.mrf.mxu0
        %v875 = vadd.f32 0.0, %v874
        %876 = vdwg.mxu0
        %877 = vmatpush.msra.mxu0 %v563
        %878 = vmatpush.msra.mxu0 %v555
        %879 = vmatpush.msra.mxu0 %v547
        %880 = vmatpush.msra.mxu0 %v539
        %881 = vmatpush.msra.mxu0 %v531
        %882 = vmatpush.msra.mxu0 %v523
        %883 = vmatpush.msra.mxu0 %v515
        %884 = vmatpush.msra.mxu0 %v507
        %885 = vmatpush.msra.mxu0 %v499
        %886 = vmatpush.msra.mxu0 %v491
        %887 = vmatpush.msra.mxu0 %v483
        %888 = vmatpush.msra.mxu0 %v475
        %889 = vmatpush.msra.mxu0 %v467
        %890 = vmatpush.msra.mxu0 %v459
        %891 = vmatpush.msra.mxu0 %v451
        %892 = vmatpush.msra.mxu0 %v443
        %893 = vmatmul.f32.gmra.mxu0 %v566
        %v894 = vpop.f32.mrf.mxu0
        %v895 = vadd.f32 %v875, %v894
        %896 = vdwg.mxu0
        %v897 = vadd.f32 %v568, %v615
        %v898 = vadd.f32 %v569, %v655
        %v899 = vadd.f32 %v570, %v695
        %v900 = vadd.f32 %v571, %v735
        %v901 = vadd.f32 %v573, %v775
        %v902 = vadd.f32 %v574, %v815
        %v903 = vadd.f32 %v575, %v855
        %v904 = vadd.f32 %v576, %v895
        %v905 = vmul.f32 %v897, 0.5
        %v906 = vtanh.pop %v905
        %v907 = vmul.f32 %v906, 0.5
        %v908 = vadd.f32 %v907, 0.5
        %v909 = vmul.f32 %v898, 0.5
        %v910 = vtanh.pop %v909
        %v911 = vmul.f32 %v910, 0.5
        %v912 = vadd.f32 %v911, 0.5
        %v913 = vtanh.pop %v899
        %v914 = vmul.f32 %v900, 0.5
        %v915 = vtanh.pop %v914
        %v916 = vmul.f32 %v915, 0.5
        %v917 = vadd.f32 %v916, 0.5
        %v918 = vmul.f32 %v912, %v565
        %v919 = vmul.f32 %v908, %v913
        %v920 = vadd.f32 %v918, %v919
        %v921 = vtanh.pop %v920
        %v922 = vmul.f32 %v917, %v921
        %v923 = vmul.f32 %v901, 0.5
        %v924 = vtanh.pop %v923
        %v925 = vmul.f32 %v924, 0.5
        %v926 = vadd.f32 %v925, 0.5
        %v927 = vmul.f32 %v902, 0.5
        %v928 = vtanh.pop %v927
        %v929 = vmul.f32 %v928, 0.5
        %v930 = vadd.f32 %v929, 0.5
        %v931 = vtanh.pop %v903
        %v932 = vmul.f32 %v904, 0.5
        %v933 = vtanh.pop %v932
        %v934 = vmul.f32 %v933, 0.5
        %v935 = vadd.f32 %v934, 0.5
        %v936 = vmul.f32 %v930, %v567
        %v937 = vmul.f32 %v926, %v931
        %v938 = vadd.f32 %v936, %v937
        %v939 = vtanh.pop %v938
        %v940 = vmul.f32 %v935, %v939
        %941 = vst [vmem:[%s286] sm:$0xff] %v922
        %s942 = scalar_lea.vmem %s293, 16 [#allocation13]
        %943 = vst [vmem:[%s942] sm:$0xff] %v940
        %s944 = scalar_lea.vmem %s243, 32 [#allocation6]
        %v945 = vld [vmem:[%s944] sm:$0xff]
        %v946 = vld [vmem:[%s944 + $0x8] sm:$0xff]
        %v947 = vld [vmem:[%s944 + $0x10] sm:$0xff]
        %v948 = vld [vmem:[%s944 + $0x18] sm:$0xff]
        %s949 = scalar_lea.vmem %s253, 32 [#allocation9]
        %v950 = vld [vmem:[%s949] sm:$0xff]
        %v951 = vld [vmem:[%s949 + $0x8] sm:$0xff]
        %v952 = vld [vmem:[%s949 + $0x10] sm:$0xff]
        %v953 = vld [vmem:[%s949 + $0x18] sm:$0xff]
        %954 = vmatpush.msra.mxu0 %v428
        %955 = vmatpush.msra.mxu0 %v420
        %956 = vmatpush.msra.mxu0 %v412
        %957 = vmatpush.msra.mxu0 %v404
        %958 = vmatpush.msra.mxu0 %v396
        %959 = vmatpush.msra.mxu0 %v388
        %960 = vmatpush.msra.mxu0 %v380
        %961 = vmatpush.msra.mxu0 %v372
        %962 = vmatpush.msra.mxu0 %v364
        %963 = vmatpush.msra.mxu0 %v356
        %964 = vmatpush.msra.mxu0 %v348
        %965 = vmatpush.msra.mxu0 %v340
        %966 = vmatpush.msra.mxu0 %v332
        %967 = vmatpush.msra.mxu0 %v324
        %968 = vmatpush.msra.mxu0 %v316
        %969 = vmatpush.msra.mxu0 %v308
        %970 = vmatmul.f32.gmra.mxu0 %v922
        %v971 = vpop.f32.mrf.mxu0
        %v972 = vadd.f32 0.0, %v971
        %973 = vdwg.mxu0
        %974 = vmatpush.msra.mxu0 %v556
        %975 = vmatpush.msra.mxu0 %v548
        %976 = vmatpush.msra.mxu0 %v540
        %977 = vmatpush.msra.mxu0 %v532
        %978 = vmatpush.msra.mxu0 %v524
        %979 = vmatpush.msra.mxu0 %v516
        %980 = vmatpush.msra.mxu0 %v508
        %981 = vmatpush.msra.mxu0 %v500
        %982 = vmatpush.msra.mxu0 %v492
        %983 = vmatpush.msra.mxu0 %v484
        %984 = vmatpush.msra.mxu0 %v476
        %985 = vmatpush.msra.mxu0 %v468
        %986 = vmatpush.msra.mxu0 %v460
        %987 = vmatpush.msra.mxu0 %v452
        %988 = vmatpush.msra.mxu0 %v444
        %989 = vmatpush.msra.mxu0 %v436
        %990 = vmatmul.f32.gmra.mxu0 %v940
        %v991 = vpop.f32.mrf.mxu0
        %v992 = vadd.f32 %v972, %v991
        %993 = vdwg.mxu0
        %994 = vmatpush.msra.mxu0 %v429
        %995 = vmatpush.msra.mxu0 %v421
        %996 = vmatpush.msra.mxu0 %v413
        %997 = vmatpush.msra.mxu0 %v405
        %998 = vmatpush.msra.mxu0 %v397
        %999 = vmatpush.msra.mxu0 %v389
        %1000 = vmatpush.msra.mxu0 %v381
        %1001 = vmatpush.msra.mxu0 %v373
        %1002 = vmatpush.msra.mxu0 %v365
        %1003 = vmatpush.msra.mxu0 %v357
        %1004 = vmatpush.msra.mxu0 %v349
        %1005 = vmatpush.msra.mxu0 %v341
        %1006 = vmatpush.msra.mxu0 %v333
        %1007 = vmatpush.msra.mxu0 %v325
        %1008 = vmatpush.msra.mxu0 %v317
        %1009 = vmatpush.msra.mxu0 %v309
        %1010 = vmatmul.f32.gmra.mxu0 %v922
        %v1011 = vpop.f32.mrf.mxu0
        %v1012 = vadd.f32 0.0, %v1011
        %1013 = vdwg.mxu0
        %1014 = vmatpush.msra.mxu0 %v557
        %1015 = vmatpush.msra.mxu0 %v549
        %1016 = vmatpush.msra.mxu0 %v541
        %1017 = vmatpush.msra.mxu0 %v533
        %1018 = vmatpush.msra.mxu0 %v525
        %1019 = vmatpush.msra.mxu0 %v517
        %1020 = vmatpush.msra.mxu0 %v509
        %1021 = vmatpush.msra.mxu0 %v501
        %1022 = vmatpush.msra.mxu0 %v493
        %1023 = vmatpush.msra.mxu0 %v485
        %1024 = vmatpush.msra.mxu0 %v477
        %1025 = vmatpush.msra.mxu0 %v469
        %1026 = vmatpush.msra.mxu0 %v461
        %1027 = vmatpush.msra.mxu0 %v453
        %1028 = vmatpush.msra.mxu0 %v445
        %1029 = vmatpush.msra.mxu0 %v437
        %1030 = vmatmul.f32.gmra.mxu0 %v940
        %v1031 = vpop.f32.mrf.mxu0
        %v1032 = vadd.f32 %v1012, %v1031
        %1033 = vdwg.mxu0
        %1034 = vmatpush.msra.mxu0 %v430
        %1035 = vmatpush.msra.mxu0 %v422
        %1036 = vmatpush.msra.mxu0 %v414
        %1037 = vmatpush.msra.mxu0 %v406
        %1038 = vmatpush.msra.mxu0 %v398
        %1039 = vmatpush.msra.mxu0 %v390
        %1040 = vmatpush.msra.mxu0 %v382
        %1041 = vmatpush.msra.mxu0 %v374
        %1042 = vmatpush.msra.mxu0 %v366
        %1043 = vmatpush.msra.mxu0 %v358
        %1044 = vmatpush.msra.mxu0 %v350
        %1045 = vmatpush.msra.mxu0 %v342
        %1046 = vmatpush.msra.mxu0 %v334
        %1047 = vmatpush.msra.mxu0 %v326
        %1048 = vmatpush.msra.mxu0 %v318
        %1049 = vmatpush.msra.mxu0 %v310
        %1050 = vmatmul.f32.gmra.mxu0 %v922
        %v1051 = vpop.f32.mrf.mxu0
        %v1052 = vadd.f32 0.0, %v1051
        %1053 = vdwg.mxu0
        %1054 = vmatpush.msra.mxu0 %v558
        %1055 = vmatpush.msra.mxu0 %v550
        %1056 = vmatpush.msra.mxu0 %v542
        %1057 = vmatpush.msra.mxu0 %v534
        %1058 = vmatpush.msra.mxu0 %v526
        %1059 = vmatpush.msra.mxu0 %v518
        %1060 = vmatpush.msra.mxu0 %v510
        %1061 = vmatpush.msra.mxu0 %v502
        %1062 = vmatpush.msra.mxu0 %v494
        %1063 = vmatpush.msra.mxu0 %v486
        %1064 = vmatpush.msra.mxu0 %v478
        %1065 = vmatpush.msra.mxu0 %v470
        %1066 = vmatpush.msra.mxu0 %v462
        %1067 = vmatpush.msra.mxu0 %v454
        %1068 = vmatpush.msra.mxu0 %v446
        %1069 = vmatpush.msra.mxu0 %v438
        %1070 = vmatmul.f32.gmra.mxu0 %v940
        %v1071 = vpop.f32.mrf.mxu0
        %v1072 = vadd.f32 %v1052, %v1071
        %1073 = vdwg.mxu0
        %1074 = vmatpush.msra.mxu0 %v431
        %1075 = vmatpush.msra.mxu0 %v423
        %1076 = vmatpush.msra.mxu0 %v415
        %1077 = vmatpush.msra.mxu0 %v407
        %1078 = vmatpush.msra.mxu0 %v399
        %1079 = vmatpush.msra.mxu0 %v391
        %1080 = vmatpush.msra.mxu0 %v383
        %1081 = vmatpush.msra.mxu0 %v375
        %1082 = vmatpush.msra.mxu0 %v367
        %1083 = vmatpush.msra.mxu0 %v359
        %1084 = vmatpush.msra.mxu0 %v351
        %1085 = vmatpush.msra.mxu0 %v343
        %1086 = vmatpush.msra.mxu0 %v335
        %1087 = vmatpush.msra.mxu0 %v327
        %1088 = vmatpush.msra.mxu0 %v319
        %1089 = vmatpush.msra.mxu0 %v311
        %1090 = vmatmul.f32.gmra.mxu0 %v922
        %v1091 = vpop.f32.mrf.mxu0
        %v1092 = vadd.f32 0.0, %v1091
        %1093 = vdwg.mxu0
        %1094 = vmatpush.msra.mxu0 %v559
        %1095 = vmatpush.msra.mxu0 %v551
        %1096 = vmatpush.msra.mxu0 %v543
        %1097 = vmatpush.msra.mxu0 %v535
        %1098 = vmatpush.msra.mxu0 %v527
        %1099 = vmatpush.msra.mxu0 %v519
        %1100 = vmatpush.msra.mxu0 %v511
        %1101 = vmatpush.msra.mxu0 %v503
        %1102 = vmatpush.msra.mxu0 %v495
        %1103 = vmatpush.msra.mxu0 %v487
        %1104 = vmatpush.msra.mxu0 %v479
        %1105 = vmatpush.msra.mxu0 %v471
        %1106 = vmatpush.msra.mxu0 %v463
        %1107 = vmatpush.msra.mxu0 %v455
        %1108 = vmatpush.msra.mxu0 %v447
        %1109 = vmatpush.msra.mxu0 %v439
        %1110 = vmatmul.f32.gmra.mxu0 %v940
        %v1111 = vpop.f32.mrf.mxu0
        %v1112 = vadd.f32 %v1092, %v1111
        %1113 = vdwg.mxu0
        %1114 = vmatpush.msra.mxu0 %v432
        %1115 = vmatpush.msra.mxu0 %v424
        %1116 = vmatpush.msra.mxu0 %v416
        %1117 = vmatpush.msra.mxu0 %v408
        %1118 = vmatpush.msra.mxu0 %v400
        %1119 = vmatpush.msra.mxu0 %v392
        %1120 = vmatpush.msra.mxu0 %v384
        %1121 = vmatpush.msra.mxu0 %v376
        %1122 = vmatpush.msra.mxu0 %v368
        %1123 = vmatpush.msra.mxu0 %v360
        %1124 = vmatpush.msra.mxu0 %v352
        %1125 = vmatpush.msra.mxu0 %v344
        %1126 = vmatpush.msra.mxu0 %v336
        %1127 = vmatpush.msra.mxu0 %v328
        %1128 = vmatpush.msra.mxu0 %v320
        %1129 = vmatpush.msra.mxu0 %v312
        %1130 = vmatmul.f32.gmra.mxu0 %v922
        %v1131 = vpop.f32.mrf.mxu0
        %v1132 = vadd.f32 0.0, %v1131
        %1133 = vdwg.mxu0
        %1134 = vmatpush.msra.mxu0 %v560
        %1135 = vmatpush.msra.mxu0 %v552
        %1136 = vmatpush.msra.mxu0 %v544
        %1137 = vmatpush.msra.mxu0 %v536
        %1138 = vmatpush.msra.mxu0 %v528
        %1139 = vmatpush.msra.mxu0 %v520
        %1140 = vmatpush.msra.mxu0 %v512
        %1141 = vmatpush.msra.mxu0 %v504
        %1142 = vmatpush.msra.mxu0 %v496
        %1143 = vmatpush.msra.mxu0 %v488
        %1144 = vmatpush.msra.mxu0 %v480
        %1145 = vmatpush.msra.mxu0 %v472
        %1146 = vmatpush.msra.mxu0 %v464
        %1147 = vmatpush.msra.mxu0 %v456
        %1148 = vmatpush.msra.mxu0 %v448
        %1149 = vmatpush.msra.mxu0 %v440
        %1150 = vmatmul.f32.gmra.mxu0 %v940
        %v1151 = vpop.f32.mrf.mxu0
        %v1152 = vadd.f32 %v1132, %v1151
        %1153 = vdwg.mxu0
        %1154 = vmatpush.msra.mxu0 %v433
        %1155 = vmatpush.msra.mxu0 %v425
        %1156 = vmatpush.msra.mxu0 %v417
        %1157 = vmatpush.msra.mxu0 %v409
        %1158 = vmatpush.msra.mxu0 %v401
        %1159 = vmatpush.msra.mxu0 %v393
        %1160 = vmatpush.msra.mxu0 %v385
        %1161 = vmatpush.msra.mxu0 %v377
        %1162 = vmatpush.msra.mxu0 %v369
        %1163 = vmatpush.msra.mxu0 %v361
        %1164 = vmatpush.msra.mxu0 %v353
        %1165 = vmatpush.msra.mxu0 %v345
        %1166 = vmatpush.msra.mxu0 %v337
        %1167 = vmatpush.msra.mxu0 %v329
        %1168 = vmatpush.msra.mxu0 %v321
        %1169 = vmatpush.msra.mxu0 %v313
        %1170 = vmatmul.f32.gmra.mxu0 %v922
        %v1171 = vpop.f32.mrf.mxu0
        %v1172 = vadd.f32 0.0, %v1171
        %1173 = vdwg.mxu0
        %1174 = vmatpush.msra.mxu0 %v561
        %1175 = vmatpush.msra.mxu0 %v553
        %1176 = vmatpush.msra.mxu0 %v545
        %1177 = vmatpush.msra.mxu0 %v537
        %1178 = vmatpush.msra.mxu0 %v529
        %1179 = vmatpush.msra.mxu0 %v521
        %1180 = vmatpush.msra.mxu0 %v513
        %1181 = vmatpush.msra.mxu0 %v505
        %1182 = vmatpush.msra.mxu0 %v497
        %1183 = vmatpush.msra.mxu0 %v489
        %1184 = vmatpush.msra.mxu0 %v481
        %1185 = vmatpush.msra.mxu0 %v473
        %1186 = vmatpush.msra.mxu0 %v465
        %1187 = vmatpush.msra.mxu0 %v457
        %1188 = vmatpush.msra.mxu0 %v449
        %1189 = vmatpush.msra.mxu0 %v441
        %1190 = vmatmul.f32.gmra.mxu0 %v940
        %v1191 = vpop.f32.mrf.mxu0
        %v1192 = vadd.f32 %v1172, %v1191
        %1193 = vdwg.mxu0
        %1194 = vmatpush.msra.mxu0 %v434
        %1195 = vmatpush.msra.mxu0 %v426
        %1196 = vmatpush.msra.mxu0 %v418
        %1197 = vmatpush.msra.mxu0 %v410
        %1198 = vmatpush.msra.mxu0 %v402
        %1199 = vmatpush.msra.mxu0 %v394
        %1200 = vmatpush.msra.mxu0 %v386
        %1201 = vmatpush.msra.mxu0 %v378
        %1202 = vmatpush.msra.mxu0 %v370
        %1203 = vmatpush.msra.mxu0 %v362
        %1204 = vmatpush.msra.mxu0 %v354
        %1205 = vmatpush.msra.mxu0 %v346
        %1206 = vmatpush.msra.mxu0 %v338
        %1207 = vmatpush.msra.mxu0 %v330
        %1208 = vmatpush.msra.mxu0 %v322
        %1209 = vmatpush.msra.mxu0 %v314
        %1210 = vmatmul.f32.gmra.mxu0 %v922
        %v1211 = vpop.f32.mrf.mxu0
        %v1212 = vadd.f32 0.0, %v1211
        %1213 = vdwg.mxu0
        %1214 = vmatpush.msra.mxu0 %v562
        %1215 = vmatpush.msra.mxu0 %v554
        %1216 = vmatpush.msra.mxu0 %v546
        %1217 = vmatpush.msra.mxu0 %v538
        %1218 = vmatpush.msra.mxu0 %v530
        %1219 = vmatpush.msra.mxu0 %v522
        %1220 = vmatpush.msra.mxu0 %v514
        %1221 = vmatpush.msra.mxu0 %v506
        %1222 = vmatpush.msra.mxu0 %v498
        %1223 = vmatpush.msra.mxu0 %v490
        %1224 = vmatpush.msra.mxu0 %v482
        %1225 = vmatpush.msra.mxu0 %v474
        %1226 = vmatpush.msra.mxu0 %v466
        %1227 = vmatpush.msra.mxu0 %v458
        %1228 = vmatpush.msra.mxu0 %v450
        %1229 = vmatpush.msra.mxu0 %v442
        %1230 = vmatmul.f32.gmra.mxu0 %v940
        %v1231 = vpop.f32.mrf.mxu0
        %v1232 = vadd.f32 %v1212, %v1231
        %1233 = vdwg.mxu0
        %1234 = vmatpush.msra.mxu0 %v435
        %1235 = vmatpush.msra.mxu0 %v427
        %1236 = vmatpush.msra.mxu0 %v419
        %1237 = vmatpush.msra.mxu0 %v411
        %1238 = vmatpush.msra.mxu0 %v403
        %1239 = vmatpush.msra.mxu0 %v395
        %1240 = vmatpush.msra.mxu0 %v387
        %1241 = vmatpush.msra.mxu0 %v379
        %1242 = vmatpush.msra.mxu0 %v371
        %1243 = vmatpush.msra.mxu0 %v363
        %1244 = vmatpush.msra.mxu0 %v355
        %1245 = vmatpush.msra.mxu0 %v347
        %1246 = vmatpush.msra.mxu0 %v339
        %1247 = vmatpush.msra.mxu0 %v331
        %1248 = vmatpush.msra.mxu0 %v323
        %1249 = vmatpush.msra.mxu0 %v315
        %1250 = vmatmul.f32.gmra.mxu0 %v922
        %v1251 = vpop.f32.mrf.mxu0
        %v1252 = vadd.f32 0.0, %v1251
        %1253 = vdwg.mxu0
        %1254 = vmatpush.msra.mxu0 %v563
        %1255 = vmatpush.msra.mxu0 %v555
        %1256 = vmatpush.msra.mxu0 %v547
        %1257 = vmatpush.msra.mxu0 %v539
        %1258 = vmatpush.msra.mxu0 %v531
        %1259 = vmatpush.msra.mxu0 %v523
        %1260 = vmatpush.msra.mxu0 %v515
        %1261 = vmatpush.msra.mxu0 %v507
        %1262 = vmatpush.msra.mxu0 %v499
        %1263 = vmatpush.msra.mxu0 %v491
        %1264 = vmatpush.msra.mxu0 %v483
        %1265 = vmatpush.msra.mxu0 %v475
        %1266 = vmatpush.msra.mxu0 %v467
        %1267 = vmatpush.msra.mxu0 %v459
        %1268 = vmatpush.msra.mxu0 %v451
        %1269 = vmatpush.msra.mxu0 %v443
        %1270 = vmatmul.f32.gmra.mxu0 %v940
        %v1271 = vpop.f32.mrf.mxu0
        %v1272 = vadd.f32 %v1252, %v1271
        %1273 = vdwg.mxu0
        %v1274 = vadd.f32 %v945, %v992
        %v1275 = vadd.f32 %v946, %v1032
        %v1276 = vadd.f32 %v947, %v1072
        %v1277 = vadd.f32 %v948, %v1112
        %v1278 = vadd.f32 %v950, %v1152
        %v1279 = vadd.f32 %v951, %v1192
        %v1280 = vadd.f32 %v952, %v1232
        %v1281 = vadd.f32 %v953, %v1272
        %v1282 = vmul.f32 %v1274, 0.5
        %v1283 = vtanh.pop %v1282
        %v1284 = vmul.f32 %v1283, 0.5
        %v1285 = vadd.f32 %v1284, 0.5
        %v1286 = vmul.f32 %v1275, 0.5
        %v1287 = vtanh.pop %v1286
        %v1288 = vmul.f32 %v1287, 0.5
        %v1289 = vadd.f32 %v1288, 0.5
        %v1290 = vtanh.pop %v1276
        %v1291 = vmul.f32 %v1277, 0.5
        %v1292 = vtanh.pop %v1291
        %v1293 = vmul.f32 %v1292, 0.5
        %v1294 = vadd.f32 %v1293, 0.5
        %v1295 = vmul.f32 %v1289, %v920
        %v1296 = vmul.f32 %v1285, %v1290
        %v1297 = vadd.f32 %v1295, %v1296
        %v1298 = vtanh.pop %v1297
        %v1299 = vmul.f32 %v1294, %v1298
        %v1300 = vmul.f32 %v1278, 0.5
        %v1301 = vtanh.pop %v1300
        %v1302 = vmul.f32 %v1301, 0.5
        %v1303 = vadd.f32 %v1302, 0.5
        %v1304 = vmul.f32 %v1279, 0.5
        %v1305 = vtanh.pop %v1304
        %v1306 = vmul.f32 %v1305, 0.5
        %v1307 = vadd.f32 %v1306, 0.5
        %v1308 = vtanh.pop %v1280
        %v1309 = vmul.f32 %v1281, 0.5
        %v1310 = vtanh.pop %v1309
        %v1311 = vmul.f32 %v1310, 0.5
        %v1312 = vadd.f32 %v1311, 0.5
        %v1313 = vmul.f32 %v1307, %v938
        %v1314 = vmul.f32 %v1303, %v1308
        %v1315 = vadd.f32 %v1313, %v1314
        %v1316 = vtanh.pop %v1315
        %v1317 = vmul.f32 %v1312, %v1316
        %s1318 = scalar_lea.vmem %s286, 8 [#allocation12]
        %1319 = vst [vmem:[%s1318] sm:$0xff] %v1299
        %s1320 = scalar_lea.vmem %s293, 8 [#allocation13]
        %1321 = vst [vmem:[%s1320] sm:$0xff] %v1317
        %s1322 = scalar_lea.vmem %s243, 64 [#allocation6]
        %v1323 = vld [vmem:[%s1322] sm:$0xff]
        %v1324 = vld [vmem:[%s1322 + $0x8] sm:$0xff]
        %v1325 = vld [vmem:[%s1322 + $0x10] sm:$0xff]
        %v1326 = vld [vmem:[%s1322 + $0x18] sm:$0xff]
        %v1327 = vld [vmem:[%s253] sm:$0xff]
        %v1328 = vld [vmem:[%s253 + $0x8] sm:$0xff]
        %v1329 = vld [vmem:[%s253 + $0x10] sm:$0xff]
        %v1330 = vld [vmem:[%s253 + $0x18] sm:$0xff]
        %1331 = vmatpush.msra.mxu0 %v428
        %1332 = vmatpush.msra.mxu0 %v420
        %1333 = vmatpush.msra.mxu0 %v412
        %1334 = vmatpush.msra.mxu0 %v404
        %1335 = vmatpush.msra.mxu0 %v396
        %1336 = vmatpush.msra.mxu0 %v388
        %1337 = vmatpush.msra.mxu0 %v380
        %1338 = vmatpush.msra.mxu0 %v372
        %1339 = vmatpush.msra.mxu0 %v364
        %1340 = vmatpush.msra.mxu0 %v356
        %1341 = vmatpush.msra.mxu0 %v348
        %1342 = vmatpush.msra.mxu0 %v340
        %1343 = vmatpush.msra.mxu0 %v332
        %1344 = vmatpush.msra.mxu0 %v324
        %1345 = vmatpush.msra.mxu0 %v316
        %1346 = vmatpush.msra.mxu0 %v308
        %1347 = vmatmul.f32.gmra.mxu0 %v1299
        %v1348 = vpop.f32.mrf.mxu0
        %v1349 = vadd.f32 0.0, %v1348
        %1350 = vdwg.mxu0
        %1351 = vmatpush.msra.mxu0 %v556
        %1352 = vmatpush.msra.mxu0 %v548
        %1353 = vmatpush.msra.mxu0 %v540
        %1354 = vmatpush.msra.mxu0 %v532
        %1355 = vmatpush.msra.mxu0 %v524
        %1356 = vmatpush.msra.mxu0 %v516
        %1357 = vmatpush.msra.mxu0 %v508
        %1358 = vmatpush.msra.mxu0 %v500
        %1359 = vmatpush.msra.mxu0 %v492
        %1360 = vmatpush.msra.mxu0 %v484
        %1361 = vmatpush.msra.mxu0 %v476
        %1362 = vmatpush.msra.mxu0 %v468
        %1363 = vmatpush.msra.mxu0 %v460
        %1364 = vmatpush.msra.mxu0 %v452
        %1365 = vmatpush.msra.mxu0 %v444
        %1366 = vmatpush.msra.mxu0 %v436
        %1367 = vmatmul.f32.gmra.mxu0 %v1317
        %v1368 = vpop.f32.mrf.mxu0
        %v1369 = vadd.f32 %v1349, %v1368
        %1370 = vdwg.mxu0
        %1371 = vmatpush.msra.mxu0 %v429
        %1372 = vmatpush.msra.mxu0 %v421
        %1373 = vmatpush.msra.mxu0 %v413
        %1374 = vmatpush.msra.mxu0 %v405
        %1375 = vmatpush.msra.mxu0 %v397
        %1376 = vmatpush.msra.mxu0 %v389
        %1377 = vmatpush.msra.mxu0 %v381
        %1378 = vmatpush.msra.mxu0 %v373
        %1379 = vmatpush.msra.mxu0 %v365
        %1380 = vmatpush.msra.mxu0 %v357
        %1381 = vmatpush.msra.mxu0 %v349
        %1382 = vmatpush.msra.mxu0 %v341
        %1383 = vmatpush.msra.mxu0 %v333
        %1384 = vmatpush.msra.mxu0 %v325
        %1385 = vmatpush.msra.mxu0 %v317
        %1386 = vmatpush.msra.mxu0 %v309
        %1387 = vmatmul.f32.gmra.mxu0 %v1299
        %v1388 = vpop.f32.mrf.mxu0
        %v1389 = vadd.f32 0.0, %v1388
        %1390 = vdwg.mxu0
        %1391 = vmatpush.msra.mxu0 %v557
        %1392 = vmatpush.msra.mxu0 %v549
        %1393 = vmatpush.msra.mxu0 %v541
        %1394 = vmatpush.msra.mxu0 %v533
        %1395 = vmatpush.msra.mxu0 %v525
        %1396 = vmatpush.msra.mxu0 %v517
        %1397 = vmatpush.msra.mxu0 %v509
        %1398 = vmatpush.msra.mxu0 %v501
        %1399 = vmatpush.msra.mxu0 %v493
        %1400 = vmatpush.msra.mxu0 %v485
        %1401 = vmatpush.msra.mxu0 %v477
        %1402 = vmatpush.msra.mxu0 %v469
        %1403 = vmatpush.msra.mxu0 %v461
        %1404 = vmatpush.msra.mxu0 %v453
        %1405 = vmatpush.msra.mxu0 %v445
        %1406 = vmatpush.msra.mxu0 %v437
        %1407 = vmatmul.f32.gmra.mxu0 %v1317
        %v1408 = vpop.f32.mrf.mxu0
        %v1409 = vadd.f32 %v1389, %v1408
        %1410 = vdwg.mxu0
        %1411 = vmatpush.msra.mxu0 %v430
        %1412 = vmatpush.msra.mxu0 %v422
        %1413 = vmatpush.msra.mxu0 %v414
        %1414 = vmatpush.msra.mxu0 %v406
        %1415 = vmatpush.msra.mxu0 %v398
        %1416 = vmatpush.msra.mxu0 %v390
        %1417 = vmatpush.msra.mxu0 %v382
        %1418 = vmatpush.msra.mxu0 %v374
        %1419 = vmatpush.msra.mxu0 %v366
        %1420 = vmatpush.msra.mxu0 %v358
        %1421 = vmatpush.msra.mxu0 %v350
        %1422 = vmatpush.msra.mxu0 %v342
        %1423 = vmatpush.msra.mxu0 %v334
        %1424 = vmatpush.msra.mxu0 %v326
        %1425 = vmatpush.msra.mxu0 %v318
        %1426 = vmatpush.msra.mxu0 %v310
        %1427 = vmatmul.f32.gmra.mxu0 %v1299
        %v1428 = vpop.f32.mrf.mxu0
        %v1429 = vadd.f32 0.0, %v1428
        %1430 = vdwg.mxu0
        %1431 = vmatpush.msra.mxu0 %v558
        %1432 = vmatpush.msra.mxu0 %v550
        %1433 = vmatpush.msra.mxu0 %v542
        %1434 = vmatpush.msra.mxu0 %v534
        %1435 = vmatpush.msra.mxu0 %v526
        %1436 = vmatpush.msra.mxu0 %v518
        %1437 = vmatpush.msra.mxu0 %v510
        %1438 = vmatpush.msra.mxu0 %v502
        %1439 = vmatpush.msra.mxu0 %v494
        %1440 = vmatpush.msra.mxu0 %v486
        %1441 = vmatpush.msra.mxu0 %v478
        %1442 = vmatpush.msra.mxu0 %v470
        %1443 = vmatpush.msra.mxu0 %v462
        %1444 = vmatpush.msra.mxu0 %v454
        %1445 = vmatpush.msra.mxu0 %v446
        %1446 = vmatpush.msra.mxu0 %v438
        %1447 = vmatmul.f32.gmra.mxu0 %v1317
        %v1448 = vpop.f32.mrf.mxu0
        %v1449 = vadd.f32 %v1429, %v1448
        %1450 = vdwg.mxu0
        %1451 = vmatpush.msra.mxu0 %v431
        %1452 = vmatpush.msra.mxu0 %v423
        %1453 = vmatpush.msra.mxu0 %v415
        %1454 = vmatpush.msra.mxu0 %v407
        %1455 = vmatpush.msra.mxu0 %v399
        %1456 = vmatpush.msra.mxu0 %v391
        %1457 = vmatpush.msra.mxu0 %v383
        %1458 = vmatpush.msra.mxu0 %v375
        %1459 = vmatpush.msra.mxu0 %v367
        %1460 = vmatpush.msra.mxu0 %v359
        %1461 = vmatpush.msra.mxu0 %v351
        %1462 = vmatpush.msra.mxu0 %v343
        %1463 = vmatpush.msra.mxu0 %v335
        %1464 = vmatpush.msra.mxu0 %v327
        %1465 = vmatpush.msra.mxu0 %v319
        %1466 = vmatpush.msra.mxu0 %v311
        %1467 = vmatmul.f32.gmra.mxu0 %v1299
        %v1468 = vpop.f32.mrf.mxu0
        %v1469 = vadd.f32 0.0, %v1468
        %1470 = vdwg.mxu0
        %1471 = vmatpush.msra.mxu0 %v559
        %1472 = vmatpush.msra.mxu0 %v551
        %1473 = vmatpush.msra.mxu0 %v543
        %1474 = vmatpush.msra.mxu0 %v535
        %1475 = vmatpush.msra.mxu0 %v527
        %1476 = vmatpush.msra.mxu0 %v519
        %1477 = vmatpush.msra.mxu0 %v511
        %1478 = vmatpush.msra.mxu0 %v503
        %1479 = vmatpush.msra.mxu0 %v495
        %1480 = vmatpush.msra.mxu0 %v487
        %1481 = vmatpush.msra.mxu0 %v479
        %1482 = vmatpush.msra.mxu0 %v471
        %1483 = vmatpush.msra.mxu0 %v463
        %1484 = vmatpush.msra.mxu0 %v455
        %1485 = vmatpush.msra.mxu0 %v447
        %1486 = vmatpush.msra.mxu0 %v439
        %1487 = vmatmul.f32.gmra.mxu0 %v1317
        %v1488 = vpop.f32.mrf.mxu0
        %v1489 = vadd.f32 %v1469, %v1488
        %1490 = vdwg.mxu0
        %1491 = vmatpush.msra.mxu0 %v432
        %1492 = vmatpush.msra.mxu0 %v424
        %1493 = vmatpush.msra.mxu0 %v416
        %1494 = vmatpush.msra.mxu0 %v408
        %1495 = vmatpush.msra.mxu0 %v400
        %1496 = vmatpush.msra.mxu0 %v392
        %1497 = vmatpush.msra.mxu0 %v384
        %1498 = vmatpush.msra.mxu0 %v376
        %1499 = vmatpush.msra.mxu0 %v368
        %1500 = vmatpush.msra.mxu0 %v360
        %1501 = vmatpush.msra.mxu0 %v352
        %1502 = vmatpush.msra.mxu0 %v344
        %1503 = vmatpush.msra.mxu0 %v336
        %1504 = vmatpush.msra.mxu0 %v328
        %1505 = vmatpush.msra.mxu0 %v320
        %1506 = vmatpush.msra.mxu0 %v312
        %1507 = vmatmul.f32.gmra.mxu0 %v1299
        %v1508 = vpop.f32.mrf.mxu0
        %v1509 = vadd.f32 0.0, %v1508
        %1510 = vdwg.mxu0
        %1511 = vmatpush.msra.mxu0 %v560
        %1512 = vmatpush.msra.mxu0 %v552
        %1513 = vmatpush.msra.mxu0 %v544
        %1514 = vmatpush.msra.mxu0 %v536
        %1515 = vmatpush.msra.mxu0 %v528
        %1516 = vmatpush.msra.mxu0 %v520
        %1517 = vmatpush.msra.mxu0 %v512
        %1518 = vmatpush.msra.mxu0 %v504
        %1519 = vmatpush.msra.mxu0 %v496
        %1520 = vmatpush.msra.mxu0 %v488
        %1521 = vmatpush.msra.mxu0 %v480
        %1522 = vmatpush.msra.mxu0 %v472
        %1523 = vmatpush.msra.mxu0 %v464
        %1524 = vmatpush.msra.mxu0 %v456
        %1525 = vmatpush.msra.mxu0 %v448
        %1526 = vmatpush.msra.mxu0 %v440
        %1527 = vmatmul.f32.gmra.mxu0 %v1317
        %v1528 = vpop.f32.mrf.mxu0
        %v1529 = vadd.f32 %v1509, %v1528
        %1530 = vdwg.mxu0
        %1531 = vmatpush.msra.mxu0 %v433
        %1532 = vmatpush.msra.mxu0 %v425
        %1533 = vmatpush.msra.mxu0 %v417
        %1534 = vmatpush.msra.mxu0 %v409
        %1535 = vmatpush.msra.mxu0 %v401
        %1536 = vmatpush.msra.mxu0 %v393
        %1537 = vmatpush.msra.mxu0 %v385
        %1538 = vmatpush.msra.mxu0 %v377
        %1539 = vmatpush.msra.mxu0 %v369
        %1540 = vmatpush.msra.mxu0 %v361
        %1541 = vmatpush.msra.mxu0 %v353
        %1542 = vmatpush.msra.mxu0 %v345
        %1543 = vmatpush.msra.mxu0 %v337
        %1544 = vmatpush.msra.mxu0 %v329
        %1545 = vmatpush.msra.mxu0 %v321
        %1546 = vmatpush.msra.mxu0 %v313
        %1547 = vmatmul.f32.gmra.mxu0 %v1299
        %v1548 = vpop.f32.mrf.mxu0
        %v1549 = vadd.f32 0.0, %v1548
        %1550 = vdwg.mxu0
        %1551 = vmatpush.msra.mxu0 %v561
        %1552 = vmatpush.msra.mxu0 %v553
        %1553 = vmatpush.msra.mxu0 %v545
        %1554 = vmatpush.msra.mxu0 %v537
        %1555 = vmatpush.msra.mxu0 %v529
        %1556 = vmatpush.msra.mxu0 %v521
        %1557 = vmatpush.msra.mxu0 %v513
        %1558 = vmatpush.msra.mxu0 %v505
        %1559 = vmatpush.msra.mxu0 %v497
        %1560 = vmatpush.msra.mxu0 %v489
        %1561 = vmatpush.msra.mxu0 %v481
        %1562 = vmatpush.msra.mxu0 %v473
        %1563 = vmatpush.msra.mxu0 %v465
        %1564 = vmatpush.msra.mxu0 %v457
        %1565 = vmatpush.msra.mxu0 %v449
        %1566 = vmatpush.msra.mxu0 %v441
        %1567 = vmatmul.f32.gmra.mxu0 %v1317
        %v1568 = vpop.f32.mrf.mxu0
        %v1569 = vadd.f32 %v1549, %v1568
        %1570 = vdwg.mxu0
        %1571 = vmatpush.msra.mxu0 %v434
        %1572 = vmatpush.msra.mxu0 %v426
        %1573 = vmatpush.msra.mxu0 %v418
        %1574 = vmatpush.msra.mxu0 %v410
        %1575 = vmatpush.msra.mxu0 %v402
        %1576 = vmatpush.msra.mxu0 %v394
        %1577 = vmatpush.msra.mxu0 %v386
        %1578 = vmatpush.msra.mxu0 %v378
        %1579 = vmatpush.msra.mxu0 %v370
        %1580 = vmatpush.msra.mxu0 %v362
        %1581 = vmatpush.msra.mxu0 %v354
        %1582 = vmatpush.msra.mxu0 %v346
        %1583 = vmatpush.msra.mxu0 %v338
        %1584 = vmatpush.msra.mxu0 %v330
        %1585 = vmatpush.msra.mxu0 %v322
        %1586 = vmatpush.msra.mxu0 %v314
        %1587 = vmatmul.f32.gmra.mxu0 %v1299
        %v1588 = vpop.f32.mrf.mxu0
        %v1589 = vadd.f32 0.0, %v1588
        %1590 = vdwg.mxu0
        %1591 = vmatpush.msra.mxu0 %v562
        %1592 = vmatpush.msra.mxu0 %v554
        %1593 = vmatpush.msra.mxu0 %v546
        %1594 = vmatpush.msra.mxu0 %v538
        %1595 = vmatpush.msra.mxu0 %v530
        %1596 = vmatpush.msra.mxu0 %v522
        %1597 = vmatpush.msra.mxu0 %v514
        %1598 = vmatpush.msra.mxu0 %v506
        %1599 = vmatpush.msra.mxu0 %v498
        %1600 = vmatpush.msra.mxu0 %v490
        %1601 = vmatpush.msra.mxu0 %v482
        %1602 = vmatpush.msra.mxu0 %v474
        %1603 = vmatpush.msra.mxu0 %v466
        %1604 = vmatpush.msra.mxu0 %v458
        %1605 = vmatpush.msra.mxu0 %v450
        %1606 = vmatpush.msra.mxu0 %v442
        %1607 = vmatmul.f32.gmra.mxu0 %v1317
        %v1608 = vpop.f32.mrf.mxu0
        %v1609 = vadd.f32 %v1589, %v1608
        %1610 = vdwg.mxu0
        %1611 = vmatpush.msra.mxu0 %v435
        %1612 = vmatpush.msra.mxu0 %v427
        %1613 = vmatpush.msra.mxu0 %v419
        %1614 = vmatpush.msra.mxu0 %v411
        %1615 = vmatpush.msra.mxu0 %v403
        %1616 = vmatpush.msra.mxu0 %v395
        %1617 = vmatpush.msra.mxu0 %v387
        %1618 = vmatpush.msra.mxu0 %v379
        %1619 = vmatpush.msra.mxu0 %v371
        %1620 = vmatpush.msra.mxu0 %v363
        %1621 = vmatpush.msra.mxu0 %v355
        %1622 = vmatpush.msra.mxu0 %v347
        %1623 = vmatpush.msra.mxu0 %v339
        %1624 = vmatpush.msra.mxu0 %v331
        %1625 = vmatpush.msra.mxu0 %v323
        %1626 = vmatpush.msra.mxu0 %v315
        %1627 = vmatmul.f32.gmra.mxu0 %v1299
        %v1628 = vpop.f32.mrf.mxu0
        %v1629 = vadd.f32 0.0, %v1628
        %1630 = vdwg.mxu0
        %1631 = vmatpush.msra.mxu0 %v563
        %1632 = vmatpush.msra.mxu0 %v555
        %1633 = vmatpush.msra.mxu0 %v547
        %1634 = vmatpush.msra.mxu0 %v539
        %1635 = vmatpush.msra.mxu0 %v531
        %1636 = vmatpush.msra.mxu0 %v523
        %1637 = vmatpush.msra.mxu0 %v515
        %1638 = vmatpush.msra.mxu0 %v507
        %1639 = vmatpush.msra.mxu0 %v499
        %1640 = vmatpush.msra.mxu0 %v491
        %1641 = vmatpush.msra.mxu0 %v483
        %1642 = vmatpush.msra.mxu0 %v475
        %1643 = vmatpush.msra.mxu0 %v467
        %1644 = vmatpush.msra.mxu0 %v459
        %1645 = vmatpush.msra.mxu0 %v451
        %1646 = vmatpush.msra.mxu0 %v443
        %1647 = vmatmul.f32.gmra.mxu0 %v1317
        %v1648 = vpop.f32.mrf.mxu0
        %v1649 = vadd.f32 %v1629, %v1648
        %1650 = vdwg.mxu0
        %v1651 = vadd.f32 %v1323, %v1369
        %v1652 = vadd.f32 %v1324, %v1409
        %v1653 = vadd.f32 %v1325, %v1449
        %v1654 = vadd.f32 %v1326, %v1489
        %v1655 = vadd.f32 %v1327, %v1529
        %v1656 = vadd.f32 %v1328, %v1569
        %v1657 = vadd.f32 %v1329, %v1609
        %v1658 = vadd.f32 %v1330, %v1649
        %v1659 = vmul.f32 %v1651, 0.5
        %v1660 = vtanh.pop %v1659
        %v1661 = vmul.f32 %v1660, 0.5
        %v1662 = vadd.f32 %v1661, 0.5
        %v1663 = vmul.f32 %v1652, 0.5
        %v1664 = vtanh.pop %v1663
        %v1665 = vmul.f32 %v1664, 0.5
        %v1666 = vadd.f32 %v1665, 0.5
        %v1667 = vtanh.pop %v1653
        %v1668 = vmul.f32 %v1654, 0.5
        %v1669 = vtanh.pop %v1668
        %v1670 = vmul.f32 %v1669, 0.5
        %v1671 = vadd.f32 %v1670, 0.5
        %v1672 = vmul.f32 %v1666, %v1297
        %v1673 = vmul.f32 %v1662, %v1667
        %v1674 = vadd.f32 %v1672, %v1673
        %v1675 = vtanh.pop %v1674
        %v1676 = vmul.f32 %v1671, %v1675
        %v1677 = vmul.f32 %v1655, 0.5
        %v1678 = vtanh.pop %v1677
        %v1679 = vmul.f32 %v1678, 0.5
        %v1680 = vadd.f32 %v1679, 0.5
        %v1681 = vmul.f32 %v1656, 0.5
        %v1682 = vtanh.pop %v1681
        %v1683 = vmul.f32 %v1682, 0.5
        %v1684 = vadd.f32 %v1683, 0.5
        %v1685 = vtanh.pop %v1657
        %v1686 = vmul.f32 %v1658, 0.5
        %v1687 = vtanh.pop %v1686
        %v1688 = vmul.f32 %v1687, 0.5
        %v1689 = vadd.f32 %v1688, 0.5
        %v1690 = vmul.f32 %v1684, %v1315
        %v1691 = vmul.f32 %v1680, %v1685
        %v1692 = vadd.f32 %v1690, %v1691
        %v1693 = vtanh.pop %v1692
        %v1694 = vmul.f32 %v1689, %v1693
        %s1695 = scalar_lea.vmem %s286, 16 [#allocation12]
        %1696 = vst [vmem:[%s1695] sm:$0xff] %v1676
        %1697 = vst [vmem:[%s293] sm:$0xff] %v1694
        %1698 = vst [vmem:[#allocation2] sm:$0xff] %v1676
        %1699 = vst [vmem:[#allocation3] sm:$0xff] %v1674
        %1700 = vst [vmem:[#allocation4] sm:$0xff] %v1694
        %1701 = vst [vmem:[#allocation5] sm:$0xff] %v1692
        %s1702 = sand.u32 %s111, 1
        %s1703 = scalar_lea.sflag [#allocation8], %s1702
        %s1704 = sand.u32 %s111, 1
        %s1705 = smul.addr %s1704, 24
        %s1706 = scalar_lea.vmem [#allocation12], %s1705
        %s1707 = sand.u32 %s139, 1
        %s1708 = scalar_lea.sflag [#allocation14], %s1707
        %s1709 = sand.u32 %s139, 1
        %s1710 = smul.addr %s1709, 24
        %s1711 = scalar_lea.vmem [#allocation13], %s1710
        // Predicated region
        $region49: #{tpu_custom_call.1} parent=31 // pred_check
          %p1712 = pneg %p121
        $region50: #{tpu_custom_call.1} parent=31 // pred_check_branch
          %1714 = sbr.rel (%p1712) target = $region52
        $region51: #{tpu_custom_call.1} parent=31 // pred_region
          %s1715 = smul.u32 3, %s28
          %1717 = vsyncadd %s1703, 0
          %s1718 = smul.addr %s1715, 8
          %s1719 = scalar_lea.hbm %s3, %s1718
          %s1720 = sshll.u32 %s1706, 4
          %s1721 = int_to_ptr.vmem [resolvable:$true] %s1720
          %s1722 = sshll.u32 %s1719, 4
          %s1723 = int_to_ptr.hbm [resolvable:$true] %s1722
          %1728 = dma.vmem_to_hbm [thread:$0]  %s1721, 384, %s1723, %s1703, 128, 128, 8
        $region52: #{tpu_custom_call.1} parent=31 // pred_fallthru
          _
        // Predicated region
        $region53: #{tpu_custom_call.1} parent=31 // pred_check
          %p1729 = pneg %p149
        $region54: #{tpu_custom_call.1} parent=31 // pred_check_branch
          %1731 = sbr.rel (%p1729) target = $region56
        $region55: #{tpu_custom_call.1} parent=31 // pred_region
          %s1732 = ssub.s32 2, %s28
          %s1733 = smul.u32 3, %s1732
          %1735 = vsyncadd %s1708, 0
          %s1736 = smul.addr %s1733, 8
          %s1737 = scalar_lea.hbm %s4, %s1736
          %s1738 = sshll.u32 %s1711, 4
          %s1739 = int_to_ptr.vmem [resolvable:$true] %s1738
          %s1740 = sshll.u32 %s1737, 4
          %s1741 = int_to_ptr.hbm [resolvable:$true] %s1740
          %1746 = dma.vmem_to_hbm [thread:$0]  %s1739, 384, %s1741, %s1708, 128, 128, 8
        $region56: #{tpu_custom_call.1} parent=31 // pred_fallthru
          _
      $region32: #{tpu_custom_call.1} parent=5 // pred_fallthru
        _
      %p1747 = scmp.le.s32.totalorder 2, %s23
      // Predicated region
      $region57: #{tpu_custom_call.1} parent=5 // pred_check
        %p1748 = pneg %p1747
      $region58: #{tpu_custom_call.1} parent=5 // pred_check_branch
        %1750 = sbr.rel (%p1748) target = $region60
      $region59: #{tpu_custom_call.1} parent=5 // pred_region
        %s1751 = ssub.s32 %s23, 2
        // Predicated region
        $region61: #{tpu_custom_call.1} parent=59 // pred_check
          %p1752 = pneg %p127
        $region62: #{tpu_custom_call.1} parent=59 // pred_check_branch
          %1754 = sbr.rel (%p1752) target = $region64
        $region63: #{tpu_custom_call.1} parent=59 // pred_region
          %s1755 = sand.u32 %s112, 1
          %s1756 = scalar_lea.sflag [#allocation8], %s1755
          %s1757 = sand.u32 %s112, 1
          %s1758 = smul.addr %s1757, 24
          %s1759 = scalar_lea.vmem [#allocation12], %s1758
          %1761 = dma.done %s1756, 384
        $region64: #{tpu_custom_call.1} parent=59 // pred_fallthru
          _
        // Predicated region
        $region65: #{tpu_custom_call.1} parent=59 // pred_check
          %p1762 = pneg %p155
        $region66: #{tpu_custom_call.1} parent=59 // pred_check_branch
          %1764 = sbr.rel (%p1762) target = $region68
        $region67: #{tpu_custom_call.1} parent=59 // pred_region
          %s1765 = sand.u32 %s140, 1
          %s1766 = scalar_lea.sflag [#allocation14], %s1765
          %s1767 = sand.u32 %s140, 1
          %s1768 = smul.addr %s1767, 24
          %s1769 = scalar_lea.vmem [#allocation13], %s1768
          %1771 = dma.done %s1766, 384
        $region68: #{tpu_custom_call.1} parent=59 // pred_fallthru
          _
      $region60: #{tpu_custom_call.1} parent=5 // pred_fallthru
        _
    $region6: #{tpu_custom_call.1} parent=1 // loop_footer
      %s27 = sadd.s32 1, %s23
    $region7: #{tpu_custom_call.1} parent=1 // loop_footer_branch
      %22 = sbr.rel target = $region3
    $region8: #{tpu_custom_call.1} parent=1 // loop_exit
      _
    %1772 = vsyncpa [#allocation7], 1
    %s1773 = scalar_lea.sflag [#allocation7], 1
    %1774 = vsyncpa %s1773, 1
    %1775 = vsyncpa [#allocation10], 1
    %s1776 = scalar_lea.sflag [#allocation10], 1
    %1777 = vsyncpa %s1776, 1
    %1778 = vsyncpa [#allocation8], 1
    %s1779 = scalar_lea.sflag [#allocation8], 1
    %1780 = vsyncpa %s1779, 1
    %1781 = vsyncpa [#allocation14], 1
    %s1782 = scalar_lea.sflag [#allocation14], 1
    %1783 = vsyncpa %s1782, 1

</llo_original>
